<compile_context>
chip_gen: v6e
topology: v6e:2x2x1
jax: 0.10.0
libtpu: 0.0.40
codegen_flags: <defaults>
</compile_context>

<pallas_src>
import jax
import jax.numpy as jnp
from jax import lax
from jax.experimental import pallas as pl
from jax.experimental.pallas import tpu as pltpu


def _round_up(a, m):
    return (a + m - 1) // m * m


def _lstm_ae_kernel(x_ref, wih_ref, whh_ref, b_ref, wlin_ref, blin_ref, out_ref):
    # x_ref:    (Bp, T, D)   bf16, batch-first input (zero-padded batch rows)
    # wih_ref:  (D, 4*Hp)    bf16, W_ih^T with gate blocks lane-aligned (i,f,g,o)
    # whh_ref:  (Hp, 4*Hp)   f32,  W_hh^T, zero-padded
    # b_ref:    (1, 4*Hp)    f32,  b_ih + b_hh, zero-padded
    # wlin_ref: (Hp, Dp)     bf16, W_linear^T, zero-padded
    # blin_ref: (1, Dp)      f32,  b_linear, zero-padded
    # out_ref:  (Bp, Dp)     f32,  decoded final-hidden row (lane-dense)
    Bp, T, D = x_ref.shape
    Hp = whh_ref.shape[0]
    G = 4 * Hp

    # ---- Hoisted input projection: one big MXU matmul for all timesteps,
    #      bias folded in once (no per-step broadcast).
    x2d = x_ref[...].reshape(Bp * T, D)                                  # (Bp*T, D) bf16
    gx = jnp.dot(x2d, wih_ref[...], preferred_element_type=jnp.float32)  # (Bp*T, G) f32
    gx = gx + b_ref[...]
    gx = gx.reshape(Bp, T, G)   # sublane-tile-preserving split of the row dim

    whh = whh_ref[...]          # (Hp, G) f32, loaded once

    h = jnp.zeros((Bp, Hp), jnp.float32)
    c = jnp.zeros((Bp, Hp), jnp.float32)

    # ---- Recurrence, statically unrolled (T small & fixed) so EUP/VPU gate
    #      math of one step can overlap the MXU latency of adjacent steps.
    #      Padded hidden lanes have zero weights & bias -> stay exactly zero.
    for t in range(T):
        gates = gx[:, t, :] + jnp.dot(h, whh, preferred_element_type=jnp.float32)
        i_g = jax.nn.sigmoid(gates[:, 0 * Hp:1 * Hp])   # 128-lane aligned slices
        f_g = jax.nn.sigmoid(gates[:, 1 * Hp:2 * Hp])
        g_g = jnp.tanh(gates[:, 2 * Hp:3 * Hp])
        o_g = jax.nn.sigmoid(gates[:, 3 * Hp:4 * Hp])
        c = f_g * c + i_g * g_g
        h = o_g * jnp.tanh(c)

    # ---- Decoder for the final hidden only; single lane-dense (Bp, Dp) store.
    out_ref[...] = (
        jnp.dot(h.astype(wlin_ref.dtype), wlin_ref[...],
                preferred_element_type=jnp.float32)
        + blin_ref[...]
    )


def _pad_gate_cols(w_t, H, Hp):
    """(rows, 4H) with gate blocks [i|f|g|o] -> (rows, 4*Hp), lane-aligned."""
    r = w_t.shape[0]
    w4 = w_t.reshape(r, 4, H)
    w4 = jnp.pad(w4, ((0, 0), (0, 0), (0, Hp - H)))
    return w4.reshape(r, 4 * Hp)


@jax.jit
def lstm_autoencoder_forward(x, params):
    """x: (B, T, D) float32. Returns (B, T, D) float32."""
    B, T, D = x.shape
    H = params["w_hh"].shape[1]
    Bp = _round_up(B, 8)      # f32 sublane multiple
    Hp = _round_up(H, 128)    # lane-aligned gate blocks
    Dp = _round_up(D, 128)    # lane-dense output row

    # ---- Pad / lay out operands (XLA-side, trivial sizes).
    x_p = jnp.pad(x, ((0, Bp - B), (0, 0), (0, 0))).astype(jnp.bfloat16)

    wih_p = _pad_gate_cols(params["w_ih"].T.astype(jnp.float32), H, Hp)      # (D, 4Hp)
    wih_p = wih_p.astype(jnp.bfloat16)

    whh_p = _pad_gate_cols(params["w_hh"].T.astype(jnp.float32), H, Hp)      # (H, 4Hp)
    whh_p = jnp.pad(whh_p, ((0, Hp - H), (0, 0)))                            # (Hp, 4Hp) f32

    b_p = _pad_gate_cols((params["b_ih"] + params["b_hh"]).reshape(1, 4 * H)
                         .astype(jnp.float32), H, Hp)                        # (1, 4Hp) f32

    wlin_p = jnp.pad(params["w_lin"].T.astype(jnp.float32),
                     ((0, Hp - H), (0, Dp - D))).astype(jnp.bfloat16)        # (Hp, Dp)
    blin_p = jnp.pad(params["b_lin"].astype(jnp.float32),
                     (0, Dp - D)).reshape(1, Dp)                             # (1, Dp)

    vmem = pl.BlockSpec(memory_space=pltpu.MemorySpace.VMEM)
    out_pd = pl.pallas_call(
        _lstm_ae_kernel,
        out_shape=jax.ShapeDtypeStruct((Bp, Dp), jnp.float32),
        in_specs=[vmem] * 6,
        out_specs=vmem,
    )(x_p, wih_p, whh_p, b_p, wlin_p, blin_p)

    # Decoder row for the real batch/features; broadcast over time in XLA
    # (Linear(repeat(h)) == repeat(Linear(h))).
    out_bd = out_pd[:B, :D]
    return jnp.broadcast_to(out_bd[:, None, :], (B, T, D))


def init_params(key, input_dim, hidden_dim):
    """Deterministic init mirroring PyTorch LSTM/Linear shapes (gate order i,f,g,o)."""
    k = jax.random.split(key, 6)
    s = 1.0 / jnp.sqrt(hidden_dim)
    u = lambda kk, shape, sc: jax.random.uniform(kk, shape, jnp.float32, -sc, sc)
    return {
        "w_ih": u(k[0], (4 * hidden_dim, input_dim), s),
        "w_hh": u(k[1], (4 * hidden_dim, hidden_dim), s),
        "b_ih": u(k[2], (4 * hidden_dim,), s),
        "b_hh": u(k[3], (4 * hidden_dim,), s),
        "w_lin": u(k[4], (input_dim, hidden_dim), 1.0 / jnp.sqrt(hidden_dim)),
        "b_lin": u(k[5], (input_dim,), 1.0 / jnp.sqrt(hidden_dim)),
    }


def _reference_forward(x, params):
    """Pure-JAX f32 reference (lax.scan) matching nn.LSTM + nn.Linear semantics."""
    B, T, D = x.shape
    H = params["w_hh"].shape[1]
    wih_t = params["w_ih"].T
    whh_t = params["w_hh"].T
    b = params["b_ih"] + params["b_hh"]

    def step(carry, x_t):
        h, c = carry
        gates = x_t @ wih_t + h @ whh_t + b
        i_g = jax.nn.sigmoid(gates[:, 0 * H:1 * H])
        f_g = jax.nn.sigmoid(gates[:, 1 * H:2 * H])
        g_g = jnp.tanh(gates[:, 2 * H:3 * H])
        o_g = jax.nn.sigmoid(gates[:, 3 * H:4 * H])
        c_new = f_g * c + i_g * g_g
        h_new = o_g * jnp.tanh(c_new)
        return (h_new, c_new), None

    (h_fin, _), _ = lax.scan(step, (jnp.zeros((B, H)), jnp.zeros((B, H))),
                             jnp.transpose(x, (1, 0, 2)))
    out_row = h_fin @ params["w_lin"].T + params["b_lin"]
    return jnp.broadcast_to(out_row[:, None, :], (B, T, D))


if __name__ == "__main__":
    B, T, D, H = 2, 8, 16, 32  # batch, seq_len, input_dim, hidden_dim
    key = jax.random.PRNGKey(0)
    kx, kp = jax.random.split(key)
    x = jax.random.normal(kx, (B, T, D), jnp.float32)
    params = init_params(kp, D, H)

    out = jax.block_until_ready(lstm_autoencoder_forward(x, params))
    ref = _reference_forward(x, params)

    assert out.shape == (B, T, D)
    max_err = float(jnp.max(jnp.abs(out - ref)))
    # Tolerance relaxed for the bf16 MXU feedforward matmuls (state/gates stay f32).
    assert jnp.allclose(out, ref, atol=2e-2, rtol=2e-2), f"mismatch vs reference (max abs err={max_err})"
    print("KERNEL_OK")
</pallas_src>

<mosaic_0001>
module attributes {stable_mosaic.version = 11 : i64} {
  func.func @_lstm_ae_kernel(%arg0: memref<8x8x16xbf16, #tpu.memory_space<vmem>>, %arg1: memref<16x512xbf16, #tpu.memory_space<vmem>>, %arg2: memref<128x512xf32, #tpu.memory_space<vmem>>, %arg3: memref<1x512xf32, #tpu.memory_space<vmem>>, %arg4: memref<128x128xbf16, #tpu.memory_space<vmem>>, %arg5: memref<1x128xf32, #tpu.memory_space<vmem>>, %arg6: memref<8x128xf32, #tpu.memory_space<vmem>>) attributes {dimension_semantics = [], scalar_prefetch = 0 : i64, scratch_operands = 0 : i64, tpu.core_type = #tpu.core_type<tc>} {
    %c0 = arith.constant 0 : index
    %c0_0 = arith.constant 0 : index
    %c0_1 = arith.constant 0 : index
    %0 = vector.load %arg0[%c0, %c0_0, %c0_1] : memref<8x8x16xbf16, #tpu.memory_space<vmem>>, vector<8x8x16xbf16>
    %1 = vector.shape_cast %0 : vector<8x8x16xbf16> to vector<64x16xbf16>
    %c0_2 = arith.constant 0 : index
    %c0_3 = arith.constant 0 : index
    %2 = vector.load %arg1[%c0_2, %c0_3] : memref<16x512xbf16, #tpu.memory_space<vmem>>, vector<16x512xbf16>
    %cst = arith.constant dense<0.000000e+00> : vector<64x512xf32>
    %3 = tpu.matmul %1, %2, %cst {dimension_numbers = #tpu.dot_dimension_numbers<[1], [0], [0], [1], [0, 0, 1, 1], [], []>} : vector<64x16xbf16>, vector<16x512xbf16>, vector<64x512xf32> -> vector<64x512xf32>
    %c0_4 = arith.constant 0 : index
    %c0_5 = arith.constant 0 : index
    %4 = vector.load %arg3[%c0_4, %c0_5] : memref<1x512xf32, #tpu.memory_space<vmem>>, vector<1x512xf32>
    %5 = vector.broadcast %4 : vector<1x512xf32> to vector<64x512xf32>
    %6 = arith.addf %3, %5 : vector<64x512xf32>
    %7 = vector.shape_cast %6 : vector<64x512xf32> to vector<8x8x512xf32>
    %c0_6 = arith.constant 0 : index
    %c0_7 = arith.constant 0 : index
    %8 = vector.load %arg2[%c0_6, %c0_7] : memref<128x512xf32, #tpu.memory_space<vmem>>, vector<128x512xf32>
    %cst_8 = arith.constant 0.000000e+00 : f32
    %9 = vector.broadcast %cst_8 : f32 to vector<8x128xf32>
    %cst_9 = arith.constant 0.000000e+00 : f32
    %10 = vector.broadcast %cst_9 : f32 to vector<8x128xf32>
    %11 = vector.extract_strided_slice %7 {offsets = [0, 0, 0], sizes = [8, 1, 512], strides = [1, 1, 1]} : vector<8x8x512xf32> to vector<8x1x512xf32>
    %12 = vector.shape_cast %11 : vector<8x1x512xf32> to vector<8x512xf32>
    %cst_10 = arith.constant dense<0.000000e+00> : vector<8x512xf32>
    %13 = tpu.matmul %9, %8, %cst_10 {dimension_numbers = #tpu.dot_dimension_numbers<[1], [0], [0], [1], [0, 0, 1, 1], [], []>} : vector<8x128xf32>, vector<128x512xf32>, vector<8x512xf32> -> vector<8x512xf32>
    %14 = arith.addf %12, %13 : vector<8x512xf32>
    %15 = vector.extract_strided_slice %14 {offsets = [0, 0], sizes = [8, 128], strides = [1, 1]} : vector<8x512xf32> to vector<8x128xf32>
    %16 = arith.negf %15 : vector<8x128xf32>
    %17 = math.exp %16 : vector<8x128xf32>
    %cst_11 = arith.constant 1.000000e+00 : f32
    %18 = vector.broadcast %cst_11 : f32 to vector<8x128xf32>
    %19 = arith.addf %18, %17 : vector<8x128xf32>
    %20 = arith.divf %18, %19 : vector<8x128xf32>
    %21 = vector.extract_strided_slice %14 {offsets = [0, 128], sizes = [8, 128], strides = [1, 1]} : vector<8x512xf32> to vector<8x128xf32>
    %22 = arith.negf %21 : vector<8x128xf32>
    %23 = math.exp %22 : vector<8x128xf32>
    %cst_12 = arith.constant 1.000000e+00 : f32
    %24 = vector.broadcast %cst_12 : f32 to vector<8x128xf32>
    %25 = arith.addf %24, %23 : vector<8x128xf32>
    %26 = arith.divf %24, %25 : vector<8x128xf32>
    %27 = vector.extract_strided_slice %14 {offsets = [0, 256], sizes = [8, 128], strides = [1, 1]} : vector<8x512xf32> to vector<8x128xf32>
    %28 = math.tanh %27 : vector<8x128xf32>
    %29 = vector.extract_strided_slice %14 {offsets = [0, 384], sizes = [8, 128], strides = [1, 1]} : vector<8x512xf32> to vector<8x128xf32>
    %30 = arith.negf %29 : vector<8x128xf32>
    %31 = math.exp %30 : vector<8x128xf32>
    %cst_13 = arith.constant 1.000000e+00 : f32
    %32 = vector.broadcast %cst_13 : f32 to vector<8x128xf32>
    %33 = arith.addf %32, %31 : vector<8x128xf32>
    %34 = arith.divf %32, %33 : vector<8x128xf32>
    %35 = arith.mulf %26, %10 : vector<8x128xf32>
    %36 = arith.mulf %20, %28 : vector<8x128xf32>
    %37 = arith.addf %35, %36 : vector<8x128xf32>
    %38 = math.tanh %37 : vector<8x128xf32>
    %39 = arith.mulf %34, %38 : vector<8x128xf32>
    %40 = vector.extract_strided_slice %7 {offsets = [0, 1, 0], sizes = [8, 1, 512], strides = [1, 1, 1]} : vector<8x8x512xf32> to vector<8x1x512xf32>
    %41 = vector.shape_cast %40 : vector<8x1x512xf32> to vector<8x512xf32>
    %cst_14 = arith.constant dense<0.000000e+00> : vector<8x512xf32>
    %42 = tpu.matmul %39, %8, %cst_14 {dimension_numbers = #tpu.dot_dimension_numbers<[1], [0], [0], [1], [0, 0, 1, 1], [], []>} : vector<8x128xf32>, vector<128x512xf32>, vector<8x512xf32> -> vector<8x512xf32>
    %43 = arith.addf %41, %42 : vector<8x512xf32>
    %44 = vector.extract_strided_slice %43 {offsets = [0, 0], sizes = [8, 128], strides = [1, 1]} : vector<8x512xf32> to vector<8x128xf32>
    %45 = arith.negf %44 : vector<8x128xf32>
    %46 = math.exp %45 : vector<8x128xf32>
    %cst_15 = arith.constant 1.000000e+00 : f32
    %47 = vector.broadcast %cst_15 : f32 to vector<8x128xf32>
    %48 = arith.addf %47, %46 : vector<8x128xf32>
    %49 = arith.divf %47, %48 : vector<8x128xf32>
    %50 = vector.extract_strided_slice %43 {offsets = [0, 128], sizes = [8, 128], strides = [1, 1]} : vector<8x512xf32> to vector<8x128xf32>
    %51 = arith.negf %50 : vector<8x128xf32>
    %52 = math.exp %51 : vector<8x128xf32>
    %cst_16 = arith.constant 1.000000e+00 : f32
    %53 = vector.broadcast %cst_16 : f32 to vector<8x128xf32>
    %54 = arith.addf %53, %52 : vector<8x128xf32>
    %55 = arith.divf %53, %54 : vector<8x128xf32>
    %56 = vector.extract_strided_slice %43 {offsets = [0, 256], sizes = [8, 128], strides = [1, 1]} : vector<8x512xf32> to vector<8x128xf32>
    %57 = math.tanh %56 : vector<8x128xf32>
    %58 = vector.extract_strided_slice %43 {offsets = [0, 384], sizes = [8, 128], strides = [1, 1]} : vector<8x512xf32> to vector<8x128xf32>
    %59 = arith.negf %58 : vector<8x128xf32>
    %60 = math.exp %59 : vector<8x128xf32>
    %cst_17 = arith.constant 1.000000e+00 : f32
    %61 = vector.broadcast %cst_17 : f32 to vector<8x128xf32>
    %62 = arith.addf %61, %60 : vector<8x128xf32>
    %63 = arith.divf %61, %62 : vector<8x128xf32>
    %64 = arith.mulf %55, %37 : vector<8x128xf32>
    %65 = arith.mulf %49, %57 : vector<8x128xf32>
    %66 = arith.addf %64, %65 : vector<8x128xf32>
    %67 = math.tanh %66 : vector<8x128xf32>
    %68 = arith.mulf %63, %67 : vector<8x128xf32>
    %69 = vector.extract_strided_slice %7 {offsets = [0, 2, 0], sizes = [8, 1, 512], strides = [1, 1, 1]} : vector<8x8x512xf32> to vector<8x1x512xf32>
    %70 = vector.shape_cast %69 : vector<8x1x512xf32> to vector<8x512xf32>
    %cst_18 = arith.constant dense<0.000000e+00> : vector<8x512xf32>
    %71 = tpu.matmul %68, %8, %cst_18 {dimension_numbers = #tpu.dot_dimension_numbers<[1], [0], [0], [1], [0, 0, 1, 1], [], []>} : vector<8x128xf32>, vector<128x512xf32>, vector<8x512xf32> -> vector<8x512xf32>
    %72 = arith.addf %70, %71 : vector<8x512xf32>
    %73 = vector.extract_strided_slice %72 {offsets = [0, 0], sizes = [8, 128], strides = [1, 1]} : vector<8x512xf32> to vector<8x128xf32>
    %74 = arith.negf %73 : vector<8x128xf32>
    %75 = math.exp %74 : vector<8x128xf32>
    %cst_19 = arith.constant 1.000000e+00 : f32
    %76 = vector.broadcast %cst_19 : f32 to vector<8x128xf32>
    %77 = arith.addf %76, %75 : vector<8x128xf32>
    %78 = arith.divf %76, %77 : vector<8x128xf32>
    %79 = vector.extract_strided_slice %72 {offsets = [0, 128], sizes = [8, 128], strides = [1, 1]} : vector<8x512xf32> to vector<8x128xf32>
    %80 = arith.negf %79 : vector<8x128xf32>
    %81 = math.exp %80 : vector<8x128xf32>
    %cst_20 = arith.constant 1.000000e+00 : f32
    %82 = vector.broadcast %cst_20 : f32 to vector<8x128xf32>
    %83 = arith.addf %82, %81 : vector<8x128xf32>
    %84 = arith.divf %82, %83 : vector<8x128xf32>
    %85 = vector.extract_strided_slice %72 {offsets = [0, 256], sizes = [8, 128], strides = [1, 1]} : vector<8x512xf32> to vector<8x128xf32>
    %86 = math.tanh %85 : vector<8x128xf32>
    %87 = vector.extract_strided_slice %72 {offsets = [0, 384], sizes = [8, 128], strides = [1, 1]} : vector<8x512xf32> to vector<8x128xf32>
    %88 = arith.negf %87 : vector<8x128xf32>
    %89 = math.exp %88 : vector<8x128xf32>
    %cst_21 = arith.constant 1.000000e+00 : f32
    %90 = vector.broadcast %cst_21 : f32 to vector<8x128xf32>
    %91 = arith.addf %90, %89 : vector<8x128xf32>
    %92 = arith.divf %90, %91 : vector<8x128xf32>
    %93 = arith.mulf %84, %66 : vector<8x128xf32>
    %94 = arith.mulf %78, %86 : vector<8x128xf32>
    %95 = arith.addf %93, %94 : vector<8x128xf32>
    %96 = math.tanh %95 : vector<8x128xf32>
    %97 = arith.mulf %92, %96 : vector<8x128xf32>
    %98 = vector.extract_strided_slice %7 {offsets = [0, 3, 0], sizes = [8, 1, 512], strides = [1, 1, 1]} : vector<8x8x512xf32> to vector<8x1x512xf32>
    %99 = vector.shape_cast %98 : vector<8x1x512xf32> to vector<8x512xf32>
    %cst_22 = arith.constant dense<0.000000e+00> : vector<8x512xf32>
    %100 = tpu.matmul %97, %8, %cst_22 {dimension_numbers = #tpu.dot_dimension_numbers<[1], [0], [0], [1], [0, 0, 1, 1], [], []>} : vector<8x128xf32>, vector<128x512xf32>, vector<8x512xf32> -> vector<8x512xf32>
    %101 = arith.addf %99, %100 : vector<8x512xf32>
    %102 = vector.extract_strided_slice %101 {offsets = [0, 0], sizes = [8, 128], strides = [1, 1]} : vector<8x512xf32> to vector<8x128xf32>
    %103 = arith.negf %102 : vector<8x128xf32>
    %104 = math.exp %103 : vector<8x128xf32>
    %cst_23 = arith.constant 1.000000e+00 : f32
    %105 = vector.broadcast %cst_23 : f32 to vector<8x128xf32>
    %106 = arith.addf %105, %104 : vector<8x128xf32>
    %107 = arith.divf %105, %106 : vector<8x128xf32>
    %108 = vector.extract_strided_slice %101 {offsets = [0, 128], sizes = [8, 128], strides = [1, 1]} : vector<8x512xf32> to vector<8x128xf32>
    %109 = arith.negf %108 : vector<8x128xf32>
    %110 = math.exp %109 : vector<8x128xf32>
    %cst_24 = arith.constant 1.000000e+00 : f32
    %111 = vector.broadcast %cst_24 : f32 to vector<8x128xf32>
    %112 = arith.addf %111, %110 : vector<8x128xf32>
    %113 = arith.divf %111, %112 : vector<8x128xf32>
    %114 = vector.extract_strided_slice %101 {offsets = [0, 256], sizes = [8, 128], strides = [1, 1]} : vector<8x512xf32> to vector<8x128xf32>
    %115 = math.tanh %114 : vector<8x128xf32>
    %116 = vector.extract_strided_slice %101 {offsets = [0, 384], sizes = [8, 128], strides = [1, 1]} : vector<8x512xf32> to vector<8x128xf32>
    %117 = arith.negf %116 : vector<8x128xf32>
    %118 = math.exp %117 : vector<8x128xf32>
    %cst_25 = arith.constant 1.000000e+00 : f32
    %119 = vector.broadcast %cst_25 : f32 to vector<8x128xf32>
    %120 = arith.addf %119, %118 : vector<8x128xf32>
    %121 = arith.divf %119, %120 : vector<8x128xf32>
    %122 = arith.mulf %113, %95 : vector<8x128xf32>
    %123 = arith.mulf %107, %115 : vector<8x128xf32>
    %124 = arith.addf %122, %123 : vector<8x128xf32>
    %125 = math.tanh %124 : vector<8x128xf32>
    %126 = arith.mulf %121, %125 : vector<8x128xf32>
    %127 = vector.extract_strided_slice %7 {offsets = [0, 4, 0], sizes = [8, 1, 512], strides = [1, 1, 1]} : vector<8x8x512xf32> to vector<8x1x512xf32>
    %128 = vector.shape_cast %127 : vector<8x1x512xf32> to vector<8x512xf32>
    %cst_26 = arith.constant dense<0.000000e+00> : vector<8x512xf32>
    %129 = tpu.matmul %126, %8, %cst_26 {dimension_numbers = #tpu.dot_dimension_numbers<[1], [0], [0], [1], [0, 0, 1, 1], [], []>} : vector<8x128xf32>, vector<128x512xf32>, vector<8x512xf32> -> vector<8x512xf32>
    %130 = arith.addf %128, %129 : vector<8x512xf32>
    %131 = vector.extract_strided_slice %130 {offsets = [0, 0], sizes = [8, 128], strides = [1, 1]} : vector<8x512xf32> to vector<8x128xf32>
    %132 = arith.negf %131 : vector<8x128xf32>
    %133 = math.exp %132 : vector<8x128xf32>
    %cst_27 = arith.constant 1.000000e+00 : f32
    %134 = vector.broadcast %cst_27 : f32 to vector<8x128xf32>
    %135 = arith.addf %134, %133 : vector<8x128xf32>
    %136 = arith.divf %134, %135 : vector<8x128xf32>
    %137 = vector.extract_strided_slice %130 {offsets = [0, 128], sizes = [8, 128], strides = [1, 1]} : vector<8x512xf32> to vector<8x128xf32>
    %138 = arith.negf %137 : vector<8x128xf32>
    %139 = math.exp %138 : vector<8x128xf32>
    %cst_28 = arith.constant 1.000000e+00 : f32
    %140 = vector.broadcast %cst_28 : f32 to vector<8x128xf32>
    %141 = arith.addf %140, %139 : vector<8x128xf32>
    %142 = arith.divf %140, %141 : vector<8x128xf32>
    %143 = vector.extract_strided_slice %130 {offsets = [0, 256], sizes = [8, 128], strides = [1, 1]} : vector<8x512xf32> to vector<8x128xf32>
    %144 = math.tanh %143 : vector<8x128xf32>
    %145 = vector.extract_strided_slice %130 {offsets = [0, 384], sizes = [8, 128], strides = [1, 1]} : vector<8x512xf32> to vector<8x128xf32>
    %146 = arith.negf %145 : vector<8x128xf32>
    %147 = math.exp %146 : vector<8x128xf32>
    %cst_29 = arith.constant 1.000000e+00 : f32
    %148 = vector.broadcast %cst_29 : f32 to vector<8x128xf32>
    %149 = arith.addf %148, %147 : vector<8x128xf32>
    %150 = arith.divf %148, %149 : vector<8x128xf32>
    %151 = arith.mulf %142, %124 : vector<8x128xf32>
    %152 = arith.mulf %136, %144 : vector<8x128xf32>
    %153 = arith.addf %151, %152 : vector<8x128xf32>
    %154 = math.tanh %153 : vector<8x128xf32>
    %155 = arith.mulf %150, %154 : vector<8x128xf32>
    %156 = vector.extract_strided_slice %7 {offsets = [0, 5, 0], sizes = [8, 1, 512], strides = [1, 1, 1]} : vector<8x8x512xf32> to vector<8x1x512xf32>
    %157 = vector.shape_cast %156 : vector<8x1x512xf32> to vector<8x512xf32>
    %cst_30 = arith.constant dense<0.000000e+00> : vector<8x512xf32>
    %158 = tpu.matmul %155, %8, %cst_30 {dimension_numbers = #tpu.dot_dimension_numbers<[1], [0], [0], [1], [0, 0, 1, 1], [], []>} : vector<8x128xf32>, vector<128x512xf32>, vector<8x512xf32> -> vector<8x512xf32>
    %159 = arith.addf %157, %158 : vector<8x512xf32>
    %160 = vector.extract_strided_slice %159 {offsets = [0, 0], sizes = [8, 128], strides = [1, 1]} : vector<8x512xf32> to vector<8x128xf32>
    %161 = arith.negf %160 : vector<8x128xf32>
    %162 = math.exp %161 : vector<8x128xf32>
    %cst_31 = arith.constant 1.000000e+00 : f32
    %163 = vector.broadcast %cst_31 : f32 to vector<8x128xf32>
    %164 = arith.addf %163, %162 : vector<8x128xf32>
    %165 = arith.divf %163, %164 : vector<8x128xf32>
    %166 = vector.extract_strided_slice %159 {offsets = [0, 128], sizes = [8, 128], strides = [1, 1]} : vector<8x512xf32> to vector<8x128xf32>
    %167 = arith.negf %166 : vector<8x128xf32>
    %168 = math.exp %167 : vector<8x128xf32>
    %cst_32 = arith.constant 1.000000e+00 : f32
    %169 = vector.broadcast %cst_32 : f32 to vector<8x128xf32>
    %170 = arith.addf %169, %168 : vector<8x128xf32>
    %171 = arith.divf %169, %170 : vector<8x128xf32>
    %172 = vector.extract_strided_slice %159 {offsets = [0, 256], sizes = [8, 128], strides = [1, 1]} : vector<8x512xf32> to vector<8x128xf32>
    %173 = math.tanh %172 : vector<8x128xf32>
    %174 = vector.extract_strided_slice %159 {offsets = [0, 384], sizes = [8, 128], strides = [1, 1]} : vector<8x512xf32> to vector<8x128xf32>
    %175 = arith.negf %174 : vector<8x128xf32>
    %176 = math.exp %175 : vector<8x128xf32>
    %cst_33 = arith.constant 1.000000e+00 : f32
    %177 = vector.broadcast %cst_33 : f32 to vector<8x128xf32>
    %178 = arith.addf %177, %176 : vector<8x128xf32>
    %179 = arith.divf %177, %178 : vector<8x128xf32>
    %180 = arith.mulf %171, %153 : vector<8x128xf32>
    %181 = arith.mulf %165, %173 : vector<8x128xf32>
    %182 = arith.addf %180, %181 : vector<8x128xf32>
    %183 = math.tanh %182 : vector<8x128xf32>
    %184 = arith.mulf %179, %183 : vector<8x128xf32>
    %185 = vector.extract_strided_slice %7 {offsets = [0, 6, 0], sizes = [8, 1, 512], strides = [1, 1, 1]} : vector<8x8x512xf32> to vector<8x1x512xf32>
    %186 = vector.shape_cast %185 : vector<8x1x512xf32> to vector<8x512xf32>
    %cst_34 = arith.constant dense<0.000000e+00> : vector<8x512xf32>
    %187 = tpu.matmul %184, %8, %cst_34 {dimension_numbers = #tpu.dot_dimension_numbers<[1], [0], [0], [1], [0, 0, 1, 1], [], []>} : vector<8x128xf32>, vector<128x512xf32>, vector<8x512xf32> -> vector<8x512xf32>
    %188 = arith.addf %186, %187 : vector<8x512xf32>
    %189 = vector.extract_strided_slice %188 {offsets = [0, 0], sizes = [8, 128], strides = [1, 1]} : vector<8x512xf32> to vector<8x128xf32>
    %190 = arith.negf %189 : vector<8x128xf32>
    %191 = math.exp %190 : vector<8x128xf32>
    %cst_35 = arith.constant 1.000000e+00 : f32
    %192 = vector.broadcast %cst_35 : f32 to vector<8x128xf32>
    %193 = arith.addf %192, %191 : vector<8x128xf32>
    %194 = arith.divf %192, %193 : vector<8x128xf32>
    %195 = vector.extract_strided_slice %188 {offsets = [0, 128], sizes = [8, 128], strides = [1, 1]} : vector<8x512xf32> to vector<8x128xf32>
    %196 = arith.negf %195 : vector<8x128xf32>
    %197 = math.exp %196 : vector<8x128xf32>
    %cst_36 = arith.constant 1.000000e+00 : f32
    %198 = vector.broadcast %cst_36 : f32 to vector<8x128xf32>
    %199 = arith.addf %198, %197 : vector<8x128xf32>
    %200 = arith.divf %198, %199 : vector<8x128xf32>
    %201 = vector.extract_strided_slice %188 {offsets = [0, 256], sizes = [8, 128], strides = [1, 1]} : vector<8x512xf32> to vector<8x128xf32>
    %202 = math.tanh %201 : vector<8x128xf32>
    %203 = vector.extract_strided_slice %188 {offsets = [0, 384], sizes = [8, 128], strides = [1, 1]} : vector<8x512xf32> to vector<8x128xf32>
    %204 = arith.negf %203 : vector<8x128xf32>
    %205 = math.exp %204 : vector<8x128xf32>
    %cst_37 = arith.constant 1.000000e+00 : f32
    %206 = vector.broadcast %cst_37 : f32 to vector<8x128xf32>
    %207 = arith.addf %206, %205 : vector<8x128xf32>
    %208 = arith.divf %206, %207 : vector<8x128xf32>
    %209 = arith.mulf %200, %182 : vector<8x128xf32>
    %210 = arith.mulf %194, %202 : vector<8x128xf32>
    %211 = arith.addf %209, %210 : vector<8x128xf32>
    %212 = math.tanh %211 : vector<8x128xf32>
    %213 = arith.mulf %208, %212 : vector<8x128xf32>
    %214 = vector.extract_strided_slice %7 {offsets = [0, 7, 0], sizes = [8, 1, 512], strides = [1, 1, 1]} : vector<8x8x512xf32> to vector<8x1x512xf32>
    %215 = vector.shape_cast %214 : vector<8x1x512xf32> to vector<8x512xf32>
    %cst_38 = arith.constant dense<0.000000e+00> : vector<8x512xf32>
    %216 = tpu.matmul %213, %8, %cst_38 {dimension_numbers = #tpu.dot_dimension_numbers<[1], [0], [0], [1], [0, 0, 1, 1], [], []>} : vector<8x128xf32>, vector<128x512xf32>, vector<8x512xf32> -> vector<8x512xf32>
    %217 = arith.addf %215, %216 : vector<8x512xf32>
    %218 = vector.extract_strided_slice %217 {offsets = [0, 0], sizes = [8, 128], strides = [1, 1]} : vector<8x512xf32> to vector<8x128xf32>
    %219 = arith.negf %218 : vector<8x128xf32>
    %220 = math.exp %219 : vector<8x128xf32>
    %cst_39 = arith.constant 1.000000e+00 : f32
    %221 = vector.broadcast %cst_39 : f32 to vector<8x128xf32>
    %222 = arith.addf %221, %220 : vector<8x128xf32>
    %223 = arith.divf %221, %222 : vector<8x128xf32>
    %224 = vector.extract_strided_slice %217 {offsets = [0, 128], sizes = [8, 128], strides = [1, 1]} : vector<8x512xf32> to vector<8x128xf32>
    %225 = arith.negf %224 : vector<8x128xf32>
    %226 = math.exp %225 : vector<8x128xf32>
    %cst_40 = arith.constant 1.000000e+00 : f32
    %227 = vector.broadcast %cst_40 : f32 to vector<8x128xf32>
    %228 = arith.addf %227, %226 : vector<8x128xf32>
    %229 = arith.divf %227, %228 : vector<8x128xf32>
    %230 = vector.extract_strided_slice %217 {offsets = [0, 256], sizes = [8, 128], strides = [1, 1]} : vector<8x512xf32> to vector<8x128xf32>
    %231 = math.tanh %230 : vector<8x128xf32>
    %232 = vector.extract_strided_slice %217 {offsets = [0, 384], sizes = [8, 128], strides = [1, 1]} : vector<8x512xf32> to vector<8x128xf32>
    %233 = arith.negf %232 : vector<8x128xf32>
    %234 = math.exp %233 : vector<8x128xf32>
    %cst_41 = arith.constant 1.000000e+00 : f32
    %235 = vector.broadcast %cst_41 : f32 to vector<8x128xf32>
    %236 = arith.addf %235, %234 : vector<8x128xf32>
    %237 = arith.divf %235, %236 : vector<8x128xf32>
    %238 = arith.mulf %229, %211 : vector<8x128xf32>
    %239 = arith.mulf %223, %231 : vector<8x128xf32>
    %240 = arith.addf %238, %239 : vector<8x128xf32>
    %241 = math.tanh %240 : vector<8x128xf32>
    %242 = arith.mulf %237, %241 : vector<8x128xf32>
    %243 = arith.truncf %242 : vector<8x128xf32> to vector<8x128xbf16>
    %c0_42 = arith.constant 0 : index
    %c0_43 = arith.constant 0 : index
    %244 = vector.load %arg4[%c0_42, %c0_43] : memref<128x128xbf16, #tpu.memory_space<vmem>>, vector<128x128xbf16>
    %cst_44 = arith.constant dense<0.000000e+00> : vector<8x128xf32>
    %245 = tpu.matmul %243, %244, %cst_44 {dimension_numbers = #tpu.dot_dimension_numbers<[1], [0], [0], [1], [0, 0, 1, 1], [], []>} : vector<8x128xbf16>, vector<128x128xbf16>, vector<8x128xf32> -> vector<8x128xf32>
    %c0_45 = arith.constant 0 : index
    %c0_46 = arith.constant 0 : index
    %246 = vector.load %arg5[%c0_45, %c0_46] : memref<1x128xf32, #tpu.memory_space<vmem>>, vector<1x128xf32>
    %247 = vector.broadcast %246 : vector<1x128xf32> to vector<8x128xf32>
    %248 = arith.addf %245, %247 : vector<8x128xf32>
    %c0_47 = arith.constant 0 : index
    %c0_48 = arith.constant 0 : index
    %249 = vector.load %arg6[%c0_47, %c0_48] : memref<8x128xf32, #tpu.memory_space<vmem>>, vector<8x128xf32>
    tpu.vector_store %arg6[%c0_47, %c0_48], %248 {strides = array<i32>} : memref<8x128xf32, #tpu.memory_space<vmem>>, vector<8x128xf32>,
    return
  }
}

</mosaic_0001>

<llo_original>
// kernel: lstm_autoencoder_forward.1
$region0: #{lstm_autoencoder_forward.1}
  #allocation0 [shape = 'u32[]', space=smem, size = 0x4, offset = 0x4, fixed_abs, tag = 'smem constant byte address 0x4 - core index']
  #allocation1 [shape = 'u32[144,128]{1,0:T(1,128)}', space=vmem, size = 0x12000, scoped, tag = 'internal scratch']
  %s0 = inlined_call_operand.vmem [shape: bf16[8,8,16], index: 0, kind: input, shape index: {}]
  %s1 = inlined_call_operand.vmem [shape: bf16[16,512], index: 1, kind: input, shape index: {}]
  %s2 = inlined_call_operand.vmem [shape: f32[128,512], index: 2, kind: input, shape index: {}]
  %s3 = inlined_call_operand.vmem [shape: f32[1,512], index: 3, kind: input, shape index: {}]
  %s4 = inlined_call_operand.vmem [shape: bf16[128,128], index: 4, kind: input, shape index: {}]
  %s5 = inlined_call_operand.vmem [shape: f32[1,128], index: 5, kind: input, shape index: {}]
  %s6 = inlined_call_operand.vmem [shape: f32[8,128], index: 6, kind: output, shape index: {}]
  %s7 = sld [smem:[#allocation0]]
  $region34: #{lstm_autoencoder_forward.1} parent=0
    _
  %s9 = ssub.s32 1, %s7
  %s10 = scalar_select 0, %s9, %s7
  // Predicated region
  $region2: #{lstm_autoencoder_forward.1} parent=0 // pred_check
    _
  $region3: #{lstm_autoencoder_forward.1} parent=0 // pred_check_branch
    %12 = sbr.rel (0) target = $region5
  $region4: #{lstm_autoencoder_forward.1} parent=0 // pred_region
    _
  $region5: #{lstm_autoencoder_forward.1} parent=0 // pred_fallthru
    _
  // Predicated region
  $region6: #{lstm_autoencoder_forward.1} parent=0 // pred_check
    _
  $region7: #{lstm_autoencoder_forward.1} parent=0 // pred_check_branch
    %14 = sbr.rel (0) target = $region9
  $region8: #{lstm_autoencoder_forward.1} parent=0 // pred_region
    _
  $region9: #{lstm_autoencoder_forward.1} parent=0 // pred_fallthru
    _
  // Predicated region
  $region10: #{lstm_autoencoder_forward.1} parent=0 // pred_check
    _
  $region11: #{lstm_autoencoder_forward.1} parent=0 // pred_check_branch
    %16 = sbr.rel (0) target = $region13
  $region12: #{lstm_autoencoder_forward.1} parent=0 // pred_region
    _
  $region13: #{lstm_autoencoder_forward.1} parent=0 // pred_fallthru
    _
  // Predicated region
  $region14: #{lstm_autoencoder_forward.1} parent=0 // pred_check
    _
  $region15: #{lstm_autoencoder_forward.1} parent=0 // pred_check_branch
    %18 = sbr.rel (0) target = $region17
  $region16: #{lstm_autoencoder_forward.1} parent=0 // pred_region
    _
  $region17: #{lstm_autoencoder_forward.1} parent=0 // pred_fallthru
    _
  // Predicated region
  $region18: #{lstm_autoencoder_forward.1} parent=0 // pred_check
    _
  $region19: #{lstm_autoencoder_forward.1} parent=0 // pred_check_branch
    %20 = sbr.rel (0) target = $region21
  $region20: #{lstm_autoencoder_forward.1} parent=0 // pred_region
    _
  $region21: #{lstm_autoencoder_forward.1} parent=0 // pred_fallthru
    _
  // Predicated region
  $region22: #{lstm_autoencoder_forward.1} parent=0 // pred_check
    _
  $region23: #{lstm_autoencoder_forward.1} parent=0 // pred_check_branch
    %22 = sbr.rel (0) target = $region25
  $region24: #{lstm_autoencoder_forward.1} parent=0 // pred_region
    _
  $region25: #{lstm_autoencoder_forward.1} parent=0 // pred_fallthru
    _
  %v24 = vld [vmem:[%s0] sm:$0xf]
  %v25 = vld [vmem:[%s0 + $0x4] sm:$0xf]
  %v26 = vld [vmem:[%s0 + $0x8] sm:$0xf]
  %v27 = vld [vmem:[%s0 + $0xc] sm:$0xf]
  %v28 = vld [vmem:[%s0 + $0x10] sm:$0xf]
  %v29 = vld [vmem:[%s0 + $0x14] sm:$0xf]
  %v30 = vld [vmem:[%s0 + $0x18] sm:$0xf]
  %v31 = vld [vmem:[%s0 + $0x1c] sm:$0xf]
  %v32 = vld [vmem:[%s1] sm:$0xff]
  %v33 = vld [vmem:[%s1 + $0x8] sm:$0xff]
  %v34 = vld [vmem:[%s1 + $0x10] sm:$0xff]
  %v35 = vld [vmem:[%s1 + $0x18] sm:$0xff]
  %v36 = vld [vmem:[%s3] sm:$0xf]
  %v38 = vlaneseq
  %v39 = vshrl.u32 %v38, 7
  %v40 = vsub.s32 0, %v39
  %v41 = vrot.slane %v36, %v40
  %v42 = vlaneseq
  %v43 = vshrl.u32 %v42, 7
  %v44 = vsub.s32 1, %v43
  %v45 = vrot.slane %v36, %v44
  %v46 = vlaneseq
  %v47 = vshrl.u32 %v46, 7
  %v48 = vsub.s32 2, %v47
  %v49 = vrot.slane %v36, %v48
  %v50 = vlaneseq
  %v51 = vshrl.u32 %v50, 7
  %v52 = vsub.s32 3, %v51
  %v53 = vrot.slane %v36, %v52
  %v66 = vunpack.c.l.b16 %v24
  %v67 = vunpack.c.l.b16 %v25
  %v68 = vunpack.c.l.b16 %v26
  %v69 = vunpack.c.l.b16 %v27
  %v70 = vunpack.c.l.b16 %v28
  %v71 = vunpack.c.l.b16 %v29
  %v72 = vunpack.c.l.b16 %v30
  %v73 = vunpack.c.l.b16 %v31
  %v74 = vpack.c.b16 %v67, %v66
  %v75 = vpack.c.b16 %v69, %v68
  %v76 = vpack.c.b16 %v71, %v70
  %v77 = vpack.c.b16 %v73, %v72
  %v82 = vunpack.c.l.b16 %v32
  %v83 = vunpack.c.h.b16 %v32
  %v84 = vunpack.c.l.b16 %v33
  %v85 = vunpack.c.h.b16 %v33
  %v86 = vunpack.c.l.b16 %v34
  %v87 = vunpack.c.h.b16 %v34
  %v88 = vunpack.c.l.b16 %v35
  %v89 = vunpack.c.h.b16 %v35
  %v90 = vpack.c.b16 %v86, %v82
  %v91 = vpack.c.b16 %v87, %v83
  %v92 = vpack.c.b16 %v88, %v84
  %v93 = vpack.c.b16 %v89, %v85
  %vm98 = vcmask 130048
  %v100 = vsel %vm98, %v74, 0
  %v103 = vsel %vm98, %v75, 0
  %v106 = vsel %vm98, %v76, 0
  %v109 = vsel %vm98, %v77, 0
  %111 = vmatprep.subr.bf16.mxu0 0
  %112 = vmatpush1.bf16.msra.mxu0 0
  %113 = vmatprep.subr.bf16.mxu0 0
  %114 = vmatpush1.bf16.msra.mxu0 0
  %115 = vmatprep.subr.bf16.mxu0 0
  %116 = vmatpush1.bf16.msra.mxu0 0
  %117 = vmatprep.subr.bf16.mxu0 0
  %118 = vmatpush1.bf16.msra.mxu0 0
  %119 = vmatprep.subr.bf16.mxu0 0
  %120 = vmatpush1.bf16.msra.mxu0 0
  %121 = vmatprep.subr.bf16.mxu0 0
  %122 = vmatpush1.bf16.msra.mxu0 0
  %123 = vmatprep.subr.bf16.mxu0 0
  %124 = vmatpush1.bf16.msra.mxu0 0
  %125 = vmatprep.subr.bf16.mxu0 %v91
  %126 = vmatpush1.bf16.msra.mxu0 %v90
  %127 = vmatprep.subr.bf16.mxu0 0
  %128 = vmatpush2.bf16.msra.mxu0 0
  %129 = vmatprep.subr.bf16.mxu0 0
  %130 = vmatpush2.bf16.msra.mxu0 0
  %131 = vmatprep.subr.bf16.mxu0 0
  %132 = vmatpush2.bf16.msra.mxu0 0
  %133 = vmatprep.subr.bf16.mxu0 0
  %134 = vmatpush2.bf16.msra.mxu0 0
  %135 = vmatprep.subr.bf16.mxu0 0
  %136 = vmatpush2.bf16.msra.mxu0 0
  %137 = vmatprep.subr.bf16.mxu0 0
  %138 = vmatpush2.bf16.msra.mxu0 0
  %139 = vmatprep.subr.bf16.mxu0 0
  %140 = vmatpush2.bf16.msra.mxu0 0
  %141 = vmatprep.subr.bf16.mxu0 0
  %142 = vmatpush2.bf16.msra.mxu0 0
  %143 = vmatprep.mubr.bf16.mxu0 0
  %144 = vmatmul.mubr.bf16.gmra.mxu0 %v100
  %v145 = vpop.f32.mrf.mxu0
  %v146 = vadd.f32 %v41, %v145
  %v147 = vpop.f32.mrf.mxu0
  %v148 = vadd.f32 %v45, %v147
  %v149 = vpop.f32.mrf.mxu0
  %v150 = vadd.f32 %v41, %v149
  %v151 = vpop.f32.mrf.mxu0
  %v152 = vadd.f32 %v45, %v151
  %153 = vmatprep.mubr.bf16.mxu0 0
  %154 = vmatmul.mubr.bf16.gmra.mxu0 %v103
  %v155 = vpop.f32.mrf.mxu0
  %v156 = vadd.f32 %v41, %v155
  %v157 = vpop.f32.mrf.mxu0
  %v158 = vadd.f32 %v45, %v157
  %v159 = vpop.f32.mrf.mxu0
  %v160 = vadd.f32 %v41, %v159
  %v161 = vpop.f32.mrf.mxu0
  %v162 = vadd.f32 %v45, %v161
  %163 = vmatprep.mubr.bf16.mxu0 0
  %164 = vmatmul.mubr.bf16.gmra.mxu0 %v106
  %v165 = vpop.f32.mrf.mxu0
  %v166 = vadd.f32 %v41, %v165
  %v167 = vpop.f32.mrf.mxu0
  %v168 = vadd.f32 %v45, %v167
  %v169 = vpop.f32.mrf.mxu0
  %v170 = vadd.f32 %v41, %v169
  %v171 = vpop.f32.mrf.mxu0
  %v172 = vadd.f32 %v45, %v171
  %173 = vmatprep.mubr.bf16.mxu0 0
  %174 = vmatmul.mubr.bf16.gmra.mxu0 %v109
  %v175 = vpop.f32.mrf.mxu0
  %v176 = vadd.f32 %v41, %v175
  %v177 = vpop.f32.mrf.mxu0
  %v178 = vadd.f32 %v45, %v177
  %v179 = vpop.f32.mrf.mxu0
  %v180 = vadd.f32 %v41, %v179
  %v181 = vpop.f32.mrf.mxu0
  %v182 = vadd.f32 %v45, %v181
  %183 = vdwg.mxu0
  %184 = vmatprep.subr.bf16.mxu0 0
  %185 = vmatpush1.bf16.msra.mxu0 0
  %186 = vmatprep.subr.bf16.mxu0 0
  %187 = vmatpush1.bf16.msra.mxu0 0
  %188 = vmatprep.subr.bf16.mxu0 0
  %189 = vmatpush1.bf16.msra.mxu0 0
  %190 = vmatprep.subr.bf16.mxu0 0
  %191 = vmatpush1.bf16.msra.mxu0 0
  %192 = vmatprep.subr.bf16.mxu0 0
  %193 = vmatpush1.bf16.msra.mxu0 0
  %194 = vmatprep.subr.bf16.mxu0 0
  %195 = vmatpush1.bf16.msra.mxu0 0
  %196 = vmatprep.subr.bf16.mxu0 0
  %197 = vmatpush1.bf16.msra.mxu0 0
  %198 = vmatprep.subr.bf16.mxu0 %v93
  %199 = vmatpush1.bf16.msra.mxu0 %v92
  %200 = vmatprep.subr.bf16.mxu0 0
  %201 = vmatpush2.bf16.msra.mxu0 0
  %202 = vmatprep.subr.bf16.mxu0 0
  %203 = vmatpush2.bf16.msra.mxu0 0
  %204 = vmatprep.subr.bf16.mxu0 0
  %205 = vmatpush2.bf16.msra.mxu0 0
  %206 = vmatprep.subr.bf16.mxu0 0
  %207 = vmatpush2.bf16.msra.mxu0 0
  %208 = vmatprep.subr.bf16.mxu0 0
  %209 = vmatpush2.bf16.msra.mxu0 0
  %210 = vmatprep.subr.bf16.mxu0 0
  %211 = vmatpush2.bf16.msra.mxu0 0
  %212 = vmatprep.subr.bf16.mxu0 0
  %213 = vmatpush2.bf16.msra.mxu0 0
  %214 = vmatprep.subr.bf16.mxu0 0
  %215 = vmatpush2.bf16.msra.mxu0 0
  %216 = vmatprep.mubr.bf16.mxu0 0
  %217 = vmatmul.mubr.bf16.gmra.mxu0 %v100
  %v218 = vpop.f32.mrf.mxu0
  %v219 = vadd.f32 %v49, %v218
  %v220 = vpop.f32.mrf.mxu0
  %v221 = vadd.f32 %v53, %v220
  %v222 = vpop.f32.mrf.mxu0
  %v223 = vadd.f32 %v49, %v222
  %v224 = vpop.f32.mrf.mxu0
  %v225 = vadd.f32 %v53, %v224
  %226 = vmatprep.mubr.bf16.mxu0 0
  %227 = vmatmul.mubr.bf16.gmra.mxu0 %v103
  %v228 = vpop.f32.mrf.mxu0
  %v229 = vadd.f32 %v49, %v228
  %v230 = vpop.f32.mrf.mxu0
  %v231 = vadd.f32 %v53, %v230
  %v232 = vpop.f32.mrf.mxu0
  %v233 = vadd.f32 %v49, %v232
  %v234 = vpop.f32.mrf.mxu0
  %v235 = vadd.f32 %v53, %v234
  %236 = vmatprep.mubr.bf16.mxu0 0
  %237 = vmatmul.mubr.bf16.gmra.mxu0 %v106
  %v238 = vpop.f32.mrf.mxu0
  %v239 = vadd.f32 %v49, %v238
  %v240 = vpop.f32.mrf.mxu0
  %v241 = vadd.f32 %v53, %v240
  %v242 = vpop.f32.mrf.mxu0
  %v243 = vadd.f32 %v49, %v242
  %v244 = vpop.f32.mrf.mxu0
  %v245 = vadd.f32 %v53, %v244
  %246 = vmatprep.mubr.bf16.mxu0 0
  %247 = vmatmul.mubr.bf16.gmra.mxu0 %v109
  %v248 = vpop.f32.mrf.mxu0
  %v249 = vadd.f32 %v49, %v248
  %v250 = vpop.f32.mrf.mxu0
  %v251 = vadd.f32 %v53, %v250
  %v252 = vpop.f32.mrf.mxu0
  %v253 = vadd.f32 %v49, %v252
  %v254 = vpop.f32.mrf.mxu0
  %v255 = vadd.f32 %v53, %v254
  %256 = vdwg.mxu0
  %v257 = vld [vmem:[%s2] sm:$0xff]
  %v258 = vld [vmem:[%s2 + $0x8] sm:$0xff]
  %v259 = vld [vmem:[%s2 + $0x10] sm:$0xff]
  %v260 = vld [vmem:[%s2 + $0x18] sm:$0xff]
  %v261 = vld [vmem:[%s2 + $0x20] sm:$0xff]
  %v262 = vld [vmem:[%s2 + $0x28] sm:$0xff]
  %v263 = vld [vmem:[%s2 + $0x30] sm:$0xff]
  %v264 = vld [vmem:[%s2 + $0x38] sm:$0xff]
  %v265 = vld [vmem:[%s2 + $0x40] sm:$0xff]
  %v266 = vld [vmem:[%s2 + $0x48] sm:$0xff]
  %v267 = vld [vmem:[%s2 + $0x50] sm:$0xff]
  %v268 = vld [vmem:[%s2 + $0x58] sm:$0xff]
  %v269 = vld [vmem:[%s2 + $0x60] sm:$0xff]
  %v270 = vld [vmem:[%s2 + $0x68] sm:$0xff]
  %v271 = vld [vmem:[%s2 + $0x70] sm:$0xff]
  %v272 = vld [vmem:[%s2 + $0x78] sm:$0xff]
  %v273 = vld [vmem:[%s2 + $0x80] sm:$0xff]
  %v274 = vld [vmem:[%s2 + $0x88] sm:$0xff]
  %v275 = vld [vmem:[%s2 + $0x90] sm:$0xff]
  %v276 = vld [vmem:[%s2 + $0x98] sm:$0xff]
  %v277 = vld [vmem:[%s2 + $0xa0] sm:$0xff]
  %v278 = vld [vmem:[%s2 + $0xa8] sm:$0xff]
  %v279 = vld [vmem:[%s2 + $0xb0] sm:$0xff]
  %v280 = vld [vmem:[%s2 + $0xb8] sm:$0xff]
  %v281 = vld [vmem:[%s2 + $0xc0] sm:$0xff]
  %v282 = vld [vmem:[%s2 + $0xc8] sm:$0xff]
  %v283 = vld [vmem:[%s2 + $0xd0] sm:$0xff]
  %v284 = vld [vmem:[%s2 + $0xd8] sm:$0xff]
  %v285 = vld [vmem:[%s2 + $0xe0] sm:$0xff]
  %v286 = vld [vmem:[%s2 + $0xe8] sm:$0xff]
  %v287 = vld [vmem:[%s2 + $0xf0] sm:$0xff]
  %v288 = vld [vmem:[%s2 + $0xf8] sm:$0xff]
  %v289 = vld [vmem:[%s2 + $0x100] sm:$0xff]
  %v290 = vld [vmem:[%s2 + $0x108] sm:$0xff]
  %v291 = vld [vmem:[%s2 + $0x110] sm:$0xff]
  %v292 = vld [vmem:[%s2 + $0x118] sm:$0xff]
  %v293 = vld [vmem:[%s2 + $0x120] sm:$0xff]
  %v294 = vld [vmem:[%s2 + $0x128] sm:$0xff]
  %v295 = vld [vmem:[%s2 + $0x130] sm:$0xff]
  %v296 = vld [vmem:[%s2 + $0x138] sm:$0xff]
  %v297 = vld [vmem:[%s2 + $0x140] sm:$0xff]
  %v298 = vld [vmem:[%s2 + $0x148] sm:$0xff]
  %v299 = vld [vmem:[%s2 + $0x150] sm:$0xff]
  %v300 = vld [vmem:[%s2 + $0x158] sm:$0xff]
  %v301 = vld [vmem:[%s2 + $0x160] sm:$0xff]
  %v302 = vld [vmem:[%s2 + $0x168] sm:$0xff]
  %v303 = vld [vmem:[%s2 + $0x170] sm:$0xff]
  %v304 = vld [vmem:[%s2 + $0x178] sm:$0xff]
  %v305 = vld [vmem:[%s2 + $0x180] sm:$0xff]
  %v306 = vld [vmem:[%s2 + $0x188] sm:$0xff]
  %v307 = vld [vmem:[%s2 + $0x190] sm:$0xff]
  %v308 = vld [vmem:[%s2 + $0x198] sm:$0xff]
  %v309 = vld [vmem:[%s2 + $0x1a0] sm:$0xff]
  %v310 = vld [vmem:[%s2 + $0x1a8] sm:$0xff]
  %v311 = vld [vmem:[%s2 + $0x1b0] sm:$0xff]
  %v312 = vld [vmem:[%s2 + $0x1b8] sm:$0xff]
  %v313 = vld [vmem:[%s2 + $0x1c0] sm:$0xff]
  %v314 = vld [vmem:[%s2 + $0x1c8] sm:$0xff]
  %v315 = vld [vmem:[%s2 + $0x1d0] sm:$0xff]
  %v316 = vld [vmem:[%s2 + $0x1d8] sm:$0xff]
  %v317 = vld [vmem:[%s2 + $0x1e0] sm:$0xff]
  %v318 = vld [vmem:[%s2 + $0x1e8] sm:$0xff]
  %v319 = vld [vmem:[%s2 + $0x1f0] sm:$0xff]
  %v320 = vld [vmem:[%s2 + $0x1f8] sm:$0xff]
  %321 = vmatprep.subr.mxu0 %v318
  %322 = vmatpush1.msra.mxu0 %v317
  %323 = vmatprep.subr.mxu0 %v314
  %324 = vmatpush1.msra.mxu0 %v313
  %325 = vmatprep.subr.mxu0 %v310
  %326 = vmatpush1.msra.mxu0 %v309
  %327 = vmatprep.subr.mxu0 %v306
  %328 = vmatpush1.msra.mxu0 %v305
  %329 = vmatprep.subr.mxu0 %v302
  %330 = vmatpush1.msra.mxu0 %v301
  %331 = vmatprep.subr.mxu0 %v298
  %332 = vmatpush1.msra.mxu0 %v297
  %333 = vmatprep.subr.mxu0 %v294
  %334 = vmatpush1.msra.mxu0 %v293
  %335 = vmatprep.subr.mxu0 %v290
  %336 = vmatpush1.msra.mxu0 %v289
  %337 = vmatprep.subr.mxu0 %v286
  %338 = vmatpush1.msra.mxu0 %v285
  %339 = vmatprep.subr.mxu0 %v282
  %340 = vmatpush1.msra.mxu0 %v281
  %341 = vmatprep.subr.mxu0 %v278
  %342 = vmatpush1.msra.mxu0 %v277
  %343 = vmatprep.subr.mxu0 %v274
  %344 = vmatpush1.msra.mxu0 %v273
  %345 = vmatprep.subr.mxu0 %v270
  %346 = vmatpush1.msra.mxu0 %v269
  %347 = vmatprep.subr.mxu0 %v266
  %348 = vmatpush1.msra.mxu0 %v265
  %349 = vmatprep.subr.mxu0 %v262
  %350 = vmatpush1.msra.mxu0 %v261
  %351 = vmatprep.subr.mxu0 %v258
  %352 = vmatpush1.msra.mxu0 %v257
  %353 = vmatprep.subr.mxu0 0.0
  %354 = vmatpush2.msra.mxu0 0.0
  %355 = vmatprep.subr.mxu0 0.0
  %356 = vmatpush2.msra.mxu0 0.0
  %357 = vmatprep.subr.mxu0 0.0
  %358 = vmatpush2.msra.mxu0 0.0
  %359 = vmatprep.subr.mxu0 0.0
  %360 = vmatpush2.msra.mxu0 0.0
  %361 = vmatprep.subr.mxu0 0.0
  %362 = vmatpush2.msra.mxu0 0.0
  %363 = vmatprep.subr.mxu0 0.0
  %364 = vmatpush2.msra.mxu0 0.0
  %365 = vmatprep.subr.mxu0 0.0
  %366 = vmatpush2.msra.mxu0 0.0
  %367 = vmatprep.subr.mxu0 0.0
  %368 = vmatpush2.msra.mxu0 0.0
  %369 = vmatprep.subr.mxu0 0.0
  %370 = vmatpush2.msra.mxu0 0.0
  %371 = vmatprep.subr.mxu0 0.0
  %372 = vmatpush2.msra.mxu0 0.0
  %373 = vmatprep.subr.mxu0 0.0
  %374 = vmatpush2.msra.mxu0 0.0
  %375 = vmatprep.subr.mxu0 0.0
  %376 = vmatpush2.msra.mxu0 0.0
  %377 = vmatprep.subr.mxu0 0.0
  %378 = vmatpush2.msra.mxu0 0.0
  %379 = vmatprep.subr.mxu0 0.0
  %380 = vmatpush2.msra.mxu0 0.0
  %381 = vmatprep.subr.mxu0 0.0
  %382 = vmatpush2.msra.mxu0 0.0
  %383 = vmatprep.subr.mxu0 0.0
  %384 = vmatpush2.msra.mxu0 0.0
  %385 = vmatprep.mubr.f32.mxu0 0.0
  %386 = vmatmul.mubr.f32.gmra.mxu0 0.0
  %v387 = vpop.f32.mrf.mxu0
  %v388 = vadd.f32 0.0, %v387
  %v389 = vpop.f32.mrf.mxu0
  %v390 = vadd.f32 0.0, %v389
  %391 = vdwg.mxu0
  %392 = vmatprep.subr.mxu0 %v320
  %393 = vmatpush1.msra.mxu0 %v319
  %394 = vmatprep.subr.mxu0 %v316
  %395 = vmatpush1.msra.mxu0 %v315
  %396 = vmatprep.subr.mxu0 %v312
  %397 = vmatpush1.msra.mxu0 %v311
  %398 = vmatprep.subr.mxu0 %v308
  %399 = vmatpush1.msra.mxu0 %v307
  %400 = vmatprep.subr.mxu0 %v304
  %401 = vmatpush1.msra.mxu0 %v303
  %402 = vmatprep.subr.mxu0 %v300
  %403 = vmatpush1.msra.mxu0 %v299
  %404 = vmatprep.subr.mxu0 %v296
  %405 = vmatpush1.msra.mxu0 %v295
  %406 = vmatprep.subr.mxu0 %v292
  %407 = vmatpush1.msra.mxu0 %v291
  %408 = vmatprep.subr.mxu0 %v288
  %409 = vmatpush1.msra.mxu0 %v287
  %410 = vmatprep.subr.mxu0 %v284
  %411 = vmatpush1.msra.mxu0 %v283
  %412 = vmatprep.subr.mxu0 %v280
  %413 = vmatpush1.msra.mxu0 %v279
  %414 = vmatprep.subr.mxu0 %v276
  %415 = vmatpush1.msra.mxu0 %v275
  %416 = vmatprep.subr.mxu0 %v272
  %417 = vmatpush1.msra.mxu0 %v271
  %418 = vmatprep.subr.mxu0 %v268
  %419 = vmatpush1.msra.mxu0 %v267
  %420 = vmatprep.subr.mxu0 %v264
  %421 = vmatpush1.msra.mxu0 %v263
  %422 = vmatprep.subr.mxu0 %v260
  %423 = vmatpush1.msra.mxu0 %v259
  %424 = vmatprep.subr.mxu0 0.0
  %425 = vmatpush2.msra.mxu0 0.0
  %426 = vmatprep.subr.mxu0 0.0
  %427 = vmatpush2.msra.mxu0 0.0
  %428 = vmatprep.subr.mxu0 0.0
  %429 = vmatpush2.msra.mxu0 0.0
  %430 = vmatprep.subr.mxu0 0.0
  %431 = vmatpush2.msra.mxu0 0.0
  %432 = vmatprep.subr.mxu0 0.0
  %433 = vmatpush2.msra.mxu0 0.0
  %434 = vmatprep.subr.mxu0 0.0
  %435 = vmatpush2.msra.mxu0 0.0
  %436 = vmatprep.subr.mxu0 0.0
  %437 = vmatpush2.msra.mxu0 0.0
  %438 = vmatprep.subr.mxu0 0.0
  %439 = vmatpush2.msra.mxu0 0.0
  %440 = vmatprep.subr.mxu0 0.0
  %441 = vmatpush2.msra.mxu0 0.0
  %442 = vmatprep.subr.mxu0 0.0
  %443 = vmatpush2.msra.mxu0 0.0
  %444 = vmatprep.subr.mxu0 0.0
  %445 = vmatpush2.msra.mxu0 0.0
  %446 = vmatprep.subr.mxu0 0.0
  %447 = vmatpush2.msra.mxu0 0.0
  %448 = vmatprep.subr.mxu0 0.0
  %449 = vmatpush2.msra.mxu0 0.0
  %450 = vmatprep.subr.mxu0 0.0
  %451 = vmatpush2.msra.mxu0 0.0
  %452 = vmatprep.subr.mxu0 0.0
  %453 = vmatpush2.msra.mxu0 0.0
  %454 = vmatprep.subr.mxu0 0.0
  %455 = vmatpush2.msra.mxu0 0.0
  %456 = vmatprep.mubr.f32.mxu0 0.0
  %457 = vmatmul.mubr.f32.gmra.mxu0 0.0
  %v458 = vpop.f32.mrf.mxu0
  %v459 = vadd.f32 0.0, %v458
  %v460 = vpop.f32.mrf.mxu0
  %v461 = vadd.f32 0.0, %v460
  %462 = vdwg.mxu0
  %v467 = vrot.slane %v388, 1
  %v468 = vrot.slane %v390, 1
  %v469 = vrot.slane %v459, 1
  %v470 = vrot.slane %v461, 1
  %v471 = vrot.slane %v388, 2
  %v472 = vrot.slane %v390, 2
  %v473 = vrot.slane %v459, 2
  %v474 = vrot.slane %v461, 2
  %v475 = vrot.slane %v388, 3
  %v476 = vrot.slane %v390, 3
  %v477 = vrot.slane %v459, 3
  %v478 = vrot.slane %v461, 3
  %v479 = vrot.slane %v388, 4
  %v480 = vrot.slane %v390, 4
  %v481 = vrot.slane %v459, 4
  %v482 = vrot.slane %v461, 4
  %v483 = vrot.slane %v388, 5
  %v484 = vrot.slane %v390, 5
  %v485 = vrot.slane %v459, 5
  %v486 = vrot.slane %v461, 5
  %v487 = vrot.slane %v388, 6
  %v488 = vrot.slane %v390, 6
  %v489 = vrot.slane %v459, 6
  %v490 = vrot.slane %v461, 6
  %v491 = vrot.slane %v388, 7
  %v492 = vrot.slane %v390, 7
  %v493 = vrot.slane %v459, 7
  %v494 = vrot.slane %v461, 7
  %v527 = vadd.f32 %v146, %v388
  %v528 = vadd.f32 %v148, %v390
  %v529 = vadd.f32 %v219, %v459
  %v530 = vadd.f32 %v221, %v461
  %v531 = vadd.f32 %v150, %v467
  %v532 = vadd.f32 %v152, %v468
  %v533 = vadd.f32 %v223, %v469
  %v534 = vadd.f32 %v225, %v470
  %v535 = vadd.f32 %v156, %v471
  %v536 = vadd.f32 %v158, %v472
  %v537 = vadd.f32 %v229, %v473
  %v538 = vadd.f32 %v231, %v474
  %v539 = vadd.f32 %v160, %v475
  %v540 = vadd.f32 %v162, %v476
  %v541 = vadd.f32 %v233, %v477
  %v542 = vadd.f32 %v235, %v478
  %v543 = vadd.f32 %v166, %v479
  %v544 = vadd.f32 %v168, %v480
  %v545 = vadd.f32 %v239, %v481
  %v546 = vadd.f32 %v241, %v482
  %v547 = vadd.f32 %v170, %v483
  %v548 = vadd.f32 %v172, %v484
  %v549 = vadd.f32 %v243, %v485
  %v550 = vadd.f32 %v245, %v486
  %v551 = vadd.f32 %v176, %v487
  %v552 = vadd.f32 %v178, %v488
  %v553 = vadd.f32 %v249, %v489
  %v554 = vadd.f32 %v251, %v490
  %v555 = vadd.f32 %v180, %v491
  %v556 = vadd.f32 %v182, %v492
  %v557 = vadd.f32 %v253, %v493
  %v558 = vadd.f32 %v255, %v494
  %v559 = vxor.u32 %v527, 2147483648
  %v560 = vxor.u32 %v531, 2147483648
  %v561 = vxor.u32 %v535, 2147483648
  %v562 = vxor.u32 %v539, 2147483648
  %v563 = vxor.u32 %v543, 2147483648
  %v564 = vxor.u32 %v547, 2147483648
  %v565 = vxor.u32 %v551, 2147483648
  %v566 = vxor.u32 %v555, 2147483648
  %v567 = vmul.f32 %v559, 1.442695
  %v568 = vpow.pop %v567
  %v569 = vmul.f32 %v560, 1.442695
  %v570 = vpow.pop %v569
  %v571 = vmul.f32 %v561, 1.442695
  %v572 = vpow.pop %v571
  %v573 = vmul.f32 %v562, 1.442695
  %v574 = vpow.pop %v573
  %v575 = vmul.f32 %v563, 1.442695
  %v576 = vpow.pop %v575
  %v577 = vmul.f32 %v564, 1.442695
  %v578 = vpow.pop %v577
  %v579 = vmul.f32 %v565, 1.442695
  %v580 = vpow.pop %v579
  %v581 = vmul.f32 %v566, 1.442695
  %v582 = vpow.pop %v581
  %v583 = vadd.f32 %v568, 1.0
  %v584 = vadd.f32 %v570, 1.0
  %v585 = vadd.f32 %v572, 1.0
  %v586 = vadd.f32 %v574, 1.0
  %v587 = vadd.f32 %v576, 1.0
  %v588 = vadd.f32 %v578, 1.0
  %v589 = vadd.f32 %v580, 1.0
  %v590 = vadd.f32 %v582, 1.0
  %v591 = vrcp.pop %v583
  %v592 = vmul.f32 1.0, %v591
  %v593 = vrcp.pop %v584
  %v594 = vmul.f32 1.0, %v593
  %v595 = vrcp.pop %v585
  %v596 = vmul.f32 1.0, %v595
  %v597 = vrcp.pop %v586
  %v598 = vmul.f32 1.0, %v597
  %v599 = vrcp.pop %v587
  %v600 = vmul.f32 1.0, %v599
  %v601 = vrcp.pop %v588
  %v602 = vmul.f32 1.0, %v601
  %v603 = vrcp.pop %v589
  %v604 = vmul.f32 1.0, %v603
  %v605 = vrcp.pop %v590
  %v606 = vmul.f32 1.0, %v605
  %v607 = vxor.u32 %v528, 2147483648
  %v608 = vxor.u32 %v532, 2147483648
  %v609 = vxor.u32 %v536, 2147483648
  %v610 = vxor.u32 %v540, 2147483648
  %v611 = vxor.u32 %v544, 2147483648
  %v612 = vxor.u32 %v548, 2147483648
  %v613 = vxor.u32 %v552, 2147483648
  %v614 = vxor.u32 %v556, 2147483648
  %v615 = vmul.f32 %v607, 1.442695
  %v616 = vpow.pop %v615
  %v617 = vmul.f32 %v608, 1.442695
  %v618 = vpow.pop %v617
  %v619 = vmul.f32 %v609, 1.442695
  %v620 = vpow.pop %v619
  %v621 = vmul.f32 %v610, 1.442695
  %v622 = vpow.pop %v621
  %v623 = vmul.f32 %v611, 1.442695
  %v624 = vpow.pop %v623
  %v625 = vmul.f32 %v612, 1.442695
  %v626 = vpow.pop %v625
  %v627 = vmul.f32 %v613, 1.442695
  %v628 = vpow.pop %v627
  %v629 = vmul.f32 %v614, 1.442695
  %v630 = vpow.pop %v629
  %v631 = vadd.f32 %v616, 1.0
  %v632 = vadd.f32 %v618, 1.0
  %v633 = vadd.f32 %v620, 1.0
  %v634 = vadd.f32 %v622, 1.0
  %v635 = vadd.f32 %v624, 1.0
  %v636 = vadd.f32 %v626, 1.0
  %v637 = vadd.f32 %v628, 1.0
  %v638 = vadd.f32 %v630, 1.0
  %v639 = vrcp.pop %v631
  %v640 = vmul.f32 1.0, %v639
  %v641 = vrcp.pop %v632
  %v642 = vmul.f32 1.0, %v641
  %v643 = vrcp.pop %v633
  %v644 = vmul.f32 1.0, %v643
  %v645 = vrcp.pop %v634
  %v646 = vmul.f32 1.0, %v645
  %v647 = vrcp.pop %v635
  %v648 = vmul.f32 1.0, %v647
  %v649 = vrcp.pop %v636
  %v650 = vmul.f32 1.0, %v649
  %v651 = vrcp.pop %v637
  %v652 = vmul.f32 1.0, %v651
  %v653 = vrcp.pop %v638
  %v654 = vmul.f32 1.0, %v653
  %v655 = vtanh.pop %v529
  %v656 = vtanh.pop %v533
  %v657 = vtanh.pop %v537
  %v658 = vtanh.pop %v541
  %v659 = vtanh.pop %v545
  %v660 = vtanh.pop %v549
  %v661 = vtanh.pop %v553
  %v662 = vtanh.pop %v557
  %v663 = vxor.u32 %v530, 2147483648
  %v664 = vxor.u32 %v534, 2147483648
  %v665 = vxor.u32 %v538, 2147483648
  %v666 = vxor.u32 %v542, 2147483648
  %v667 = vxor.u32 %v546, 2147483648
  %v668 = vxor.u32 %v550, 2147483648
  %v669 = vxor.u32 %v554, 2147483648
  %v670 = vxor.u32 %v558, 2147483648
  %v671 = vmul.f32 %v663, 1.442695
  %v672 = vpow.pop %v671
  %v673 = vmul.f32 %v664, 1.442695
  %v674 = vpow.pop %v673
  %v675 = vmul.f32 %v665, 1.442695
  %v676 = vpow.pop %v675
  %v677 = vmul.f32 %v666, 1.442695
  %v678 = vpow.pop %v677
  %v679 = vmul.f32 %v667, 1.442695
  %v680 = vpow.pop %v679
  %v681 = vmul.f32 %v668, 1.442695
  %v682 = vpow.pop %v681
  %v683 = vmul.f32 %v669, 1.442695
  %v684 = vpow.pop %v683
  %v685 = vmul.f32 %v670, 1.442695
  %v686 = vpow.pop %v685
  %v687 = vadd.f32 %v672, 1.0
  %v688 = vadd.f32 %v674, 1.0
  %v689 = vadd.f32 %v676, 1.0
  %v690 = vadd.f32 %v678, 1.0
  %v691 = vadd.f32 %v680, 1.0
  %v692 = vadd.f32 %v682, 1.0
  %v693 = vadd.f32 %v684, 1.0
  %v694 = vadd.f32 %v686, 1.0
  %v695 = vrcp.pop %v687
  %v696 = vmul.f32 1.0, %v695
  %v697 = vrcp.pop %v688
  %v698 = vmul.f32 1.0, %v697
  %v699 = vrcp.pop %v689
  %v700 = vmul.f32 1.0, %v699
  %v701 = vrcp.pop %v690
  %v702 = vmul.f32 1.0, %v701
  %v703 = vrcp.pop %v691
  %v704 = vmul.f32 1.0, %v703
  %v705 = vrcp.pop %v692
  %v706 = vmul.f32 1.0, %v705
  %v707 = vrcp.pop %v693
  %v708 = vmul.f32 1.0, %v707
  %v709 = vrcp.pop %v694
  %v710 = vmul.f32 1.0, %v709
  %v711 = vmul.f32 %v640, 0.0
  %v712 = vmul.f32 %v642, 0.0
  %v713 = vmul.f32 %v644, 0.0
  %v714 = vmul.f32 %v646, 0.0
  %v715 = vmul.f32 %v648, 0.0
  %v716 = vmul.f32 %v650, 0.0
  %v717 = vmul.f32 %v652, 0.0
  %v718 = vmul.f32 %v654, 0.0
  %v719 = vmul.f32 %v592, %v655
  %v720 = vmul.f32 %v594, %v656
  %v721 = vmul.f32 %v596, %v657
  %v722 = vmul.f32 %v598, %v658
  %v723 = vmul.f32 %v600, %v659
  %v724 = vmul.f32 %v602, %v660
  %v725 = vmul.f32 %v604, %v661
  %v726 = vmul.f32 %v606, %v662
  %v727 = vadd.f32 %v711, %v719
  %v728 = vadd.f32 %v712, %v720
  %v729 = vadd.f32 %v713, %v721
  %v730 = vadd.f32 %v714, %v722
  %v731 = vadd.f32 %v715, %v723
  %v732 = vadd.f32 %v716, %v724
  %v733 = vadd.f32 %v717, %v725
  %v734 = vadd.f32 %v718, %v726
  %v735 = vtanh.pop %v727
  %v736 = vtanh.pop %v728
  %v737 = vtanh.pop %v729
  %v738 = vtanh.pop %v730
  %v739 = vtanh.pop %v731
  %v740 = vtanh.pop %v732
  %v741 = vtanh.pop %v733
  %v742 = vtanh.pop %v734
  %v743 = vmul.f32 %v696, %v735
  %v744 = vmul.f32 %v698, %v736
  %v745 = vmul.f32 %v700, %v737
  %v746 = vmul.f32 %v702, %v738
  %v747 = vmul.f32 %v704, %v739
  %v748 = vmul.f32 %v706, %v740
  %v749 = vmul.f32 %v708, %v741
  %v750 = vmul.f32 %v710, %v742
  %v759 = vrot.slane %v744, 7
  %vm760 = vcmask 1041409
  %v761 = vsel %vm760, %v759, %v743
  %v762 = vrot.slane %v745, 6
  %vm763 = vcmask 1042434
  %v764 = vsel %vm763, %v762, %v761
  %v765 = vrot.slane %v746, 5
  %vm766 = vcmask 1043459
  %v767 = vsel %vm766, %v765, %v764
  %v768 = vrot.slane %v747, 4
  %vm769 = vcmask 1044484
  %v770 = vsel %vm769, %v768, %v767
  %v771 = vrot.slane %v748, 3
  %vm772 = vcmask 1045509
  %v773 = vsel %vm772, %v771, %v770
  %v774 = vrot.slane %v749, 2
  %vm775 = vcmask 1046534
  %v776 = vsel %vm775, %v774, %v773
  %v777 = vrot.slane %v750, 1
  %vm778 = vcmask 1047559
  %v779 = vsel %vm778, %v777, %v776
  %781 = vmatprep.subr.mxu0 %v318
  %782 = vmatpush1.msra.mxu0 %v317
  %783 = vmatprep.subr.mxu0 %v314
  %784 = vmatpush1.msra.mxu0 %v313
  %785 = vmatprep.subr.mxu0 %v310
  %786 = vmatpush1.msra.mxu0 %v309
  %787 = vmatprep.subr.mxu0 %v306
  %788 = vmatpush1.msra.mxu0 %v305
  %789 = vmatprep.subr.mxu0 %v302
  %790 = vmatpush1.msra.mxu0 %v301
  %791 = vmatprep.subr.mxu0 %v298
  %792 = vmatpush1.msra.mxu0 %v297
  %793 = vmatprep.subr.mxu0 %v294
  %794 = vmatpush1.msra.mxu0 %v293
  %795 = vmatprep.subr.mxu0 %v290
  %796 = vmatpush1.msra.mxu0 %v289
  %797 = vmatprep.subr.mxu0 %v286
  %798 = vmatpush1.msra.mxu0 %v285
  %799 = vmatprep.subr.mxu0 %v282
  %800 = vmatpush1.msra.mxu0 %v281
  %801 = vmatprep.subr.mxu0 %v278
  %802 = vmatpush1.msra.mxu0 %v277
  %803 = vmatprep.subr.mxu0 %v274
  %804 = vmatpush1.msra.mxu0 %v273
  %805 = vmatprep.subr.mxu0 %v270
  %806 = vmatpush1.msra.mxu0 %v269
  %807 = vmatprep.subr.mxu0 %v266
  %808 = vmatpush1.msra.mxu0 %v265
  %809 = vmatprep.subr.mxu0 %v262
  %810 = vmatpush1.msra.mxu0 %v261
  %811 = vmatprep.subr.mxu0 %v258
  %812 = vmatpush1.msra.mxu0 %v257
  %813 = vmatprep.subr.mxu0 0.0
  %814 = vmatpush2.msra.mxu0 0.0
  %815 = vmatprep.subr.mxu0 0.0
  %816 = vmatpush2.msra.mxu0 0.0
  %817 = vmatprep.subr.mxu0 0.0
  %818 = vmatpush2.msra.mxu0 0.0
  %819 = vmatprep.subr.mxu0 0.0
  %820 = vmatpush2.msra.mxu0 0.0
  %821 = vmatprep.subr.mxu0 0.0
  %822 = vmatpush2.msra.mxu0 0.0
  %823 = vmatprep.subr.mxu0 0.0
  %824 = vmatpush2.msra.mxu0 0.0
  %825 = vmatprep.subr.mxu0 0.0
  %826 = vmatpush2.msra.mxu0 0.0
  %827 = vmatprep.subr.mxu0 0.0
  %828 = vmatpush2.msra.mxu0 0.0
  %829 = vmatprep.subr.mxu0 0.0
  %830 = vmatpush2.msra.mxu0 0.0
  %831 = vmatprep.subr.mxu0 0.0
  %832 = vmatpush2.msra.mxu0 0.0
  %833 = vmatprep.subr.mxu0 0.0
  %834 = vmatpush2.msra.mxu0 0.0
  %835 = vmatprep.subr.mxu0 0.0
  %836 = vmatpush2.msra.mxu0 0.0
  %837 = vmatprep.subr.mxu0 0.0
  %838 = vmatpush2.msra.mxu0 0.0
  %839 = vmatprep.subr.mxu0 0.0
  %840 = vmatpush2.msra.mxu0 0.0
  %841 = vmatprep.subr.mxu0 0.0
  %842 = vmatpush2.msra.mxu0 0.0
  %843 = vmatprep.subr.mxu0 0.0
  %844 = vmatpush2.msra.mxu0 0.0
  %845 = vmatprep.mubr.f32.mxu0 0.0
  %846 = vmatmul.mubr.f32.gmra.mxu0 %v779
  %v847 = vpop.f32.mrf.mxu0
  %v848 = vadd.f32 0.0, %v847
  %v849 = vpop.f32.mrf.mxu0
  %v850 = vadd.f32 0.0, %v849
  %851 = vdwg.mxu0
  %852 = vmatprep.subr.mxu0 %v320
  %853 = vmatpush1.msra.mxu0 %v319
  %854 = vmatprep.subr.mxu0 %v316
  %855 = vmatpush1.msra.mxu0 %v315
  %856 = vmatprep.subr.mxu0 %v312
  %857 = vmatpush1.msra.mxu0 %v311
  %858 = vmatprep.subr.mxu0 %v308
  %859 = vmatpush1.msra.mxu0 %v307
  %860 = vmatprep.subr.mxu0 %v304
  %861 = vmatpush1.msra.mxu0 %v303
  %862 = vmatprep.subr.mxu0 %v300
  %863 = vmatpush1.msra.mxu0 %v299
  %864 = vmatprep.subr.mxu0 %v296
  %865 = vmatpush1.msra.mxu0 %v295
  %866 = vmatprep.subr.mxu0 %v292
  %867 = vmatpush1.msra.mxu0 %v291
  %868 = vmatprep.subr.mxu0 %v288
  %869 = vmatpush1.msra.mxu0 %v287
  %870 = vmatprep.subr.mxu0 %v284
  %871 = vmatpush1.msra.mxu0 %v283
  %872 = vmatprep.subr.mxu0 %v280
  %873 = vmatpush1.msra.mxu0 %v279
  %874 = vmatprep.subr.mxu0 %v276
  %875 = vmatpush1.msra.mxu0 %v275
  %876 = vmatprep.subr.mxu0 %v272
  %877 = vmatpush1.msra.mxu0 %v271
  %878 = vmatprep.subr.mxu0 %v268
  %879 = vmatpush1.msra.mxu0 %v267
  %880 = vmatprep.subr.mxu0 %v264
  %881 = vmatpush1.msra.mxu0 %v263
  %882 = vmatprep.subr.mxu0 %v260
  %883 = vmatpush1.msra.mxu0 %v259
  %884 = vmatprep.subr.mxu0 0.0
  %885 = vmatpush2.msra.mxu0 0.0
  %886 = vmatprep.subr.mxu0 0.0
  %887 = vmatpush2.msra.mxu0 0.0
  %888 = vmatprep.subr.mxu0 0.0
  %889 = vmatpush2.msra.mxu0 0.0
  %890 = vmatprep.subr.mxu0 0.0
  %891 = vmatpush2.msra.mxu0 0.0
  %892 = vmatprep.subr.mxu0 0.0
  %893 = vmatpush2.msra.mxu0 0.0
  %894 = vmatprep.subr.mxu0 0.0
  %895 = vmatpush2.msra.mxu0 0.0
  %896 = vmatprep.subr.mxu0 0.0
  %897 = vmatpush2.msra.mxu0 0.0
  %898 = vmatprep.subr.mxu0 0.0
  %899 = vmatpush2.msra.mxu0 0.0
  %900 = vmatprep.subr.mxu0 0.0
  %901 = vmatpush2.msra.mxu0 0.0
  %902 = vmatprep.subr.mxu0 0.0
  %903 = vmatpush2.msra.mxu0 0.0
  %904 = vmatprep.subr.mxu0 0.0
  %905 = vmatpush2.msra.mxu0 0.0
  %906 = vmatprep.subr.mxu0 0.0
  %907 = vmatpush2.msra.mxu0 0.0
  %908 = vmatprep.subr.mxu0 0.0
  %909 = vmatpush2.msra.mxu0 0.0
  %910 = vmatprep.subr.mxu0 0.0
  %911 = vmatpush2.msra.mxu0 0.0
  %912 = vmatprep.subr.mxu0 0.0
  %913 = vmatpush2.msra.mxu0 0.0
  %914 = vmatprep.subr.mxu0 0.0
  %915 = vmatpush2.msra.mxu0 0.0
  %916 = vmatprep.mubr.f32.mxu0 0.0
  %917 = vmatmul.mubr.f32.gmra.mxu0 %v779
  %v918 = vpop.f32.mrf.mxu0
  %v919 = vadd.f32 0.0, %v918
  %v920 = vpop.f32.mrf.mxu0
  %v921 = vadd.f32 0.0, %v920
  %922 = vdwg.mxu0
  %v927 = vrot.slane %v848, 7
  %v928 = vrot.slane %v850, 7
  %v929 = vrot.slane %v919, 7
  %v930 = vrot.slane %v921, 7
  %v931 = vrot.slane %v848, 1
  %v932 = vrot.slane %v850, 1
  %v933 = vrot.slane %v919, 1
  %v934 = vrot.slane %v921, 1
  %v935 = vrot.slane %v848, 2
  %v936 = vrot.slane %v850, 2
  %v937 = vrot.slane %v919, 2
  %v938 = vrot.slane %v921, 2
  %v939 = vrot.slane %v848, 3
  %v940 = vrot.slane %v850, 3
  %v941 = vrot.slane %v919, 3
  %v942 = vrot.slane %v921, 3
  %v943 = vrot.slane %v848, 4
  %v944 = vrot.slane %v850, 4
  %v945 = vrot.slane %v919, 4
  %v946 = vrot.slane %v921, 4
  %v947 = vrot.slane %v848, 5
  %v948 = vrot.slane %v850, 5
  %v949 = vrot.slane %v919, 5
  %v950 = vrot.slane %v921, 5
  %v951 = vrot.slane %v848, 6
  %v952 = vrot.slane %v850, 6
  %v953 = vrot.slane %v919, 6
  %v954 = vrot.slane %v921, 6
  %v987 = vadd.f32 %v146, %v927
  %v988 = vadd.f32 %v148, %v928
  %v989 = vadd.f32 %v219, %v929
  %v990 = vadd.f32 %v221, %v930
  %v991 = vadd.f32 %v150, %v848
  %v992 = vadd.f32 %v152, %v850
  %v993 = vadd.f32 %v223, %v919
  %v994 = vadd.f32 %v225, %v921
  %v995 = vadd.f32 %v156, %v931
  %v996 = vadd.f32 %v158, %v932
  %v997 = vadd.f32 %v229, %v933
  %v998 = vadd.f32 %v231, %v934
  %v999 = vadd.f32 %v160, %v935
  %v1000 = vadd.f32 %v162, %v936
  %v1001 = vadd.f32 %v233, %v937
  %v1002 = vadd.f32 %v235, %v938
  %v1003 = vadd.f32 %v166, %v939
  %v1004 = vadd.f32 %v168, %v940
  %v1005 = vadd.f32 %v239, %v941
  %v1006 = vadd.f32 %v241, %v942
  %v1007 = vadd.f32 %v170, %v943
  %v1008 = vadd.f32 %v172, %v944
  %v1009 = vadd.f32 %v243, %v945
  %v1010 = vadd.f32 %v245, %v946
  %v1011 = vadd.f32 %v176, %v947
  %v1012 = vadd.f32 %v178, %v948
  %v1013 = vadd.f32 %v249, %v949
  %v1014 = vadd.f32 %v251, %v950
  %v1015 = vadd.f32 %v180, %v951
  %v1016 = vadd.f32 %v182, %v952
  %v1017 = vadd.f32 %v253, %v953
  %v1018 = vadd.f32 %v255, %v954
  %v1019 = vxor.u32 %v987, 2147483648
  %v1020 = vxor.u32 %v991, 2147483648
  %v1021 = vxor.u32 %v995, 2147483648
  %v1022 = vxor.u32 %v999, 2147483648
  %v1023 = vxor.u32 %v1003, 2147483648
  %v1024 = vxor.u32 %v1007, 2147483648
  %v1025 = vxor.u32 %v1011, 2147483648
  %v1026 = vxor.u32 %v1015, 2147483648
  %v1027 = vmul.f32 %v1019, 1.442695
  %v1028 = vpow.pop %v1027
  %v1029 = vmul.f32 %v1020, 1.442695
  %v1030 = vpow.pop %v1029
  %v1031 = vmul.f32 %v1021, 1.442695
  %v1032 = vpow.pop %v1031
  %v1033 = vmul.f32 %v1022, 1.442695
  %v1034 = vpow.pop %v1033
  %v1035 = vmul.f32 %v1023, 1.442695
  %v1036 = vpow.pop %v1035
  %v1037 = vmul.f32 %v1024, 1.442695
  %v1038 = vpow.pop %v1037
  %v1039 = vmul.f32 %v1025, 1.442695
  %v1040 = vpow.pop %v1039
  %v1041 = vmul.f32 %v1026, 1.442695
  %v1042 = vpow.pop %v1041
  %v1043 = vadd.f32 %v1028, 1.0
  %v1044 = vadd.f32 %v1030, 1.0
  %v1045 = vadd.f32 %v1032, 1.0
  %v1046 = vadd.f32 %v1034, 1.0
  %v1047 = vadd.f32 %v1036, 1.0
  %v1048 = vadd.f32 %v1038, 1.0
  %v1049 = vadd.f32 %v1040, 1.0
  %v1050 = vadd.f32 %v1042, 1.0
  %v1051 = vrcp.pop %v1043
  %v1052 = vmul.f32 1.0, %v1051
  %v1053 = vrcp.pop %v1044
  %v1054 = vmul.f32 1.0, %v1053
  %v1055 = vrcp.pop %v1045
  %v1056 = vmul.f32 1.0, %v1055
  %v1057 = vrcp.pop %v1046
  %v1058 = vmul.f32 1.0, %v1057
  %v1059 = vrcp.pop %v1047
  %v1060 = vmul.f32 1.0, %v1059
  %v1061 = vrcp.pop %v1048
  %v1062 = vmul.f32 1.0, %v1061
  %v1063 = vrcp.pop %v1049
  %v1064 = vmul.f32 1.0, %v1063
  %v1065 = vrcp.pop %v1050
  %v1066 = vmul.f32 1.0, %v1065
  %v1067 = vxor.u32 %v988, 2147483648
  %v1068 = vxor.u32 %v992, 2147483648
  %v1069 = vxor.u32 %v996, 2147483648
  %v1070 = vxor.u32 %v1000, 2147483648
  %v1071 = vxor.u32 %v1004, 2147483648
  %v1072 = vxor.u32 %v1008, 2147483648
  %v1073 = vxor.u32 %v1012, 2147483648
  %v1074 = vxor.u32 %v1016, 2147483648
  %v1075 = vmul.f32 %v1067, 1.442695
  %v1076 = vpow.pop %v1075
  %v1077 = vmul.f32 %v1068, 1.442695
  %v1078 = vpow.pop %v1077
  %v1079 = vmul.f32 %v1069, 1.442695
  %v1080 = vpow.pop %v1079
  %v1081 = vmul.f32 %v1070, 1.442695
  %v1082 = vpow.pop %v1081
  %v1083 = vmul.f32 %v1071, 1.442695
  %v1084 = vpow.pop %v1083
  %v1085 = vmul.f32 %v1072, 1.442695
  %v1086 = vpow.pop %v1085
  %v1087 = vmul.f32 %v1073, 1.442695
  %v1088 = vpow.pop %v1087
  %v1089 = vmul.f32 %v1074, 1.442695
  %v1090 = vpow.pop %v1089
  %v1091 = vadd.f32 %v1076, 1.0
  %v1092 = vadd.f32 %v1078, 1.0
  %v1093 = vadd.f32 %v1080, 1.0
  %v1094 = vadd.f32 %v1082, 1.0
  %v1095 = vadd.f32 %v1084, 1.0
  %v1096 = vadd.f32 %v1086, 1.0
  %v1097 = vadd.f32 %v1088, 1.0
  %v1098 = vadd.f32 %v1090, 1.0
  %v1099 = vrcp.pop %v1091
  %v1100 = vmul.f32 1.0, %v1099
  %v1101 = vrcp.pop %v1092
  %v1102 = vmul.f32 1.0, %v1101
  %v1103 = vrcp.pop %v1093
  %v1104 = vmul.f32 1.0, %v1103
  %v1105 = vrcp.pop %v1094
  %v1106 = vmul.f32 1.0, %v1105
  %v1107 = vrcp.pop %v1095
  %v1108 = vmul.f32 1.0, %v1107
  %v1109 = vrcp.pop %v1096
  %v1110 = vmul.f32 1.0, %v1109
  %v1111 = vrcp.pop %v1097
  %v1112 = vmul.f32 1.0, %v1111
  %v1113 = vrcp.pop %v1098
  %v1114 = vmul.f32 1.0, %v1113
  %v1115 = vtanh.pop %v989
  %v1116 = vtanh.pop %v993
  %v1117 = vtanh.pop %v997
  %v1118 = vtanh.pop %v1001
  %v1119 = vtanh.pop %v1005
  %v1120 = vtanh.pop %v1009
  %v1121 = vtanh.pop %v1013
  %v1122 = vtanh.pop %v1017
  %v1123 = vxor.u32 %v990, 2147483648
  %v1124 = vxor.u32 %v994, 2147483648
  %v1125 = vxor.u32 %v998, 2147483648
  %v1126 = vxor.u32 %v1002, 2147483648
  %v1127 = vxor.u32 %v1006, 2147483648
  %v1128 = vxor.u32 %v1010, 2147483648
  %v1129 = vxor.u32 %v1014, 2147483648
  %v1130 = vxor.u32 %v1018, 2147483648
  %v1131 = vmul.f32 %v1123, 1.442695
  %v1132 = vpow.pop %v1131
  %v1133 = vmul.f32 %v1124, 1.442695
  %v1134 = vpow.pop %v1133
  %v1135 = vmul.f32 %v1125, 1.442695
  %v1136 = vpow.pop %v1135
  %v1137 = vmul.f32 %v1126, 1.442695
  %v1138 = vpow.pop %v1137
  %v1139 = vmul.f32 %v1127, 1.442695
  %v1140 = vpow.pop %v1139
  %v1141 = vmul.f32 %v1128, 1.442695
  %v1142 = vpow.pop %v1141
  %v1143 = vmul.f32 %v1129, 1.442695
  %v1144 = vpow.pop %v1143
  %v1145 = vmul.f32 %v1130, 1.442695
  %v1146 = vpow.pop %v1145
  %v1147 = vadd.f32 %v1132, 1.0
  %v1148 = vadd.f32 %v1134, 1.0
  %v1149 = vadd.f32 %v1136, 1.0
  %v1150 = vadd.f32 %v1138, 1.0
  %v1151 = vadd.f32 %v1140, 1.0
  %v1152 = vadd.f32 %v1142, 1.0
  %v1153 = vadd.f32 %v1144, 1.0
  %v1154 = vadd.f32 %v1146, 1.0
  %v1155 = vrcp.pop %v1147
  %v1156 = vmul.f32 1.0, %v1155
  %v1157 = vrcp.pop %v1148
  %v1158 = vmul.f32 1.0, %v1157
  %v1159 = vrcp.pop %v1149
  %v1160 = vmul.f32 1.0, %v1159
  %v1161 = vrcp.pop %v1150
  %v1162 = vmul.f32 1.0, %v1161
  %v1163 = vrcp.pop %v1151
  %v1164 = vmul.f32 1.0, %v1163
  %v1165 = vrcp.pop %v1152
  %v1166 = vmul.f32 1.0, %v1165
  %v1167 = vrcp.pop %v1153
  %v1168 = vmul.f32 1.0, %v1167
  %v1169 = vrcp.pop %v1154
  %v1170 = vmul.f32 1.0, %v1169
  %v1179 = vrot.slane %v727, 7
  %v1180 = vrot.slane %v728, 7
  %v1181 = vrot.slane %v729, 7
  %v1182 = vrot.slane %v730, 7
  %v1183 = vrot.slane %v731, 7
  %v1184 = vrot.slane %v732, 7
  %v1185 = vrot.slane %v733, 7
  %v1186 = vrot.slane %v734, 7
  %v1195 = vmul.f32 %v1100, %v1179
  %v1196 = vmul.f32 %v1102, %v1180
  %v1197 = vmul.f32 %v1104, %v1181
  %v1198 = vmul.f32 %v1106, %v1182
  %v1199 = vmul.f32 %v1108, %v1183
  %v1200 = vmul.f32 %v1110, %v1184
  %v1201 = vmul.f32 %v1112, %v1185
  %v1202 = vmul.f32 %v1114, %v1186
  %v1203 = vmul.f32 %v1052, %v1115
  %v1204 = vmul.f32 %v1054, %v1116
  %v1205 = vmul.f32 %v1056, %v1117
  %v1206 = vmul.f32 %v1058, %v1118
  %v1207 = vmul.f32 %v1060, %v1119
  %v1208 = vmul.f32 %v1062, %v1120
  %v1209 = vmul.f32 %v1064, %v1121
  %v1210 = vmul.f32 %v1066, %v1122
  %v1211 = vadd.f32 %v1195, %v1203
  %v1212 = vadd.f32 %v1196, %v1204
  %v1213 = vadd.f32 %v1197, %v1205
  %v1214 = vadd.f32 %v1198, %v1206
  %v1215 = vadd.f32 %v1199, %v1207
  %v1216 = vadd.f32 %v1200, %v1208
  %v1217 = vadd.f32 %v1201, %v1209
  %v1218 = vadd.f32 %v1202, %v1210
  %v1219 = vtanh.pop %v1211
  %v1220 = vtanh.pop %v1212
  %v1221 = vtanh.pop %v1213
  %v1222 = vtanh.pop %v1214
  %v1223 = vtanh.pop %v1215
  %v1224 = vtanh.pop %v1216
  %v1225 = vtanh.pop %v1217
  %v1226 = vtanh.pop %v1218
  %v1227 = vmul.f32 %v1156, %v1219
  %v1228 = vmul.f32 %v1158, %v1220
  %v1229 = vmul.f32 %v1160, %v1221
  %v1230 = vmul.f32 %v1162, %v1222
  %v1231 = vmul.f32 %v1164, %v1223
  %v1232 = vmul.f32 %v1166, %v1224
  %v1233 = vmul.f32 %v1168, %v1225
  %v1234 = vmul.f32 %v1170, %v1226
  %v1243 = vrot.slane %v1227, 1
  %v1244 = vsel %vm760, %v1228, %v1243
  %v1245 = vrot.slane %v1229, 7
  %v1246 = vsel %vm763, %v1245, %v1244
  %v1247 = vrot.slane %v1230, 6
  %v1248 = vsel %vm766, %v1247, %v1246
  %v1249 = vrot.slane %v1231, 5
  %v1250 = vsel %vm769, %v1249, %v1248
  %v1251 = vrot.slane %v1232, 4
  %v1252 = vsel %vm772, %v1251, %v1250
  %v1253 = vrot.slane %v1233, 3
  %v1254 = vsel %vm775, %v1253, %v1252
  %v1255 = vrot.slane %v1234, 2
  %v1256 = vsel %vm778, %v1255, %v1254
  %1258 = vmatprep.subr.mxu0 %v318
  %1259 = vmatpush1.msra.mxu0 %v317
  %1260 = vmatprep.subr.mxu0 %v314
  %1261 = vmatpush1.msra.mxu0 %v313
  %1262 = vmatprep.subr.mxu0 %v310
  %1263 = vmatpush1.msra.mxu0 %v309
  %1264 = vmatprep.subr.mxu0 %v306
  %1265 = vmatpush1.msra.mxu0 %v305
  %1266 = vmatprep.subr.mxu0 %v302
  %1267 = vmatpush1.msra.mxu0 %v301
  %1268 = vmatprep.subr.mxu0 %v298
  %1269 = vmatpush1.msra.mxu0 %v297
  %1270 = vmatprep.subr.mxu0 %v294
  %1271 = vmatpush1.msra.mxu0 %v293
  %1272 = vmatprep.subr.mxu0 %v290
  %1273 = vmatpush1.msra.mxu0 %v289
  %1274 = vmatprep.subr.mxu0 %v286
  %1275 = vmatpush1.msra.mxu0 %v285
  %1276 = vmatprep.subr.mxu0 %v282
  %1277 = vmatpush1.msra.mxu0 %v281
  %1278 = vmatprep.subr.mxu0 %v278
  %1279 = vmatpush1.msra.mxu0 %v277
  %1280 = vmatprep.subr.mxu0 %v274
  %1281 = vmatpush1.msra.mxu0 %v273
  %1282 = vmatprep.subr.mxu0 %v270
  %1283 = vmatpush1.msra.mxu0 %v269
  %1284 = vmatprep.subr.mxu0 %v266
  %1285 = vmatpush1.msra.mxu0 %v265
  %1286 = vmatprep.subr.mxu0 %v262
  %1287 = vmatpush1.msra.mxu0 %v261
  %1288 = vmatprep.subr.mxu0 %v258
  %1289 = vmatpush1.msra.mxu0 %v257
  %1290 = vmatprep.subr.mxu0 0.0
  %1291 = vmatpush2.msra.mxu0 0.0
  %1292 = vmatprep.subr.mxu0 0.0
  %1293 = vmatpush2.msra.mxu0 0.0
  %1294 = vmatprep.subr.mxu0 0.0
  %1295 = vmatpush2.msra.mxu0 0.0
  %1296 = vmatprep.subr.mxu0 0.0
  %1297 = vmatpush2.msra.mxu0 0.0
  %1298 = vmatprep.subr.mxu0 0.0
  %1299 = vmatpush2.msra.mxu0 0.0
  %1300 = vmatprep.subr.mxu0 0.0
  %1301 = vmatpush2.msra.mxu0 0.0
  %1302 = vmatprep.subr.mxu0 0.0
  %1303 = vmatpush2.msra.mxu0 0.0
  %1304 = vmatprep.subr.mxu0 0.0
  %1305 = vmatpush2.msra.mxu0 0.0
  %1306 = vmatprep.subr.mxu0 0.0
  %1307 = vmatpush2.msra.mxu0 0.0
  %1308 = vmatprep.subr.mxu0 0.0
  %1309 = vmatpush2.msra.mxu0 0.0
  %1310 = vmatprep.subr.mxu0 0.0
  %1311 = vmatpush2.msra.mxu0 0.0
  %1312 = vmatprep.subr.mxu0 0.0
  %1313 = vmatpush2.msra.mxu0 0.0
  %1314 = vmatprep.subr.mxu0 0.0
  %1315 = vmatpush2.msra.mxu0 0.0
  %1316 = vmatprep.subr.mxu0 0.0
  %1317 = vmatpush2.msra.mxu0 0.0
  %1318 = vmatprep.subr.mxu0 0.0
  %1319 = vmatpush2.msra.mxu0 0.0
  %1320 = vmatprep.subr.mxu0 0.0
  %1321 = vmatpush2.msra.mxu0 0.0
  %1322 = vmatprep.mubr.f32.mxu0 0.0
  %1323 = vmatmul.mubr.f32.gmra.mxu0 %v1256
  %v1324 = vpop.f32.mrf.mxu0
  %v1325 = vadd.f32 0.0, %v1324
  %v1326 = vpop.f32.mrf.mxu0
  %v1327 = vadd.f32 0.0, %v1326
  %1328 = vdwg.mxu0
  %1329 = vmatprep.subr.mxu0 %v320
  %1330 = vmatpush1.msra.mxu0 %v319
  %1331 = vmatprep.subr.mxu0 %v316
  %1332 = vmatpush1.msra.mxu0 %v315
  %1333 = vmatprep.subr.mxu0 %v312
  %1334 = vmatpush1.msra.mxu0 %v311
  %1335 = vmatprep.subr.mxu0 %v308
  %1336 = vmatpush1.msra.mxu0 %v307
  %1337 = vmatprep.subr.mxu0 %v304
  %1338 = vmatpush1.msra.mxu0 %v303
  %1339 = vmatprep.subr.mxu0 %v300
  %1340 = vmatpush1.msra.mxu0 %v299
  %1341 = vmatprep.subr.mxu0 %v296
  %1342 = vmatpush1.msra.mxu0 %v295
  %1343 = vmatprep.subr.mxu0 %v292
  %1344 = vmatpush1.msra.mxu0 %v291
  %1345 = vmatprep.subr.mxu0 %v288
  %1346 = vmatpush1.msra.mxu0 %v287
  %1347 = vmatprep.subr.mxu0 %v284
  %1348 = vmatpush1.msra.mxu0 %v283
  %1349 = vmatprep.subr.mxu0 %v280
  %1350 = vmatpush1.msra.mxu0 %v279
  %1351 = vmatprep.subr.mxu0 %v276
  %1352 = vmatpush1.msra.mxu0 %v275
  %1353 = vmatprep.subr.mxu0 %v272
  %1354 = vmatpush1.msra.mxu0 %v271
  %1355 = vmatprep.subr.mxu0 %v268
  %1356 = vmatpush1.msra.mxu0 %v267
  %1357 = vmatprep.subr.mxu0 %v264
  %1358 = vmatpush1.msra.mxu0 %v263
  %1359 = vmatprep.subr.mxu0 %v260
  %1360 = vmatpush1.msra.mxu0 %v259
  %1361 = vmatprep.subr.mxu0 0.0
  %1362 = vmatpush2.msra.mxu0 0.0
  %1363 = vmatprep.subr.mxu0 0.0
  %1364 = vmatpush2.msra.mxu0 0.0
  %1365 = vmatprep.subr.mxu0 0.0
  %1366 = vmatpush2.msra.mxu0 0.0
  %1367 = vmatprep.subr.mxu0 0.0
  %1368 = vmatpush2.msra.mxu0 0.0
  %1369 = vmatprep.subr.mxu0 0.0
  %1370 = vmatpush2.msra.mxu0 0.0
  %1371 = vmatprep.subr.mxu0 0.0
  %1372 = vmatpush2.msra.mxu0 0.0
  %1373 = vmatprep.subr.mxu0 0.0
  %1374 = vmatpush2.msra.mxu0 0.0
  %1375 = vmatprep.subr.mxu0 0.0
  %1376 = vmatpush2.msra.mxu0 0.0
  %1377 = vmatprep.subr.mxu0 0.0
  %1378 = vmatpush2.msra.mxu0 0.0
  %1379 = vmatprep.subr.mxu0 0.0
  %1380 = vmatpush2.msra.mxu0 0.0
  %1381 = vmatprep.subr.mxu0 0.0
  %1382 = vmatpush2.msra.mxu0 0.0
  %1383 = vmatprep.subr.mxu0 0.0
  %1384 = vmatpush2.msra.mxu0 0.0
  %1385 = vmatprep.subr.mxu0 0.0
  %1386 = vmatpush2.msra.mxu0 0.0
  %1387 = vmatprep.subr.mxu0 0.0
  %1388 = vmatpush2.msra.mxu0 0.0
  %1389 = vmatprep.subr.mxu0 0.0
  %1390 = vmatpush2.msra.mxu0 0.0
  %1391 = vmatprep.subr.mxu0 0.0
  %1392 = vmatpush2.msra.mxu0 0.0
  %1393 = vmatprep.mubr.f32.mxu0 0.0
  %1394 = vmatmul.mubr.f32.gmra.mxu0 %v1256
  %v1395 = vpop.f32.mrf.mxu0
  %v1396 = vadd.f32 0.0, %v1395
  %v1397 = vpop.f32.mrf.mxu0
  %v1398 = vadd.f32 0.0, %v1397
  %1399 = vdwg.mxu0
  %v1404 = vrot.slane %v1325, 6
  %v1405 = vrot.slane %v1327, 6
  %v1406 = vrot.slane %v1396, 6
  %v1407 = vrot.slane %v1398, 6
  %v1408 = vrot.slane %v1325, 7
  %v1409 = vrot.slane %v1327, 7
  %v1410 = vrot.slane %v1396, 7
  %v1411 = vrot.slane %v1398, 7
  %v1412 = vrot.slane %v1325, 1
  %v1413 = vrot.slane %v1327, 1
  %v1414 = vrot.slane %v1396, 1
  %v1415 = vrot.slane %v1398, 1
  %v1416 = vrot.slane %v1325, 2
  %v1417 = vrot.slane %v1327, 2
  %v1418 = vrot.slane %v1396, 2
  %v1419 = vrot.slane %v1398, 2
  %v1420 = vrot.slane %v1325, 3
  %v1421 = vrot.slane %v1327, 3
  %v1422 = vrot.slane %v1396, 3
  %v1423 = vrot.slane %v1398, 3
  %v1424 = vrot.slane %v1325, 4
  %v1425 = vrot.slane %v1327, 4
  %v1426 = vrot.slane %v1396, 4
  %v1427 = vrot.slane %v1398, 4
  %v1428 = vrot.slane %v1325, 5
  %v1429 = vrot.slane %v1327, 5
  %v1430 = vrot.slane %v1396, 5
  %v1431 = vrot.slane %v1398, 5
  %v1464 = vadd.f32 %v146, %v1404
  %v1465 = vadd.f32 %v148, %v1405
  %v1466 = vadd.f32 %v219, %v1406
  %v1467 = vadd.f32 %v221, %v1407
  %v1468 = vadd.f32 %v150, %v1408
  %v1469 = vadd.f32 %v152, %v1409
  %v1470 = vadd.f32 %v223, %v1410
  %v1471 = vadd.f32 %v225, %v1411
  %v1472 = vadd.f32 %v156, %v1325
  %v1473 = vadd.f32 %v158, %v1327
  %v1474 = vadd.f32 %v229, %v1396
  %v1475 = vadd.f32 %v231, %v1398
  %v1476 = vadd.f32 %v160, %v1412
  %v1477 = vadd.f32 %v162, %v1413
  %v1478 = vadd.f32 %v233, %v1414
  %v1479 = vadd.f32 %v235, %v1415
  %v1480 = vadd.f32 %v166, %v1416
  %v1481 = vadd.f32 %v168, %v1417
  %v1482 = vadd.f32 %v239, %v1418
  %v1483 = vadd.f32 %v241, %v1419
  %v1484 = vadd.f32 %v170, %v1420
  %v1485 = vadd.f32 %v172, %v1421
  %v1486 = vadd.f32 %v243, %v1422
  %v1487 = vadd.f32 %v245, %v1423
  %v1488 = vadd.f32 %v176, %v1424
  %v1489 = vadd.f32 %v178, %v1425
  %v1490 = vadd.f32 %v249, %v1426
  %v1491 = vadd.f32 %v251, %v1427
  %v1492 = vadd.f32 %v180, %v1428
  %v1493 = vadd.f32 %v182, %v1429
  %v1494 = vadd.f32 %v253, %v1430
  %v1495 = vadd.f32 %v255, %v1431
  %v1496 = vxor.u32 %v1464, 2147483648
  %v1497 = vxor.u32 %v1468, 2147483648
  %v1498 = vxor.u32 %v1472, 2147483648
  %v1499 = vxor.u32 %v1476, 2147483648
  %v1500 = vxor.u32 %v1480, 2147483648
  %v1501 = vxor.u32 %v1484, 2147483648
  %v1502 = vxor.u32 %v1488, 2147483648
  %v1503 = vxor.u32 %v1492, 2147483648
  %v1504 = vmul.f32 %v1496, 1.442695
  %v1505 = vpow.pop %v1504
  %v1506 = vmul.f32 %v1497, 1.442695
  %v1507 = vpow.pop %v1506
  %v1508 = vmul.f32 %v1498, 1.442695
  %v1509 = vpow.pop %v1508
  %v1510 = vmul.f32 %v1499, 1.442695
  %v1511 = vpow.pop %v1510
  %v1512 = vmul.f32 %v1500, 1.442695
  %v1513 = vpow.pop %v1512
  %v1514 = vmul.f32 %v1501, 1.442695
  %v1515 = vpow.pop %v1514
  %v1516 = vmul.f32 %v1502, 1.442695
  %v1517 = vpow.pop %v1516
  %v1518 = vmul.f32 %v1503, 1.442695
  %v1519 = vpow.pop %v1518
  %v1520 = vadd.f32 %v1505, 1.0
  %v1521 = vadd.f32 %v1507, 1.0
  %v1522 = vadd.f32 %v1509, 1.0
  %v1523 = vadd.f32 %v1511, 1.0
  %v1524 = vadd.f32 %v1513, 1.0
  %v1525 = vadd.f32 %v1515, 1.0
  %v1526 = vadd.f32 %v1517, 1.0
  %v1527 = vadd.f32 %v1519, 1.0
  %v1528 = vrcp.pop %v1520
  %v1529 = vmul.f32 1.0, %v1528
  %v1530 = vrcp.pop %v1521
  %v1531 = vmul.f32 1.0, %v1530
  %v1532 = vrcp.pop %v1522
  %v1533 = vmul.f32 1.0, %v1532
  %v1534 = vrcp.pop %v1523
  %v1535 = vmul.f32 1.0, %v1534
  %v1536 = vrcp.pop %v1524
  %v1537 = vmul.f32 1.0, %v1536
  %v1538 = vrcp.pop %v1525
  %v1539 = vmul.f32 1.0, %v1538
  %v1540 = vrcp.pop %v1526
  %v1541 = vmul.f32 1.0, %v1540
  %v1542 = vrcp.pop %v1527
  %v1543 = vmul.f32 1.0, %v1542
  %v1544 = vxor.u32 %v1465, 2147483648
  %v1545 = vxor.u32 %v1469, 2147483648
  %v1546 = vxor.u32 %v1473, 2147483648
  %v1547 = vxor.u32 %v1477, 2147483648
  %v1548 = vxor.u32 %v1481, 2147483648
  %v1549 = vxor.u32 %v1485, 2147483648
  %v1550 = vxor.u32 %v1489, 2147483648
  %v1551 = vxor.u32 %v1493, 2147483648
  %v1552 = vmul.f32 %v1544, 1.442695
  %v1553 = vpow.pop %v1552
  %v1554 = vmul.f32 %v1545, 1.442695
  %v1555 = vpow.pop %v1554
  %v1556 = vmul.f32 %v1546, 1.442695
  %v1557 = vpow.pop %v1556
  %v1558 = vmul.f32 %v1547, 1.442695
  %v1559 = vpow.pop %v1558
  %v1560 = vmul.f32 %v1548, 1.442695
  %v1561 = vpow.pop %v1560
  %v1562 = vmul.f32 %v1549, 1.442695
  %v1563 = vpow.pop %v1562
  %v1564 = vmul.f32 %v1550, 1.442695
  %v1565 = vpow.pop %v1564
  %v1566 = vmul.f32 %v1551, 1.442695
  %v1567 = vpow.pop %v1566
  %v1568 = vadd.f32 %v1553, 1.0
  %v1569 = vadd.f32 %v1555, 1.0
  %v1570 = vadd.f32 %v1557, 1.0
  %v1571 = vadd.f32 %v1559, 1.0
  %v1572 = vadd.f32 %v1561, 1.0
  %v1573 = vadd.f32 %v1563, 1.0
  %v1574 = vadd.f32 %v1565, 1.0
  %v1575 = vadd.f32 %v1567, 1.0
  %v1576 = vrcp.pop %v1568
  %v1577 = vmul.f32 1.0, %v1576
  %v1578 = vrcp.pop %v1569
  %v1579 = vmul.f32 1.0, %v1578
  %v1580 = vrcp.pop %v1570
  %v1581 = vmul.f32 1.0, %v1580
  %v1582 = vrcp.pop %v1571
  %v1583 = vmul.f32 1.0, %v1582
  %v1584 = vrcp.pop %v1572
  %v1585 = vmul.f32 1.0, %v1584
  %v1586 = vrcp.pop %v1573
  %v1587 = vmul.f32 1.0, %v1586
  %v1588 = vrcp.pop %v1574
  %v1589 = vmul.f32 1.0, %v1588
  %v1590 = vrcp.pop %v1575
  %v1591 = vmul.f32 1.0, %v1590
  %v1592 = vtanh.pop %v1466
  %v1593 = vtanh.pop %v1470
  %v1594 = vtanh.pop %v1474
  %v1595 = vtanh.pop %v1478
  %v1596 = vtanh.pop %v1482
  %v1597 = vtanh.pop %v1486
  %v1598 = vtanh.pop %v1490
  %v1599 = vtanh.pop %v1494
  %v1600 = vxor.u32 %v1467, 2147483648
  %v1601 = vxor.u32 %v1471, 2147483648
  %v1602 = vxor.u32 %v1475, 2147483648
  %v1603 = vxor.u32 %v1479, 2147483648
  %v1604 = vxor.u32 %v1483, 2147483648
  %v1605 = vxor.u32 %v1487, 2147483648
  %v1606 = vxor.u32 %v1491, 2147483648
  %v1607 = vxor.u32 %v1495, 2147483648
  %v1608 = vmul.f32 %v1600, 1.442695
  %v1609 = vpow.pop %v1608
  %v1610 = vmul.f32 %v1601, 1.442695
  %v1611 = vpow.pop %v1610
  %v1612 = vmul.f32 %v1602, 1.442695
  %v1613 = vpow.pop %v1612
  %v1614 = vmul.f32 %v1603, 1.442695
  %v1615 = vpow.pop %v1614
  %v1616 = vmul.f32 %v1604, 1.442695
  %v1617 = vpow.pop %v1616
  %v1618 = vmul.f32 %v1605, 1.442695
  %v1619 = vpow.pop %v1618
  %v1620 = vmul.f32 %v1606, 1.442695
  %v1621 = vpow.pop %v1620
  %v1622 = vmul.f32 %v1607, 1.442695
  %v1623 = vpow.pop %v1622
  %v1624 = vadd.f32 %v1609, 1.0
  %v1625 = vadd.f32 %v1611, 1.0
  %v1626 = vadd.f32 %v1613, 1.0
  %v1627 = vadd.f32 %v1615, 1.0
  %v1628 = vadd.f32 %v1617, 1.0
  %v1629 = vadd.f32 %v1619, 1.0
  %v1630 = vadd.f32 %v1621, 1.0
  %v1631 = vadd.f32 %v1623, 1.0
  %v1632 = vrcp.pop %v1624
  %v1633 = vmul.f32 1.0, %v1632
  %v1634 = vrcp.pop %v1625
  %v1635 = vmul.f32 1.0, %v1634
  %v1636 = vrcp.pop %v1626
  %v1637 = vmul.f32 1.0, %v1636
  %v1638 = vrcp.pop %v1627
  %v1639 = vmul.f32 1.0, %v1638
  %v1640 = vrcp.pop %v1628
  %v1641 = vmul.f32 1.0, %v1640
  %v1642 = vrcp.pop %v1629
  %v1643 = vmul.f32 1.0, %v1642
  %v1644 = vrcp.pop %v1630
  %v1645 = vmul.f32 1.0, %v1644
  %v1646 = vrcp.pop %v1631
  %v1647 = vmul.f32 1.0, %v1646
  %v1656 = vrot.slane %v1211, 7
  %v1657 = vrot.slane %v1212, 7
  %v1658 = vrot.slane %v1213, 7
  %v1659 = vrot.slane %v1214, 7
  %v1660 = vrot.slane %v1215, 7
  %v1661 = vrot.slane %v1216, 7
  %v1662 = vrot.slane %v1217, 7
  %v1663 = vrot.slane %v1218, 7
  %v1672 = vmul.f32 %v1577, %v1656
  %v1673 = vmul.f32 %v1579, %v1657
  %v1674 = vmul.f32 %v1581, %v1658
  %v1675 = vmul.f32 %v1583, %v1659
  %v1676 = vmul.f32 %v1585, %v1660
  %v1677 = vmul.f32 %v1587, %v1661
  %v1678 = vmul.f32 %v1589, %v1662
  %v1679 = vmul.f32 %v1591, %v1663
  %v1680 = vmul.f32 %v1529, %v1592
  %v1681 = vmul.f32 %v1531, %v1593
  %v1682 = vmul.f32 %v1533, %v1594
  %v1683 = vmul.f32 %v1535, %v1595
  %v1684 = vmul.f32 %v1537, %v1596
  %v1685 = vmul.f32 %v1539, %v1597
  %v1686 = vmul.f32 %v1541, %v1598
  %v1687 = vmul.f32 %v1543, %v1599
  %v1688 = vadd.f32 %v1672, %v1680
  %v1689 = vadd.f32 %v1673, %v1681
  %v1690 = vadd.f32 %v1674, %v1682
  %v1691 = vadd.f32 %v1675, %v1683
  %v1692 = vadd.f32 %v1676, %v1684
  %v1693 = vadd.f32 %v1677, %v1685
  %v1694 = vadd.f32 %v1678, %v1686
  %v1695 = vadd.f32 %v1679, %v1687
  %v1696 = vtanh.pop %v1688
  %v1697 = vtanh.pop %v1689
  %v1698 = vtanh.pop %v1690
  %v1699 = vtanh.pop %v1691
  %v1700 = vtanh.pop %v1692
  %v1701 = vtanh.pop %v1693
  %v1702 = vtanh.pop %v1694
  %v1703 = vtanh.pop %v1695
  %v1704 = vmul.f32 %v1633, %v1696
  %v1705 = vmul.f32 %v1635, %v1697
  %v1706 = vmul.f32 %v1637, %v1698
  %v1707 = vmul.f32 %v1639, %v1699
  %v1708 = vmul.f32 %v1641, %v1700
  %v1709 = vmul.f32 %v1643, %v1701
  %v1710 = vmul.f32 %v1645, %v1702
  %v1711 = vmul.f32 %v1647, %v1703
  %v1720 = vrot.slane %v1704, 2
  %v1721 = vrot.slane %v1705, 1
  %v1722 = vsel %vm760, %v1721, %v1720
  %v1723 = vsel %vm763, %v1706, %v1722
  %v1724 = vrot.slane %v1707, 7
  %v1725 = vsel %vm766, %v1724, %v1723
  %v1726 = vrot.slane %v1708, 6
  %v1727 = vsel %vm769, %v1726, %v1725
  %v1728 = vrot.slane %v1709, 5
  %v1729 = vsel %vm772, %v1728, %v1727
  %v1730 = vrot.slane %v1710, 4
  %v1731 = vsel %vm775, %v1730, %v1729
  %v1732 = vrot.slane %v1711, 3
  %v1733 = vsel %vm778, %v1732, %v1731
  %1735 = vmatprep.subr.mxu0 %v318
  %1736 = vmatpush1.msra.mxu0 %v317
  %1737 = vmatprep.subr.mxu0 %v314
  %1738 = vmatpush1.msra.mxu0 %v313
  %1739 = vmatprep.subr.mxu0 %v310
  %1740 = vmatpush1.msra.mxu0 %v309
  %1741 = vmatprep.subr.mxu0 %v306
  %1742 = vmatpush1.msra.mxu0 %v305
  %1743 = vmatprep.subr.mxu0 %v302
  %1744 = vmatpush1.msra.mxu0 %v301
  %1745 = vmatprep.subr.mxu0 %v298
  %1746 = vmatpush1.msra.mxu0 %v297
  %1747 = vmatprep.subr.mxu0 %v294
  %1748 = vmatpush1.msra.mxu0 %v293
  %1749 = vmatprep.subr.mxu0 %v290
  %1750 = vmatpush1.msra.mxu0 %v289
  %1751 = vmatprep.subr.mxu0 %v286
  %1752 = vmatpush1.msra.mxu0 %v285
  %1753 = vmatprep.subr.mxu0 %v282
  %1754 = vmatpush1.msra.mxu0 %v281
  %1755 = vmatprep.subr.mxu0 %v278
  %1756 = vmatpush1.msra.mxu0 %v277
  %1757 = vmatprep.subr.mxu0 %v274
  %1758 = vmatpush1.msra.mxu0 %v273
  %1759 = vmatprep.subr.mxu0 %v270
  %1760 = vmatpush1.msra.mxu0 %v269
  %1761 = vmatprep.subr.mxu0 %v266
  %1762 = vmatpush1.msra.mxu0 %v265
  %1763 = vmatprep.subr.mxu0 %v262
  %1764 = vmatpush1.msra.mxu0 %v261
  %1765 = vmatprep.subr.mxu0 %v258
  %1766 = vmatpush1.msra.mxu0 %v257
  %1767 = vmatprep.subr.mxu0 0.0
  %1768 = vmatpush2.msra.mxu0 0.0
  %1769 = vmatprep.subr.mxu0 0.0
  %1770 = vmatpush2.msra.mxu0 0.0
  %1771 = vmatprep.subr.mxu0 0.0
  %1772 = vmatpush2.msra.mxu0 0.0
  %1773 = vmatprep.subr.mxu0 0.0
  %1774 = vmatpush2.msra.mxu0 0.0
  %1775 = vmatprep.subr.mxu0 0.0
  %1776 = vmatpush2.msra.mxu0 0.0
  %1777 = vmatprep.subr.mxu0 0.0
  %1778 = vmatpush2.msra.mxu0 0.0
  %1779 = vmatprep.subr.mxu0 0.0
  %1780 = vmatpush2.msra.mxu0 0.0
  %1781 = vmatprep.subr.mxu0 0.0
  %1782 = vmatpush2.msra.mxu0 0.0
  %1783 = vmatprep.subr.mxu0 0.0
  %1784 = vmatpush2.msra.mxu0 0.0
  %1785 = vmatprep.subr.mxu0 0.0
  %1786 = vmatpush2.msra.mxu0 0.0
  %1787 = vmatprep.subr.mxu0 0.0
  %1788 = vmatpush2.msra.mxu0 0.0
  %1789 = vmatprep.subr.mxu0 0.0
  %1790 = vmatpush2.msra.mxu0 0.0
  %1791 = vmatprep.subr.mxu0 0.0
  %1792 = vmatpush2.msra.mxu0 0.0
  %1793 = vmatprep.subr.mxu0 0.0
  %1794 = vmatpush2.msra.mxu0 0.0
  %1795 = vmatprep.subr.mxu0 0.0
  %1796 = vmatpush2.msra.mxu0 0.0
  %1797 = vmatprep.subr.mxu0 0.0
  %1798 = vmatpush2.msra.mxu0 0.0
  %1799 = vmatprep.mubr.f32.mxu0 0.0
  %1800 = vmatmul.mubr.f32.gmra.mxu0 %v1733
  %v1801 = vpop.f32.mrf.mxu0
  %v1802 = vadd.f32 0.0, %v1801
  %v1803 = vpop.f32.mrf.mxu0
  %v1804 = vadd.f32 0.0, %v1803
  %1805 = vdwg.mxu0
  %1806 = vmatprep.subr.mxu0 %v320
  %1807 = vmatpush1.msra.mxu0 %v319
  %1808 = vmatprep.subr.mxu0 %v316
  %1809 = vmatpush1.msra.mxu0 %v315
  %1810 = vmatprep.subr.mxu0 %v312
  %1811 = vmatpush1.msra.mxu0 %v311
  %1812 = vmatprep.subr.mxu0 %v308
  %1813 = vmatpush1.msra.mxu0 %v307
  %1814 = vmatprep.subr.mxu0 %v304
  %1815 = vmatpush1.msra.mxu0 %v303
  %1816 = vmatprep.subr.mxu0 %v300
  %1817 = vmatpush1.msra.mxu0 %v299
  %1818 = vmatprep.subr.mxu0 %v296
  %1819 = vmatpush1.msra.mxu0 %v295
  %1820 = vmatprep.subr.mxu0 %v292
  %1821 = vmatpush1.msra.mxu0 %v291
  %1822 = vmatprep.subr.mxu0 %v288
  %1823 = vmatpush1.msra.mxu0 %v287
  %1824 = vmatprep.subr.mxu0 %v284
  %1825 = vmatpush1.msra.mxu0 %v283
  %1826 = vmatprep.subr.mxu0 %v280
  %1827 = vmatpush1.msra.mxu0 %v279
  %1828 = vmatprep.subr.mxu0 %v276
  %1829 = vmatpush1.msra.mxu0 %v275
  %1830 = vmatprep.subr.mxu0 %v272
  %1831 = vmatpush1.msra.mxu0 %v271
  %1832 = vmatprep.subr.mxu0 %v268
  %1833 = vmatpush1.msra.mxu0 %v267
  %1834 = vmatprep.subr.mxu0 %v264
  %1835 = vmatpush1.msra.mxu0 %v263
  %1836 = vmatprep.subr.mxu0 %v260
  %1837 = vmatpush1.msra.mxu0 %v259
  %1838 = vmatprep.subr.mxu0 0.0
  %1839 = vmatpush2.msra.mxu0 0.0
  %1840 = vmatprep.subr.mxu0 0.0
  %1841 = vmatpush2.msra.mxu0 0.0
  %1842 = vmatprep.subr.mxu0 0.0
  %1843 = vmatpush2.msra.mxu0 0.0
  %1844 = vmatprep.subr.mxu0 0.0
  %1845 = vmatpush2.msra.mxu0 0.0
  %1846 = vmatprep.subr.mxu0 0.0
  %1847 = vmatpush2.msra.mxu0 0.0
  %1848 = vmatprep.subr.mxu0 0.0
  %1849 = vmatpush2.msra.mxu0 0.0
  %1850 = vmatprep.subr.mxu0 0.0
  %1851 = vmatpush2.msra.mxu0 0.0
  %1852 = vmatprep.subr.mxu0 0.0
  %1853 = vmatpush2.msra.mxu0 0.0
  %1854 = vmatprep.subr.mxu0 0.0
  %1855 = vmatpush2.msra.mxu0 0.0
  %1856 = vmatprep.subr.mxu0 0.0
  %1857 = vmatpush2.msra.mxu0 0.0
  %1858 = vmatprep.subr.mxu0 0.0
  %1859 = vmatpush2.msra.mxu0 0.0
  %1860 = vmatprep.subr.mxu0 0.0
  %1861 = vmatpush2.msra.mxu0 0.0
  %1862 = vmatprep.subr.mxu0 0.0
  %1863 = vmatpush2.msra.mxu0 0.0
  %1864 = vmatprep.subr.mxu0 0.0
  %1865 = vmatpush2.msra.mxu0 0.0
  %1866 = vmatprep.subr.mxu0 0.0
  %1867 = vmatpush2.msra.mxu0 0.0
  %1868 = vmatprep.subr.mxu0 0.0
  %1869 = vmatpush2.msra.mxu0 0.0
  %1870 = vmatprep.mubr.f32.mxu0 0.0
  %1871 = vmatmul.mubr.f32.gmra.mxu0 %v1733
  %v1872 = vpop.f32.mrf.mxu0
  %v1873 = vadd.f32 0.0, %v1872
  %v1874 = vpop.f32.mrf.mxu0
  %v1875 = vadd.f32 0.0, %v1874
  %1876 = vdwg.mxu0
  %v1881 = vrot.slane %v1802, 5
  %v1882 = vrot.slane %v1804, 5
  %v1883 = vrot.slane %v1873, 5
  %v1884 = vrot.slane %v1875, 5
  %v1885 = vrot.slane %v1802, 6
  %v1886 = vrot.slane %v1804, 6
  %v1887 = vrot.slane %v1873, 6
  %v1888 = vrot.slane %v1875, 6
  %v1889 = vrot.slane %v1802, 7
  %v1890 = vrot.slane %v1804, 7
  %v1891 = vrot.slane %v1873, 7
  %v1892 = vrot.slane %v1875, 7
  %v1893 = vrot.slane %v1802, 1
  %v1894 = vrot.slane %v1804, 1
  %v1895 = vrot.slane %v1873, 1
  %v1896 = vrot.slane %v1875, 1
  %v1897 = vrot.slane %v1802, 2
  %v1898 = vrot.slane %v1804, 2
  %v1899 = vrot.slane %v1873, 2
  %v1900 = vrot.slane %v1875, 2
  %v1901 = vrot.slane %v1802, 3
  %v1902 = vrot.slane %v1804, 3
  %v1903 = vrot.slane %v1873, 3
  %v1904 = vrot.slane %v1875, 3
  %v1905 = vrot.slane %v1802, 4
  %v1906 = vrot.slane %v1804, 4
  %v1907 = vrot.slane %v1873, 4
  %v1908 = vrot.slane %v1875, 4
  %v1941 = vadd.f32 %v146, %v1881
  %v1942 = vadd.f32 %v148, %v1882
  %v1943 = vadd.f32 %v219, %v1883
  %v1944 = vadd.f32 %v221, %v1884
  %v1945 = vadd.f32 %v150, %v1885
  %v1946 = vadd.f32 %v152, %v1886
  %v1947 = vadd.f32 %v223, %v1887
  %v1948 = vadd.f32 %v225, %v1888
  %v1949 = vadd.f32 %v156, %v1889
  %v1950 = vadd.f32 %v158, %v1890
  %v1951 = vadd.f32 %v229, %v1891
  %v1952 = vadd.f32 %v231, %v1892
  %v1953 = vadd.f32 %v160, %v1802
  %v1954 = vadd.f32 %v162, %v1804
  %v1955 = vadd.f32 %v233, %v1873
  %v1956 = vadd.f32 %v235, %v1875
  %v1957 = vadd.f32 %v166, %v1893
  %v1958 = vadd.f32 %v168, %v1894
  %v1959 = vadd.f32 %v239, %v1895
  %v1960 = vadd.f32 %v241, %v1896
  %v1961 = vadd.f32 %v170, %v1897
  %v1962 = vadd.f32 %v172, %v1898
  %v1963 = vadd.f32 %v243, %v1899
  %v1964 = vadd.f32 %v245, %v1900
  %v1965 = vadd.f32 %v176, %v1901
  %v1966 = vadd.f32 %v178, %v1902
  %v1967 = vadd.f32 %v249, %v1903
  %v1968 = vadd.f32 %v251, %v1904
  %v1969 = vadd.f32 %v180, %v1905
  %v1970 = vadd.f32 %v182, %v1906
  %v1971 = vadd.f32 %v253, %v1907
  %v1972 = vadd.f32 %v255, %v1908
  %v1973 = vxor.u32 %v1941, 2147483648
  %v1974 = vxor.u32 %v1945, 2147483648
  %v1975 = vxor.u32 %v1949, 2147483648
  %v1976 = vxor.u32 %v1953, 2147483648
  %v1977 = vxor.u32 %v1957, 2147483648
  %v1978 = vxor.u32 %v1961, 2147483648
  %v1979 = vxor.u32 %v1965, 2147483648
  %v1980 = vxor.u32 %v1969, 2147483648
  %v1981 = vmul.f32 %v1973, 1.442695
  %v1982 = vpow.pop %v1981
  %v1983 = vmul.f32 %v1974, 1.442695
  %v1984 = vpow.pop %v1983
  %v1985 = vmul.f32 %v1975, 1.442695
  %v1986 = vpow.pop %v1985
  %v1987 = vmul.f32 %v1976, 1.442695
  %v1988 = vpow.pop %v1987
  %v1989 = vmul.f32 %v1977, 1.442695
  %v1990 = vpow.pop %v1989
  %v1991 = vmul.f32 %v1978, 1.442695
  %v1992 = vpow.pop %v1991
  %v1993 = vmul.f32 %v1979, 1.442695
  %v1994 = vpow.pop %v1993
  %v1995 = vmul.f32 %v1980, 1.442695
  %v1996 = vpow.pop %v1995
  %v1997 = vadd.f32 %v1982, 1.0
  %v1998 = vadd.f32 %v1984, 1.0
  %v1999 = vadd.f32 %v1986, 1.0
  %v2000 = vadd.f32 %v1988, 1.0
  %v2001 = vadd.f32 %v1990, 1.0
  %v2002 = vadd.f32 %v1992, 1.0
  %v2003 = vadd.f32 %v1994, 1.0
  %v2004 = vadd.f32 %v1996, 1.0
  %v2005 = vrcp.pop %v1997
  %v2006 = vmul.f32 1.0, %v2005
  %v2007 = vrcp.pop %v1998
  %v2008 = vmul.f32 1.0, %v2007
  %v2009 = vrcp.pop %v1999
  %v2010 = vmul.f32 1.0, %v2009
  %v2011 = vrcp.pop %v2000
  %v2012 = vmul.f32 1.0, %v2011
  %v2013 = vrcp.pop %v2001
  %v2014 = vmul.f32 1.0, %v2013
  %v2015 = vrcp.pop %v2002
  %v2016 = vmul.f32 1.0, %v2015
  %v2017 = vrcp.pop %v2003
  %v2018 = vmul.f32 1.0, %v2017
  %v2019 = vrcp.pop %v2004
  %v2020 = vmul.f32 1.0, %v2019
  %v2021 = vxor.u32 %v1942, 2147483648
  %v2022 = vxor.u32 %v1946, 2147483648
  %v2023 = vxor.u32 %v1950, 2147483648
  %v2024 = vxor.u32 %v1954, 2147483648
  %v2025 = vxor.u32 %v1958, 2147483648
  %v2026 = vxor.u32 %v1962, 2147483648
  %v2027 = vxor.u32 %v1966, 2147483648
  %v2028 = vxor.u32 %v1970, 2147483648
  %v2029 = vmul.f32 %v2021, 1.442695
  %v2030 = vpow.pop %v2029
  %v2031 = vmul.f32 %v2022, 1.442695
  %v2032 = vpow.pop %v2031
  %v2033 = vmul.f32 %v2023, 1.442695
  %v2034 = vpow.pop %v2033
  %v2035 = vmul.f32 %v2024, 1.442695
  %v2036 = vpow.pop %v2035
  %v2037 = vmul.f32 %v2025, 1.442695
  %v2038 = vpow.pop %v2037
  %v2039 = vmul.f32 %v2026, 1.442695
  %v2040 = vpow.pop %v2039
  %v2041 = vmul.f32 %v2027, 1.442695
  %v2042 = vpow.pop %v2041
  %v2043 = vmul.f32 %v2028, 1.442695
  %v2044 = vpow.pop %v2043
  %v2045 = vadd.f32 %v2030, 1.0
  %v2046 = vadd.f32 %v2032, 1.0
  %v2047 = vadd.f32 %v2034, 1.0
  %v2048 = vadd.f32 %v2036, 1.0
  %v2049 = vadd.f32 %v2038, 1.0
  %v2050 = vadd.f32 %v2040, 1.0
  %v2051 = vadd.f32 %v2042, 1.0
  %v2052 = vadd.f32 %v2044, 1.0
  %v2053 = vrcp.pop %v2045
  %v2054 = vmul.f32 1.0, %v2053
  %v2055 = vrcp.pop %v2046
  %v2056 = vmul.f32 1.0, %v2055
  %v2057 = vrcp.pop %v2047
  %v2058 = vmul.f32 1.0, %v2057
  %v2059 = vrcp.pop %v2048
  %v2060 = vmul.f32 1.0, %v2059
  %v2061 = vrcp.pop %v2049
  %v2062 = vmul.f32 1.0, %v2061
  %v2063 = vrcp.pop %v2050
  %v2064 = vmul.f32 1.0, %v2063
  %v2065 = vrcp.pop %v2051
  %v2066 = vmul.f32 1.0, %v2065
  %v2067 = vrcp.pop %v2052
  %v2068 = vmul.f32 1.0, %v2067
  %v2069 = vtanh.pop %v1943
  %v2070 = vtanh.pop %v1947
  %v2071 = vtanh.pop %v1951
  %v2072 = vtanh.pop %v1955
  %v2073 = vtanh.pop %v1959
  %v2074 = vtanh.pop %v1963
  %v2075 = vtanh.pop %v1967
  %v2076 = vtanh.pop %v1971
  %v2077 = vxor.u32 %v1944, 2147483648
  %v2078 = vxor.u32 %v1948, 2147483648
  %v2079 = vxor.u32 %v1952, 2147483648
  %v2080 = vxor.u32 %v1956, 2147483648
  %v2081 = vxor.u32 %v1960, 2147483648
  %v2082 = vxor.u32 %v1964, 2147483648
  %v2083 = vxor.u32 %v1968, 2147483648
  %v2084 = vxor.u32 %v1972, 2147483648
  %v2085 = vmul.f32 %v2077, 1.442695
  %v2086 = vpow.pop %v2085
  %v2087 = vmul.f32 %v2078, 1.442695
  %v2088 = vpow.pop %v2087
  %v2089 = vmul.f32 %v2079, 1.442695
  %v2090 = vpow.pop %v2089
  %v2091 = vmul.f32 %v2080, 1.442695
  %v2092 = vpow.pop %v2091
  %v2093 = vmul.f32 %v2081, 1.442695
  %v2094 = vpow.pop %v2093
  %v2095 = vmul.f32 %v2082, 1.442695
  %v2096 = vpow.pop %v2095
  %v2097 = vmul.f32 %v2083, 1.442695
  %v2098 = vpow.pop %v2097
  %v2099 = vmul.f32 %v2084, 1.442695
  %v2100 = vpow.pop %v2099
  %v2101 = vadd.f32 %v2086, 1.0
  %v2102 = vadd.f32 %v2088, 1.0
  %v2103 = vadd.f32 %v2090, 1.0
  %v2104 = vadd.f32 %v2092, 1.0
  %v2105 = vadd.f32 %v2094, 1.0
  %v2106 = vadd.f32 %v2096, 1.0
  %v2107 = vadd.f32 %v2098, 1.0
  %v2108 = vadd.f32 %v2100, 1.0
  %v2109 = vrcp.pop %v2101
  %v2110 = vmul.f32 1.0, %v2109
  %v2111 = vrcp.pop %v2102
  %v2112 = vmul.f32 1.0, %v2111
  %v2113 = vrcp.pop %v2103
  %v2114 = vmul.f32 1.0, %v2113
  %v2115 = vrcp.pop %v2104
  %v2116 = vmul.f32 1.0, %v2115
  %v2117 = vrcp.pop %v2105
  %v2118 = vmul.f32 1.0, %v2117
  %v2119 = vrcp.pop %v2106
  %v2120 = vmul.f32 1.0, %v2119
  %v2121 = vrcp.pop %v2107
  %v2122 = vmul.f32 1.0, %v2121
  %v2123 = vrcp.pop %v2108
  %v2124 = vmul.f32 1.0, %v2123
  %v2133 = vrot.slane %v1688, 7
  %v2134 = vrot.slane %v1689, 7
  %v2135 = vrot.slane %v1690, 7
  %v2136 = vrot.slane %v1691, 7
  %v2137 = vrot.slane %v1692, 7
  %v2138 = vrot.slane %v1693, 7
  %v2139 = vrot.slane %v1694, 7
  %v2140 = vrot.slane %v1695, 7
  %v2149 = vmul.f32 %v2054, %v2133
  %v2150 = vmul.f32 %v2056, %v2134
  %v2151 = vmul.f32 %v2058, %v2135
  %v2152 = vmul.f32 %v2060, %v2136
  %v2153 = vmul.f32 %v2062, %v2137
  %v2154 = vmul.f32 %v2064, %v2138
  %v2155 = vmul.f32 %v2066, %v2139
  %v2156 = vmul.f32 %v2068, %v2140
  %v2157 = vmul.f32 %v2006, %v2069
  %v2158 = vmul.f32 %v2008, %v2070
  %v2159 = vmul.f32 %v2010, %v2071
  %v2160 = vmul.f32 %v2012, %v2072
  %v2161 = vmul.f32 %v2014, %v2073
  %v2162 = vmul.f32 %v2016, %v2074
  %v2163 = vmul.f32 %v2018, %v2075
  %v2164 = vmul.f32 %v2020, %v2076
  %v2165 = vadd.f32 %v2149, %v2157
  %v2166 = vadd.f32 %v2150, %v2158
  %v2167 = vadd.f32 %v2151, %v2159
  %v2168 = vadd.f32 %v2152, %v2160
  %v2169 = vadd.f32 %v2153, %v2161
  %v2170 = vadd.f32 %v2154, %v2162
  %v2171 = vadd.f32 %v2155, %v2163
  %v2172 = vadd.f32 %v2156, %v2164
  %v2173 = vtanh.pop %v2165
  %v2174 = vtanh.pop %v2166
  %v2175 = vtanh.pop %v2167
  %v2176 = vtanh.pop %v2168
  %v2177 = vtanh.pop %v2169
  %v2178 = vtanh.pop %v2170
  %v2179 = vtanh.pop %v2171
  %v2180 = vtanh.pop %v2172
  %v2181 = vmul.f32 %v2110, %v2173
  %v2182 = vmul.f32 %v2112, %v2174
  %v2183 = vmul.f32 %v2114, %v2175
  %v2184 = vmul.f32 %v2116, %v2176
  %v2185 = vmul.f32 %v2118, %v2177
  %v2186 = vmul.f32 %v2120, %v2178
  %v2187 = vmul.f32 %v2122, %v2179
  %v2188 = vmul.f32 %v2124, %v2180
  %v2197 = vrot.slane %v2181, 3
  %v2198 = vrot.slane %v2182, 2
  %v2199 = vsel %vm760, %v2198, %v2197
  %v2200 = vrot.slane %v2183, 1
  %v2201 = vsel %vm763, %v2200, %v2199
  %v2202 = vsel %vm766, %v2184, %v2201
  %v2203 = vrot.slane %v2185, 7
  %v2204 = vsel %vm769, %v2203, %v2202
  %v2205 = vrot.slane %v2186, 6
  %v2206 = vsel %vm772, %v2205, %v2204
  %v2207 = vrot.slane %v2187, 5
  %v2208 = vsel %vm775, %v2207, %v2206
  %v2209 = vrot.slane %v2188, 4
  %v2210 = vsel %vm778, %v2209, %v2208
  %2212 = vmatprep.subr.mxu0 %v318
  %2213 = vmatpush1.msra.mxu0 %v317
  %2214 = vmatprep.subr.mxu0 %v314
  %2215 = vmatpush1.msra.mxu0 %v313
  %2216 = vmatprep.subr.mxu0 %v310
  %2217 = vmatpush1.msra.mxu0 %v309
  %2218 = vmatprep.subr.mxu0 %v306
  %2219 = vmatpush1.msra.mxu0 %v305
  %2220 = vmatprep.subr.mxu0 %v302
  %2221 = vmatpush1.msra.mxu0 %v301
  %2222 = vmatprep.subr.mxu0 %v298
  %2223 = vmatpush1.msra.mxu0 %v297
  %2224 = vmatprep.subr.mxu0 %v294
  %2225 = vmatpush1.msra.mxu0 %v293
  %2226 = vmatprep.subr.mxu0 %v290
  %2227 = vmatpush1.msra.mxu0 %v289
  %2228 = vmatprep.subr.mxu0 %v286
  %2229 = vmatpush1.msra.mxu0 %v285
  %2230 = vmatprep.subr.mxu0 %v282
  %2231 = vmatpush1.msra.mxu0 %v281
  %2232 = vmatprep.subr.mxu0 %v278
  %2233 = vmatpush1.msra.mxu0 %v277
  %2234 = vmatprep.subr.mxu0 %v274
  %2235 = vmatpush1.msra.mxu0 %v273
  %2236 = vmatprep.subr.mxu0 %v270
  %2237 = vmatpush1.msra.mxu0 %v269
  %2238 = vmatprep.subr.mxu0 %v266
  %2239 = vmatpush1.msra.mxu0 %v265
  %2240 = vmatprep.subr.mxu0 %v262
  %2241 = vmatpush1.msra.mxu0 %v261
  %2242 = vmatprep.subr.mxu0 %v258
  %2243 = vmatpush1.msra.mxu0 %v257
  %2244 = vmatprep.subr.mxu0 0.0
  %2245 = vmatpush2.msra.mxu0 0.0
  %2246 = vmatprep.subr.mxu0 0.0
  %2247 = vmatpush2.msra.mxu0 0.0
  %2248 = vmatprep.subr.mxu0 0.0
  %2249 = vmatpush2.msra.mxu0 0.0
  %2250 = vmatprep.subr.mxu0 0.0
  %2251 = vmatpush2.msra.mxu0 0.0
  %2252 = vmatprep.subr.mxu0 0.0
  %2253 = vmatpush2.msra.mxu0 0.0
  %2254 = vmatprep.subr.mxu0 0.0
  %2255 = vmatpush2.msra.mxu0 0.0
  %2256 = vmatprep.subr.mxu0 0.0
  %2257 = vmatpush2.msra.mxu0 0.0
  %2258 = vmatprep.subr.mxu0 0.0
  %2259 = vmatpush2.msra.mxu0 0.0
  %2260 = vmatprep.subr.mxu0 0.0
  %2261 = vmatpush2.msra.mxu0 0.0
  %2262 = vmatprep.subr.mxu0 0.0
  %2263 = vmatpush2.msra.mxu0 0.0
  %2264 = vmatprep.subr.mxu0 0.0
  %2265 = vmatpush2.msra.mxu0 0.0
  %2266 = vmatprep.subr.mxu0 0.0
  %2267 = vmatpush2.msra.mxu0 0.0
  %2268 = vmatprep.subr.mxu0 0.0
  %2269 = vmatpush2.msra.mxu0 0.0
  %2270 = vmatprep.subr.mxu0 0.0
  %2271 = vmatpush2.msra.mxu0 0.0
  %2272 = vmatprep.subr.mxu0 0.0
  %2273 = vmatpush2.msra.mxu0 0.0
  %2274 = vmatprep.subr.mxu0 0.0
  %2275 = vmatpush2.msra.mxu0 0.0
  %2276 = vmatprep.mubr.f32.mxu0 0.0
  %2277 = vmatmul.mubr.f32.gmra.mxu0 %v2210
  %v2278 = vpop.f32.mrf.mxu0
  %v2279 = vadd.f32 0.0, %v2278
  %v2280 = vpop.f32.mrf.mxu0
  %v2281 = vadd.f32 0.0, %v2280
  %2282 = vdwg.mxu0
  %2283 = vmatprep.subr.mxu0 %v320
  %2284 = vmatpush1.msra.mxu0 %v319
  %2285 = vmatprep.subr.mxu0 %v316
  %2286 = vmatpush1.msra.mxu0 %v315
  %2287 = vmatprep.subr.mxu0 %v312
  %2288 = vmatpush1.msra.mxu0 %v311
  %2289 = vmatprep.subr.mxu0 %v308
  %2290 = vmatpush1.msra.mxu0 %v307
  %2291 = vmatprep.subr.mxu0 %v304
  %2292 = vmatpush1.msra.mxu0 %v303
  %2293 = vmatprep.subr.mxu0 %v300
  %2294 = vmatpush1.msra.mxu0 %v299
  %2295 = vmatprep.subr.mxu0 %v296
  %2296 = vmatpush1.msra.mxu0 %v295
  %2297 = vmatprep.subr.mxu0 %v292
  %2298 = vmatpush1.msra.mxu0 %v291
  %2299 = vmatprep.subr.mxu0 %v288
  %2300 = vmatpush1.msra.mxu0 %v287
  %2301 = vmatprep.subr.mxu0 %v284
  %2302 = vmatpush1.msra.mxu0 %v283
  %2303 = vmatprep.subr.mxu0 %v280
  %2304 = vmatpush1.msra.mxu0 %v279
  %2305 = vmatprep.subr.mxu0 %v276
  %2306 = vmatpush1.msra.mxu0 %v275
  %2307 = vmatprep.subr.mxu0 %v272
  %2308 = vmatpush1.msra.mxu0 %v271
  %2309 = vmatprep.subr.mxu0 %v268
  %2310 = vmatpush1.msra.mxu0 %v267
  %2311 = vmatprep.subr.mxu0 %v264
  %2312 = vmatpush1.msra.mxu0 %v263
  %2313 = vmatprep.subr.mxu0 %v260
  %2314 = vmatpush1.msra.mxu0 %v259
  %2315 = vmatprep.subr.mxu0 0.0
  %2316 = vmatpush2.msra.mxu0 0.0
  %2317 = vmatprep.subr.mxu0 0.0
  %2318 = vmatpush2.msra.mxu0 0.0
  %2319 = vmatprep.subr.mxu0 0.0
  %2320 = vmatpush2.msra.mxu0 0.0
  %2321 = vmatprep.subr.mxu0 0.0
  %2322 = vmatpush2.msra.mxu0 0.0
  %2323 = vmatprep.subr.mxu0 0.0
  %2324 = vmatpush2.msra.mxu0 0.0
  %2325 = vmatprep.subr.mxu0 0.0
  %2326 = vmatpush2.msra.mxu0 0.0
  %2327 = vmatprep.subr.mxu0 0.0
  %2328 = vmatpush2.msra.mxu0 0.0
  %2329 = vmatprep.subr.mxu0 0.0
  %2330 = vmatpush2.msra.mxu0 0.0
  %2331 = vmatprep.subr.mxu0 0.0
  %2332 = vmatpush2.msra.mxu0 0.0
  %2333 = vmatprep.subr.mxu0 0.0
  %2334 = vmatpush2.msra.mxu0 0.0
  %2335 = vmatprep.subr.mxu0 0.0
  %2336 = vmatpush2.msra.mxu0 0.0
  %2337 = vmatprep.subr.mxu0 0.0
  %2338 = vmatpush2.msra.mxu0 0.0
  %2339 = vmatprep.subr.mxu0 0.0
  %2340 = vmatpush2.msra.mxu0 0.0
  %2341 = vmatprep.subr.mxu0 0.0
  %2342 = vmatpush2.msra.mxu0 0.0
  %2343 = vmatprep.subr.mxu0 0.0
  %2344 = vmatpush2.msra.mxu0 0.0
  %2345 = vmatprep.subr.mxu0 0.0
  %2346 = vmatpush2.msra.mxu0 0.0
  %2347 = vmatprep.mubr.f32.mxu0 0.0
  %2348 = vmatmul.mubr.f32.gmra.mxu0 %v2210
  %v2349 = vpop.f32.mrf.mxu0
  %v2350 = vadd.f32 0.0, %v2349
  %v2351 = vpop.f32.mrf.mxu0
  %v2352 = vadd.f32 0.0, %v2351
  %2353 = vdwg.mxu0
  %v2358 = vrot.slane %v2279, 4
  %v2359 = vrot.slane %v2281, 4
  %v2360 = vrot.slane %v2350, 4
  %v2361 = vrot.slane %v2352, 4
  %v2362 = vrot.slane %v2279, 5
  %v2363 = vrot.slane %v2281, 5
  %v2364 = vrot.slane %v2350, 5
  %v2365 = vrot.slane %v2352, 5
  %v2366 = vrot.slane %v2279, 6
  %v2367 = vrot.slane %v2281, 6
  %v2368 = vrot.slane %v2350, 6
  %v2369 = vrot.slane %v2352, 6
  %v2370 = vrot.slane %v2279, 7
  %v2371 = vrot.slane %v2281, 7
  %v2372 = vrot.slane %v2350, 7
  %v2373 = vrot.slane %v2352, 7
  %v2374 = vrot.slane %v2279, 1
  %v2375 = vrot.slane %v2281, 1
  %v2376 = vrot.slane %v2350, 1
  %v2377 = vrot.slane %v2352, 1
  %v2378 = vrot.slane %v2279, 2
  %v2379 = vrot.slane %v2281, 2
  %v2380 = vrot.slane %v2350, 2
  %v2381 = vrot.slane %v2352, 2
  %v2382 = vrot.slane %v2279, 3
  %v2383 = vrot.slane %v2281, 3
  %v2384 = vrot.slane %v2350, 3
  %v2385 = vrot.slane %v2352, 3
  %v2418 = vadd.f32 %v146, %v2358
  %v2419 = vadd.f32 %v148, %v2359
  %v2420 = vadd.f32 %v219, %v2360
  %v2421 = vadd.f32 %v221, %v2361
  %v2422 = vadd.f32 %v150, %v2362
  %v2423 = vadd.f32 %v152, %v2363
  %v2424 = vadd.f32 %v223, %v2364
  %v2425 = vadd.f32 %v225, %v2365
  %v2426 = vadd.f32 %v156, %v2366
  %v2427 = vadd.f32 %v158, %v2367
  %v2428 = vadd.f32 %v229, %v2368
  %v2429 = vadd.f32 %v231, %v2369
  %v2430 = vadd.f32 %v160, %v2370
  %v2431 = vadd.f32 %v162, %v2371
  %v2432 = vadd.f32 %v233, %v2372
  %v2433 = vadd.f32 %v235, %v2373
  %v2434 = vadd.f32 %v166, %v2279
  %v2435 = vadd.f32 %v168, %v2281
  %v2436 = vadd.f32 %v239, %v2350
  %v2437 = vadd.f32 %v241, %v2352
  %v2438 = vadd.f32 %v170, %v2374
  %v2439 = vadd.f32 %v172, %v2375
  %v2440 = vadd.f32 %v243, %v2376
  %v2441 = vadd.f32 %v245, %v2377
  %v2442 = vadd.f32 %v176, %v2378
  %v2443 = vadd.f32 %v178, %v2379
  %v2444 = vadd.f32 %v249, %v2380
  %v2445 = vadd.f32 %v251, %v2381
  %v2446 = vadd.f32 %v180, %v2382
  %v2447 = vadd.f32 %v182, %v2383
  %v2448 = vadd.f32 %v253, %v2384
  %v2449 = vadd.f32 %v255, %v2385
  %v2450 = vxor.u32 %v2418, 2147483648
  %v2451 = vxor.u32 %v2422, 2147483648
  %v2452 = vxor.u32 %v2426, 2147483648
  %v2453 = vxor.u32 %v2430, 2147483648
  %v2454 = vxor.u32 %v2434, 2147483648
  %v2455 = vxor.u32 %v2438, 2147483648
  %v2456 = vxor.u32 %v2442, 2147483648
  %v2457 = vxor.u32 %v2446, 2147483648
  %v2458 = vmul.f32 %v2450, 1.442695
  %v2459 = vpow.pop %v2458
  %v2460 = vmul.f32 %v2451, 1.442695
  %v2461 = vpow.pop %v2460
  %v2462 = vmul.f32 %v2452, 1.442695
  %v2463 = vpow.pop %v2462
  %v2464 = vmul.f32 %v2453, 1.442695
  %v2465 = vpow.pop %v2464
  %v2466 = vmul.f32 %v2454, 1.442695
  %v2467 = vpow.pop %v2466
  %v2468 = vmul.f32 %v2455, 1.442695
  %v2469 = vpow.pop %v2468
  %v2470 = vmul.f32 %v2456, 1.442695
  %v2471 = vpow.pop %v2470
  %v2472 = vmul.f32 %v2457, 1.442695
  %v2473 = vpow.pop %v2472
  %v2474 = vadd.f32 %v2459, 1.0
  %v2475 = vadd.f32 %v2461, 1.0
  %v2476 = vadd.f32 %v2463, 1.0
  %v2477 = vadd.f32 %v2465, 1.0
  %v2478 = vadd.f32 %v2467, 1.0
  %v2479 = vadd.f32 %v2469, 1.0
  %v2480 = vadd.f32 %v2471, 1.0
  %v2481 = vadd.f32 %v2473, 1.0
  %v2482 = vrcp.pop %v2474
  %v2483 = vmul.f32 1.0, %v2482
  %v2484 = vrcp.pop %v2475
  %v2485 = vmul.f32 1.0, %v2484
  %v2486 = vrcp.pop %v2476
  %v2487 = vmul.f32 1.0, %v2486
  %v2488 = vrcp.pop %v2477
  %v2489 = vmul.f32 1.0, %v2488
  %v2490 = vrcp.pop %v2478
  %v2491 = vmul.f32 1.0, %v2490
  %v2492 = vrcp.pop %v2479
  %v2493 = vmul.f32 1.0, %v2492
  %v2494 = vrcp.pop %v2480
  %v2495 = vmul.f32 1.0, %v2494
  %v2496 = vrcp.pop %v2481
  %v2497 = vmul.f32 1.0, %v2496
  %v2498 = vxor.u32 %v2419, 2147483648
  %v2499 = vxor.u32 %v2423, 2147483648
  %v2500 = vxor.u32 %v2427, 2147483648
  %v2501 = vxor.u32 %v2431, 2147483648
  %v2502 = vxor.u32 %v2435, 2147483648
  %v2503 = vxor.u32 %v2439, 2147483648
  %v2504 = vxor.u32 %v2443, 2147483648
  %v2505 = vxor.u32 %v2447, 2147483648
  %v2506 = vmul.f32 %v2498, 1.442695
  %v2507 = vpow.pop %v2506
  %v2508 = vmul.f32 %v2499, 1.442695
  %v2509 = vpow.pop %v2508
  %v2510 = vmul.f32 %v2500, 1.442695
  %v2511 = vpow.pop %v2510
  %v2512 = vmul.f32 %v2501, 1.442695
  %v2513 = vpow.pop %v2512
  %v2514 = vmul.f32 %v2502, 1.442695
  %v2515 = vpow.pop %v2514
  %v2516 = vmul.f32 %v2503, 1.442695
  %v2517 = vpow.pop %v2516
  %v2518 = vmul.f32 %v2504, 1.442695
  %v2519 = vpow.pop %v2518
  %v2520 = vmul.f32 %v2505, 1.442695
  %v2521 = vpow.pop %v2520
  %v2522 = vadd.f32 %v2507, 1.0
  %v2523 = vadd.f32 %v2509, 1.0
  %v2524 = vadd.f32 %v2511, 1.0
  %v2525 = vadd.f32 %v2513, 1.0
  %v2526 = vadd.f32 %v2515, 1.0
  %v2527 = vadd.f32 %v2517, 1.0
  %v2528 = vadd.f32 %v2519, 1.0
  %v2529 = vadd.f32 %v2521, 1.0
  %v2530 = vrcp.pop %v2522
  %v2531 = vmul.f32 1.0, %v2530
  %v2532 = vrcp.pop %v2523
  %v2533 = vmul.f32 1.0, %v2532
  %v2534 = vrcp.pop %v2524
  %v2535 = vmul.f32 1.0, %v2534
  %v2536 = vrcp.pop %v2525
  %v2537 = vmul.f32 1.0, %v2536
  %v2538 = vrcp.pop %v2526
  %v2539 = vmul.f32 1.0, %v2538
  %v2540 = vrcp.pop %v2527
  %v2541 = vmul.f32 1.0, %v2540
  %v2542 = vrcp.pop %v2528
  %v2543 = vmul.f32 1.0, %v2542
  %v2544 = vrcp.pop %v2529
  %v2545 = vmul.f32 1.0, %v2544
  %v2546 = vtanh.pop %v2420
  %v2547 = vtanh.pop %v2424
  %v2548 = vtanh.pop %v2428
  %v2549 = vtanh.pop %v2432
  %v2550 = vtanh.pop %v2436
  %v2551 = vtanh.pop %v2440
  %v2552 = vtanh.pop %v2444
  %v2553 = vtanh.pop %v2448
  %v2554 = vxor.u32 %v2421, 2147483648
  %v2555 = vxor.u32 %v2425, 2147483648
  %v2556 = vxor.u32 %v2429, 2147483648
  %v2557 = vxor.u32 %v2433, 2147483648
  %v2558 = vxor.u32 %v2437, 2147483648
  %v2559 = vxor.u32 %v2441, 2147483648
  %v2560 = vxor.u32 %v2445, 2147483648
  %v2561 = vxor.u32 %v2449, 2147483648
  %v2562 = vmul.f32 %v2554, 1.442695
  %v2563 = vpow.pop %v2562
  %v2564 = vmul.f32 %v2555, 1.442695
  %v2565 = vpow.pop %v2564
  %v2566 = vmul.f32 %v2556, 1.442695
  %v2567 = vpow.pop %v2566
  %v2568 = vmul.f32 %v2557, 1.442695
  %v2569 = vpow.pop %v2568
  %v2570 = vmul.f32 %v2558, 1.442695
  %v2571 = vpow.pop %v2570
  %v2572 = vmul.f32 %v2559, 1.442695
  %v2573 = vpow.pop %v2572
  %v2574 = vmul.f32 %v2560, 1.442695
  %v2575 = vpow.pop %v2574
  %v2576 = vmul.f32 %v2561, 1.442695
  %v2577 = vpow.pop %v2576
  %v2578 = vadd.f32 %v2563, 1.0
  %v2579 = vadd.f32 %v2565, 1.0
  %v2580 = vadd.f32 %v2567, 1.0
  %v2581 = vadd.f32 %v2569, 1.0
  %v2582 = vadd.f32 %v2571, 1.0
  %v2583 = vadd.f32 %v2573, 1.0
  %v2584 = vadd.f32 %v2575, 1.0
  %v2585 = vadd.f32 %v2577, 1.0
  %v2586 = vrcp.pop %v2578
  %v2587 = vmul.f32 1.0, %v2586
  %v2588 = vrcp.pop %v2579
  %v2589 = vmul.f32 1.0, %v2588
  %v2590 = vrcp.pop %v2580
  %v2591 = vmul.f32 1.0, %v2590
  %v2592 = vrcp.pop %v2581
  %v2593 = vmul.f32 1.0, %v2592
  %v2594 = vrcp.pop %v2582
  %v2595 = vmul.f32 1.0, %v2594
  %v2596 = vrcp.pop %v2583
  %v2597 = vmul.f32 1.0, %v2596
  %v2598 = vrcp.pop %v2584
  %v2599 = vmul.f32 1.0, %v2598
  %v2600 = vrcp.pop %v2585
  %v2601 = vmul.f32 1.0, %v2600
  %v2610 = vrot.slane %v2165, 7
  %v2611 = vrot.slane %v2166, 7
  %v2612 = vrot.slane %v2167, 7
  %v2613 = vrot.slane %v2168, 7
  %v2614 = vrot.slane %v2169, 7
  %v2615 = vrot.slane %v2170, 7
  %v2616 = vrot.slane %v2171, 7
  %v2617 = vrot.slane %v2172, 7
  %v2626 = vmul.f32 %v2531, %v2610
  %v2627 = vmul.f32 %v2533, %v2611
  %v2628 = vmul.f32 %v2535, %v2612
  %v2629 = vmul.f32 %v2537, %v2613
  %v2630 = vmul.f32 %v2539, %v2614
  %v2631 = vmul.f32 %v2541, %v2615
  %v2632 = vmul.f32 %v2543, %v2616
  %v2633 = vmul.f32 %v2545, %v2617
  %v2634 = vmul.f32 %v2483, %v2546
  %v2635 = vmul.f32 %v2485, %v2547
  %v2636 = vmul.f32 %v2487, %v2548
  %v2637 = vmul.f32 %v2489, %v2549
  %v2638 = vmul.f32 %v2491, %v2550
  %v2639 = vmul.f32 %v2493, %v2551
  %v2640 = vmul.f32 %v2495, %v2552
  %v2641 = vmul.f32 %v2497, %v2553
  %v2642 = vadd.f32 %v2626, %v2634
  %v2643 = vadd.f32 %v2627, %v2635
  %v2644 = vadd.f32 %v2628, %v2636
  %v2645 = vadd.f32 %v2629, %v2637
  %v2646 = vadd.f32 %v2630, %v2638
  %v2647 = vadd.f32 %v2631, %v2639
  %v2648 = vadd.f32 %v2632, %v2640
  %v2649 = vadd.f32 %v2633, %v2641
  %v2650 = vtanh.pop %v2642
  %v2651 = vtanh.pop %v2643
  %v2652 = vtanh.pop %v2644
  %v2653 = vtanh.pop %v2645
  %v2654 = vtanh.pop %v2646
  %v2655 = vtanh.pop %v2647
  %v2656 = vtanh.pop %v2648
  %v2657 = vtanh.pop %v2649
  %v2658 = vmul.f32 %v2587, %v2650
  %v2659 = vmul.f32 %v2589, %v2651
  %v2660 = vmul.f32 %v2591, %v2652
  %v2661 = vmul.f32 %v2593, %v2653
  %v2662 = vmul.f32 %v2595, %v2654
  %v2663 = vmul.f32 %v2597, %v2655
  %v2664 = vmul.f32 %v2599, %v2656
  %v2665 = vmul.f32 %v2601, %v2657
  %v2674 = vrot.slane %v2658, 4
  %v2675 = vrot.slane %v2659, 3
  %v2676 = vsel %vm760, %v2675, %v2674
  %v2677 = vrot.slane %v2660, 2
  %v2678 = vsel %vm763, %v2677, %v2676
  %v2679 = vrot.slane %v2661, 1
  %v2680 = vsel %vm766, %v2679, %v2678
  %v2681 = vsel %vm769, %v2662, %v2680
  %v2682 = vrot.slane %v2663, 7
  %v2683 = vsel %vm772, %v2682, %v2681
  %v2684 = vrot.slane %v2664, 6
  %v2685 = vsel %vm775, %v2684, %v2683
  %v2686 = vrot.slane %v2665, 5
  %v2687 = vsel %vm778, %v2686, %v2685
  %2689 = vmatprep.subr.mxu0 %v318
  %2690 = vmatpush1.msra.mxu0 %v317
  %2691 = vmatprep.subr.mxu0 %v314
  %2692 = vmatpush1.msra.mxu0 %v313
  %2693 = vmatprep.subr.mxu0 %v310
  %2694 = vmatpush1.msra.mxu0 %v309
  %2695 = vmatprep.subr.mxu0 %v306
  %2696 = vmatpush1.msra.mxu0 %v305
  %2697 = vmatprep.subr.mxu0 %v302
  %2698 = vmatpush1.msra.mxu0 %v301
  %2699 = vmatprep.subr.mxu0 %v298
  %2700 = vmatpush1.msra.mxu0 %v297
  %2701 = vmatprep.subr.mxu0 %v294
  %2702 = vmatpush1.msra.mxu0 %v293
  %2703 = vmatprep.subr.mxu0 %v290
  %2704 = vmatpush1.msra.mxu0 %v289
  %2705 = vmatprep.subr.mxu0 %v286
  %2706 = vmatpush1.msra.mxu0 %v285
  %2707 = vmatprep.subr.mxu0 %v282
  %2708 = vmatpush1.msra.mxu0 %v281
  %2709 = vmatprep.subr.mxu0 %v278
  %2710 = vmatpush1.msra.mxu0 %v277
  %2711 = vmatprep.subr.mxu0 %v274
  %2712 = vmatpush1.msra.mxu0 %v273
  %2713 = vmatprep.subr.mxu0 %v270
  %2714 = vmatpush1.msra.mxu0 %v269
  %2715 = vmatprep.subr.mxu0 %v266
  %2716 = vmatpush1.msra.mxu0 %v265
  %2717 = vmatprep.subr.mxu0 %v262
  %2718 = vmatpush1.msra.mxu0 %v261
  %2719 = vmatprep.subr.mxu0 %v258
  %2720 = vmatpush1.msra.mxu0 %v257
  %2721 = vmatprep.subr.mxu0 0.0
  %2722 = vmatpush2.msra.mxu0 0.0
  %2723 = vmatprep.subr.mxu0 0.0
  %2724 = vmatpush2.msra.mxu0 0.0
  %2725 = vmatprep.subr.mxu0 0.0
  %2726 = vmatpush2.msra.mxu0 0.0
  %2727 = vmatprep.subr.mxu0 0.0
  %2728 = vmatpush2.msra.mxu0 0.0
  %2729 = vmatprep.subr.mxu0 0.0
  %2730 = vmatpush2.msra.mxu0 0.0
  %2731 = vmatprep.subr.mxu0 0.0
  %2732 = vmatpush2.msra.mxu0 0.0
  %2733 = vmatprep.subr.mxu0 0.0
  %2734 = vmatpush2.msra.mxu0 0.0
  %2735 = vmatprep.subr.mxu0 0.0
  %2736 = vmatpush2.msra.mxu0 0.0
  %2737 = vmatprep.subr.mxu0 0.0
  %2738 = vmatpush2.msra.mxu0 0.0
  %2739 = vmatprep.subr.mxu0 0.0
  %2740 = vmatpush2.msra.mxu0 0.0
  %2741 = vmatprep.subr.mxu0 0.0
  %2742 = vmatpush2.msra.mxu0 0.0
  %2743 = vmatprep.subr.mxu0 0.0
  %2744 = vmatpush2.msra.mxu0 0.0
  %2745 = vmatprep.subr.mxu0 0.0
  %2746 = vmatpush2.msra.mxu0 0.0
  %2747 = vmatprep.subr.mxu0 0.0
  %2748 = vmatpush2.msra.mxu0 0.0
  %2749 = vmatprep.subr.mxu0 0.0
  %2750 = vmatpush2.msra.mxu0 0.0
  %2751 = vmatprep.subr.mxu0 0.0
  %2752 = vmatpush2.msra.mxu0 0.0
  %2753 = vmatprep.mubr.f32.mxu0 0.0
  %2754 = vmatmul.mubr.f32.gmra.mxu0 %v2687
  %v2755 = vpop.f32.mrf.mxu0
  %v2756 = vadd.f32 0.0, %v2755
  %v2757 = vpop.f32.mrf.mxu0
  %v2758 = vadd.f32 0.0, %v2757
  %2759 = vdwg.mxu0
  %2760 = vmatprep.subr.mxu0 %v320
  %2761 = vmatpush1.msra.mxu0 %v319
  %2762 = vmatprep.subr.mxu0 %v316
  %2763 = vmatpush1.msra.mxu0 %v315
  %2764 = vmatprep.subr.mxu0 %v312
  %2765 = vmatpush1.msra.mxu0 %v311
  %2766 = vmatprep.subr.mxu0 %v308
  %2767 = vmatpush1.msra.mxu0 %v307
  %2768 = vmatprep.subr.mxu0 %v304
  %2769 = vmatpush1.msra.mxu0 %v303
  %2770 = vmatprep.subr.mxu0 %v300
  %2771 = vmatpush1.msra.mxu0 %v299
  %2772 = vmatprep.subr.mxu0 %v296
  %2773 = vmatpush1.msra.mxu0 %v295
  %2774 = vmatprep.subr.mxu0 %v292
  %2775 = vmatpush1.msra.mxu0 %v291
  %2776 = vmatprep.subr.mxu0 %v288
  %2777 = vmatpush1.msra.mxu0 %v287
  %2778 = vmatprep.subr.mxu0 %v284
  %2779 = vmatpush1.msra.mxu0 %v283
  %2780 = vmatprep.subr.mxu0 %v280
  %2781 = vmatpush1.msra.mxu0 %v279
  %2782 = vmatprep.subr.mxu0 %v276
  %2783 = vmatpush1.msra.mxu0 %v275
  %2784 = vmatprep.subr.mxu0 %v272
  %2785 = vmatpush1.msra.mxu0 %v271
  %2786 = vmatprep.subr.mxu0 %v268
  %2787 = vmatpush1.msra.mxu0 %v267
  %2788 = vmatprep.subr.mxu0 %v264
  %2789 = vmatpush1.msra.mxu0 %v263
  %2790 = vmatprep.subr.mxu0 %v260
  %2791 = vmatpush1.msra.mxu0 %v259
  %2792 = vmatprep.subr.mxu0 0.0
  %2793 = vmatpush2.msra.mxu0 0.0
  %2794 = vmatprep.subr.mxu0 0.0
  %2795 = vmatpush2.msra.mxu0 0.0
  %2796 = vmatprep.subr.mxu0 0.0
  %2797 = vmatpush2.msra.mxu0 0.0
  %2798 = vmatprep.subr.mxu0 0.0
  %2799 = vmatpush2.msra.mxu0 0.0
  %2800 = vmatprep.subr.mxu0 0.0
  %2801 = vmatpush2.msra.mxu0 0.0
  %2802 = vmatprep.subr.mxu0 0.0
  %2803 = vmatpush2.msra.mxu0 0.0
  %2804 = vmatprep.subr.mxu0 0.0
  %2805 = vmatpush2.msra.mxu0 0.0
  %2806 = vmatprep.subr.mxu0 0.0
  %2807 = vmatpush2.msra.mxu0 0.0
  %2808 = vmatprep.subr.mxu0 0.0
  %2809 = vmatpush2.msra.mxu0 0.0
  %2810 = vmatprep.subr.mxu0 0.0
  %2811 = vmatpush2.msra.mxu0 0.0
  %2812 = vmatprep.subr.mxu0 0.0
  %2813 = vmatpush2.msra.mxu0 0.0
  %2814 = vmatprep.subr.mxu0 0.0
  %2815 = vmatpush2.msra.mxu0 0.0
  %2816 = vmatprep.subr.mxu0 0.0
  %2817 = vmatpush2.msra.mxu0 0.0
  %2818 = vmatprep.subr.mxu0 0.0
  %2819 = vmatpush2.msra.mxu0 0.0
  %2820 = vmatprep.subr.mxu0 0.0
  %2821 = vmatpush2.msra.mxu0 0.0
  %2822 = vmatprep.subr.mxu0 0.0
  %2823 = vmatpush2.msra.mxu0 0.0
  %2824 = vmatprep.mubr.f32.mxu0 0.0
  %2825 = vmatmul.mubr.f32.gmra.mxu0 %v2687
  %v2826 = vpop.f32.mrf.mxu0
  %v2827 = vadd.f32 0.0, %v2826
  %v2828 = vpop.f32.mrf.mxu0
  %v2829 = vadd.f32 0.0, %v2828
  %2830 = vdwg.mxu0
  %v2835 = vrot.slane %v2756, 3
  %v2836 = vrot.slane %v2758, 3
  %v2837 = vrot.slane %v2827, 3
  %v2838 = vrot.slane %v2829, 3
  %v2839 = vrot.slane %v2756, 4
  %v2840 = vrot.slane %v2758, 4
  %v2841 = vrot.slane %v2827, 4
  %v2842 = vrot.slane %v2829, 4
  %v2843 = vrot.slane %v2756, 5
  %v2844 = vrot.slane %v2758, 5
  %v2845 = vrot.slane %v2827, 5
  %v2846 = vrot.slane %v2829, 5
  %v2847 = vrot.slane %v2756, 6
  %v2848 = vrot.slane %v2758, 6
  %v2849 = vrot.slane %v2827, 6
  %v2850 = vrot.slane %v2829, 6
  %v2851 = vrot.slane %v2756, 7
  %v2852 = vrot.slane %v2758, 7
  %v2853 = vrot.slane %v2827, 7
  %v2854 = vrot.slane %v2829, 7
  %v2855 = vrot.slane %v2756, 1
  %v2856 = vrot.slane %v2758, 1
  %v2857 = vrot.slane %v2827, 1
  %v2858 = vrot.slane %v2829, 1
  %v2859 = vrot.slane %v2756, 2
  %v2860 = vrot.slane %v2758, 2
  %v2861 = vrot.slane %v2827, 2
  %v2862 = vrot.slane %v2829, 2
  %v2895 = vadd.f32 %v146, %v2835
  %v2896 = vadd.f32 %v148, %v2836
  %v2897 = vadd.f32 %v219, %v2837
  %v2898 = vadd.f32 %v221, %v2838
  %v2899 = vadd.f32 %v150, %v2839
  %v2900 = vadd.f32 %v152, %v2840
  %v2901 = vadd.f32 %v223, %v2841
  %v2902 = vadd.f32 %v225, %v2842
  %v2903 = vadd.f32 %v156, %v2843
  %v2904 = vadd.f32 %v158, %v2844
  %v2905 = vadd.f32 %v229, %v2845
  %v2906 = vadd.f32 %v231, %v2846
  %v2907 = vadd.f32 %v160, %v2847
  %v2908 = vadd.f32 %v162, %v2848
  %v2909 = vadd.f32 %v233, %v2849
  %v2910 = vadd.f32 %v235, %v2850
  %v2911 = vadd.f32 %v166, %v2851
  %v2912 = vadd.f32 %v168, %v2852
  %v2913 = vadd.f32 %v239, %v2853
  %v2914 = vadd.f32 %v241, %v2854
  %v2915 = vadd.f32 %v170, %v2756
  %v2916 = vadd.f32 %v172, %v2758
  %v2917 = vadd.f32 %v243, %v2827
  %v2918 = vadd.f32 %v245, %v2829
  %v2919 = vadd.f32 %v176, %v2855
  %v2920 = vadd.f32 %v178, %v2856
  %v2921 = vadd.f32 %v249, %v2857
  %v2922 = vadd.f32 %v251, %v2858
  %v2923 = vadd.f32 %v180, %v2859
  %v2924 = vadd.f32 %v182, %v2860
  %v2925 = vadd.f32 %v253, %v2861
  %v2926 = vadd.f32 %v255, %v2862
  %v2927 = vxor.u32 %v2895, 2147483648
  %v2928 = vxor.u32 %v2899, 2147483648
  %v2929 = vxor.u32 %v2903, 2147483648
  %v2930 = vxor.u32 %v2907, 2147483648
  %v2931 = vxor.u32 %v2911, 2147483648
  %v2932 = vxor.u32 %v2915, 2147483648
  %v2933 = vxor.u32 %v2919, 2147483648
  %v2934 = vxor.u32 %v2923, 2147483648
  %v2935 = vmul.f32 %v2927, 1.442695
  %v2936 = vpow.pop %v2935
  %v2937 = vmul.f32 %v2928, 1.442695
  %v2938 = vpow.pop %v2937
  %v2939 = vmul.f32 %v2929, 1.442695
  %v2940 = vpow.pop %v2939
  %v2941 = vmul.f32 %v2930, 1.442695
  %v2942 = vpow.pop %v2941
  %v2943 = vmul.f32 %v2931, 1.442695
  %v2944 = vpow.pop %v2943
  %v2945 = vmul.f32 %v2932, 1.442695
  %v2946 = vpow.pop %v2945
  %v2947 = vmul.f32 %v2933, 1.442695
  %v2948 = vpow.pop %v2947
  %v2949 = vmul.f32 %v2934, 1.442695
  %v2950 = vpow.pop %v2949
  %v2951 = vadd.f32 %v2936, 1.0
  %v2952 = vadd.f32 %v2938, 1.0
  %v2953 = vadd.f32 %v2940, 1.0
  %v2954 = vadd.f32 %v2942, 1.0
  %v2955 = vadd.f32 %v2944, 1.0
  %v2956 = vadd.f32 %v2946, 1.0
  %v2957 = vadd.f32 %v2948, 1.0
  %v2958 = vadd.f32 %v2950, 1.0
  %v2959 = vrcp.pop %v2951
  %v2960 = vmul.f32 1.0, %v2959
  %v2961 = vrcp.pop %v2952
  %v2962 = vmul.f32 1.0, %v2961
  %v2963 = vrcp.pop %v2953
  %v2964 = vmul.f32 1.0, %v2963
  %v2965 = vrcp.pop %v2954
  %v2966 = vmul.f32 1.0, %v2965
  %v2967 = vrcp.pop %v2955
  %v2968 = vmul.f32 1.0, %v2967
  %v2969 = vrcp.pop %v2956
  %v2970 = vmul.f32 1.0, %v2969
  %v2971 = vrcp.pop %v2957
  %v2972 = vmul.f32 1.0, %v2971
  %v2973 = vrcp.pop %v2958
  %v2974 = vmul.f32 1.0, %v2973
  %v2975 = vxor.u32 %v2896, 2147483648
  %v2976 = vxor.u32 %v2900, 2147483648
  %v2977 = vxor.u32 %v2904, 2147483648
  %v2978 = vxor.u32 %v2908, 2147483648
  %v2979 = vxor.u32 %v2912, 2147483648
  %v2980 = vxor.u32 %v2916, 2147483648
  %v2981 = vxor.u32 %v2920, 2147483648
  %v2982 = vxor.u32 %v2924, 2147483648
  %v2983 = vmul.f32 %v2975, 1.442695
  %v2984 = vpow.pop %v2983
  %v2985 = vmul.f32 %v2976, 1.442695
  %v2986 = vpow.pop %v2985
  %v2987 = vmul.f32 %v2977, 1.442695
  %v2988 = vpow.pop %v2987
  %v2989 = vmul.f32 %v2978, 1.442695
  %v2990 = vpow.pop %v2989
  %v2991 = vmul.f32 %v2979, 1.442695
  %v2992 = vpow.pop %v2991
  %v2993 = vmul.f32 %v2980, 1.442695
  %v2994 = vpow.pop %v2993
  %v2995 = vmul.f32 %v2981, 1.442695
  %v2996 = vpow.pop %v2995
  %v2997 = vmul.f32 %v2982, 1.442695
  %v2998 = vpow.pop %v2997
  %v2999 = vadd.f32 %v2984, 1.0
  %v3000 = vadd.f32 %v2986, 1.0
  %v3001 = vadd.f32 %v2988, 1.0
  %v3002 = vadd.f32 %v2990, 1.0
  %v3003 = vadd.f32 %v2992, 1.0
  %v3004 = vadd.f32 %v2994, 1.0
  %v3005 = vadd.f32 %v2996, 1.0
  %v3006 = vadd.f32 %v2998, 1.0
  %v3007 = vrcp.pop %v2999
  %v3008 = vmul.f32 1.0, %v3007
  %v3009 = vrcp.pop %v3000
  %v3010 = vmul.f32 1.0, %v3009
  %v3011 = vrcp.pop %v3001
  %v3012 = vmul.f32 1.0, %v3011
  %v3013 = vrcp.pop %v3002
  %v3014 = vmul.f32 1.0, %v3013
  %v3015 = vrcp.pop %v3003
  %v3016 = vmul.f32 1.0, %v3015
  %v3017 = vrcp.pop %v3004
  %v3018 = vmul.f32 1.0, %v3017
  %v3019 = vrcp.pop %v3005
  %v3020 = vmul.f32 1.0, %v3019
  %v3021 = vrcp.pop %v3006
  %v3022 = vmul.f32 1.0, %v3021
  %v3023 = vtanh.pop %v2897
  %v3024 = vtanh.pop %v2901
  %v3025 = vtanh.pop %v2905
  %v3026 = vtanh.pop %v2909
  %v3027 = vtanh.pop %v2913
  %v3028 = vtanh.pop %v2917
  %v3029 = vtanh.pop %v2921
  %v3030 = vtanh.pop %v2925
  %v3031 = vxor.u32 %v2898, 2147483648
  %v3032 = vxor.u32 %v2902, 2147483648
  %v3033 = vxor.u32 %v2906, 2147483648
  %v3034 = vxor.u32 %v2910, 2147483648
  %v3035 = vxor.u32 %v2914, 2147483648
  %v3036 = vxor.u32 %v2918, 2147483648
  %v3037 = vxor.u32 %v2922, 2147483648
  %v3038 = vxor.u32 %v2926, 2147483648
  %v3039 = vmul.f32 %v3031, 1.442695
  %v3040 = vpow.pop %v3039
  %v3041 = vmul.f32 %v3032, 1.442695
  %v3042 = vpow.pop %v3041
  %v3043 = vmul.f32 %v3033, 1.442695
  %v3044 = vpow.pop %v3043
  %v3045 = vmul.f32 %v3034, 1.442695
  %v3046 = vpow.pop %v3045
  %v3047 = vmul.f32 %v3035, 1.442695
  %v3048 = vpow.pop %v3047
  %v3049 = vmul.f32 %v3036, 1.442695
  %v3050 = vpow.pop %v3049
  %v3051 = vmul.f32 %v3037, 1.442695
  %v3052 = vpow.pop %v3051
  %v3053 = vmul.f32 %v3038, 1.442695
  %v3054 = vpow.pop %v3053
  %v3055 = vadd.f32 %v3040, 1.0
  %v3056 = vadd.f32 %v3042, 1.0
  %v3057 = vadd.f32 %v3044, 1.0
  %v3058 = vadd.f32 %v3046, 1.0
  %v3059 = vadd.f32 %v3048, 1.0
  %v3060 = vadd.f32 %v3050, 1.0
  %v3061 = vadd.f32 %v3052, 1.0
  %v3062 = vadd.f32 %v3054, 1.0
  %v3063 = vrcp.pop %v3055
  %v3064 = vmul.f32 1.0, %v3063
  %v3065 = vrcp.pop %v3056
  %v3066 = vmul.f32 1.0, %v3065
  %v3067 = vrcp.pop %v3057
  %v3068 = vmul.f32 1.0, %v3067
  %v3069 = vrcp.pop %v3058
  %v3070 = vmul.f32 1.0, %v3069
  %v3071 = vrcp.pop %v3059
  %v3072 = vmul.f32 1.0, %v3071
  %v3073 = vrcp.pop %v3060
  %v3074 = vmul.f32 1.0, %v3073
  %v3075 = vrcp.pop %v3061
  %v3076 = vmul.f32 1.0, %v3075
  %v3077 = vrcp.pop %v3062
  %v3078 = vmul.f32 1.0, %v3077
  %v3087 = vrot.slane %v2642, 7
  %v3088 = vrot.slane %v2643, 7
  %v3089 = vrot.slane %v2644, 7
  %v3090 = vrot.slane %v2645, 7
  %v3091 = vrot.slane %v2646, 7
  %v3092 = vrot.slane %v2647, 7
  %v3093 = vrot.slane %v2648, 7
  %v3094 = vrot.slane %v2649, 7
  %v3103 = vmul.f32 %v3008, %v3087
  %v3104 = vmul.f32 %v3010, %v3088
  %v3105 = vmul.f32 %v3012, %v3089
  %v3106 = vmul.f32 %v3014, %v3090
  %v3107 = vmul.f32 %v3016, %v3091
  %v3108 = vmul.f32 %v3018, %v3092
  %v3109 = vmul.f32 %v3020, %v3093
  %v3110 = vmul.f32 %v3022, %v3094
  %v3111 = vmul.f32 %v2960, %v3023
  %v3112 = vmul.f32 %v2962, %v3024
  %v3113 = vmul.f32 %v2964, %v3025
  %v3114 = vmul.f32 %v2966, %v3026
  %v3115 = vmul.f32 %v2968, %v3027
  %v3116 = vmul.f32 %v2970, %v3028
  %v3117 = vmul.f32 %v2972, %v3029
  %v3118 = vmul.f32 %v2974, %v3030
  %v3119 = vadd.f32 %v3103, %v3111
  %v3120 = vadd.f32 %v3104, %v3112
  %v3121 = vadd.f32 %v3105, %v3113
  %v3122 = vadd.f32 %v3106, %v3114
  %v3123 = vadd.f32 %v3107, %v3115
  %v3124 = vadd.f32 %v3108, %v3116
  %v3125 = vadd.f32 %v3109, %v3117
  %v3126 = vadd.f32 %v3110, %v3118
  %v3127 = vtanh.pop %v3119
  %v3128 = vtanh.pop %v3120
  %v3129 = vtanh.pop %v3121
  %v3130 = vtanh.pop %v3122
  %v3131 = vtanh.pop %v3123
  %v3132 = vtanh.pop %v3124
  %v3133 = vtanh.pop %v3125
  %v3134 = vtanh.pop %v3126
  %v3135 = vmul.f32 %v3064, %v3127
  %v3136 = vmul.f32 %v3066, %v3128
  %v3137 = vmul.f32 %v3068, %v3129
  %v3138 = vmul.f32 %v3070, %v3130
  %v3139 = vmul.f32 %v3072, %v3131
  %v3140 = vmul.f32 %v3074, %v3132
  %v3141 = vmul.f32 %v3076, %v3133
  %v3142 = vmul.f32 %v3078, %v3134
  %v3151 = vrot.slane %v3135, 5
  %v3152 = vrot.slane %v3136, 4
  %v3153 = vsel %vm760, %v3152, %v3151
  %v3154 = vrot.slane %v3137, 3
  %v3155 = vsel %vm763, %v3154, %v3153
  %v3156 = vrot.slane %v3138, 2
  %v3157 = vsel %vm766, %v3156, %v3155
  %v3158 = vrot.slane %v3139, 1
  %v3159 = vsel %vm769, %v3158, %v3157
  %v3160 = vsel %vm772, %v3140, %v3159
  %v3161 = vrot.slane %v3141, 7
  %v3162 = vsel %vm775, %v3161, %v3160
  %v3163 = vrot.slane %v3142, 6
  %v3164 = vsel %vm778, %v3163, %v3162
  %3166 = vmatprep.subr.mxu0 %v318
  %3167 = vmatpush1.msra.mxu0 %v317
  %3168 = vmatprep.subr.mxu0 %v314
  %3169 = vmatpush1.msra.mxu0 %v313
  %3170 = vmatprep.subr.mxu0 %v310
  %3171 = vmatpush1.msra.mxu0 %v309
  %3172 = vmatprep.subr.mxu0 %v306
  %3173 = vmatpush1.msra.mxu0 %v305
  %3174 = vmatprep.subr.mxu0 %v302
  %3175 = vmatpush1.msra.mxu0 %v301
  %3176 = vmatprep.subr.mxu0 %v298
  %3177 = vmatpush1.msra.mxu0 %v297
  %3178 = vmatprep.subr.mxu0 %v294
  %3179 = vmatpush1.msra.mxu0 %v293
  %3180 = vmatprep.subr.mxu0 %v290
  %3181 = vmatpush1.msra.mxu0 %v289
  %3182 = vmatprep.subr.mxu0 %v286
  %3183 = vmatpush1.msra.mxu0 %v285
  %3184 = vmatprep.subr.mxu0 %v282
  %3185 = vmatpush1.msra.mxu0 %v281
  %3186 = vmatprep.subr.mxu0 %v278
  %3187 = vmatpush1.msra.mxu0 %v277
  %3188 = vmatprep.subr.mxu0 %v274
  %3189 = vmatpush1.msra.mxu0 %v273
  %3190 = vmatprep.subr.mxu0 %v270
  %3191 = vmatpush1.msra.mxu0 %v269
  %3192 = vmatprep.subr.mxu0 %v266
  %3193 = vmatpush1.msra.mxu0 %v265
  %3194 = vmatprep.subr.mxu0 %v262
  %3195 = vmatpush1.msra.mxu0 %v261
  %3196 = vmatprep.subr.mxu0 %v258
  %3197 = vmatpush1.msra.mxu0 %v257
  %3198 = vmatprep.subr.mxu0 0.0
  %3199 = vmatpush2.msra.mxu0 0.0
  %3200 = vmatprep.subr.mxu0 0.0
  %3201 = vmatpush2.msra.mxu0 0.0
  %3202 = vmatprep.subr.mxu0 0.0
  %3203 = vmatpush2.msra.mxu0 0.0
  %3204 = vmatprep.subr.mxu0 0.0
  %3205 = vmatpush2.msra.mxu0 0.0
  %3206 = vmatprep.subr.mxu0 0.0
  %3207 = vmatpush2.msra.mxu0 0.0
  %3208 = vmatprep.subr.mxu0 0.0
  %3209 = vmatpush2.msra.mxu0 0.0
  %3210 = vmatprep.subr.mxu0 0.0
  %3211 = vmatpush2.msra.mxu0 0.0
  %3212 = vmatprep.subr.mxu0 0.0
  %3213 = vmatpush2.msra.mxu0 0.0
  %3214 = vmatprep.subr.mxu0 0.0
  %3215 = vmatpush2.msra.mxu0 0.0
  %3216 = vmatprep.subr.mxu0 0.0
  %3217 = vmatpush2.msra.mxu0 0.0
  %3218 = vmatprep.subr.mxu0 0.0
  %3219 = vmatpush2.msra.mxu0 0.0
  %3220 = vmatprep.subr.mxu0 0.0
  %3221 = vmatpush2.msra.mxu0 0.0
  %3222 = vmatprep.subr.mxu0 0.0
  %3223 = vmatpush2.msra.mxu0 0.0
  %3224 = vmatprep.subr.mxu0 0.0
  %3225 = vmatpush2.msra.mxu0 0.0
  %3226 = vmatprep.subr.mxu0 0.0
  %3227 = vmatpush2.msra.mxu0 0.0
  %3228 = vmatprep.subr.mxu0 0.0
  %3229 = vmatpush2.msra.mxu0 0.0
  %3230 = vmatprep.mubr.f32.mxu0 0.0
  %3231 = vmatmul.mubr.f32.gmra.mxu0 %v3164
  %v3232 = vpop.f32.mrf.mxu0
  %v3233 = vadd.f32 0.0, %v3232
  %v3234 = vpop.f32.mrf.mxu0
  %v3235 = vadd.f32 0.0, %v3234
  %3236 = vdwg.mxu0
  %3237 = vmatprep.subr.mxu0 %v320
  %3238 = vmatpush1.msra.mxu0 %v319
  %3239 = vmatprep.subr.mxu0 %v316
  %3240 = vmatpush1.msra.mxu0 %v315
  %3241 = vmatprep.subr.mxu0 %v312
  %3242 = vmatpush1.msra.mxu0 %v311
  %3243 = vmatprep.subr.mxu0 %v308
  %3244 = vmatpush1.msra.mxu0 %v307
  %3245 = vmatprep.subr.mxu0 %v304
  %3246 = vmatpush1.msra.mxu0 %v303
  %3247 = vmatprep.subr.mxu0 %v300
  %3248 = vmatpush1.msra.mxu0 %v299
  %3249 = vmatprep.subr.mxu0 %v296
  %3250 = vmatpush1.msra.mxu0 %v295
  %3251 = vmatprep.subr.mxu0 %v292
  %3252 = vmatpush1.msra.mxu0 %v291
  %3253 = vmatprep.subr.mxu0 %v288
  %3254 = vmatpush1.msra.mxu0 %v287
  %3255 = vmatprep.subr.mxu0 %v284
  %3256 = vmatpush1.msra.mxu0 %v283
  %3257 = vmatprep.subr.mxu0 %v280
  %3258 = vmatpush1.msra.mxu0 %v279
  %3259 = vmatprep.subr.mxu0 %v276
  %3260 = vmatpush1.msra.mxu0 %v275
  %3261 = vmatprep.subr.mxu0 %v272
  %3262 = vmatpush1.msra.mxu0 %v271
  %3263 = vmatprep.subr.mxu0 %v268
  %3264 = vmatpush1.msra.mxu0 %v267
  %3265 = vmatprep.subr.mxu0 %v264
  %3266 = vmatpush1.msra.mxu0 %v263
  %3267 = vmatprep.subr.mxu0 %v260
  %3268 = vmatpush1.msra.mxu0 %v259
  %3269 = vmatprep.subr.mxu0 0.0
  %3270 = vmatpush2.msra.mxu0 0.0
  %3271 = vmatprep.subr.mxu0 0.0
  %3272 = vmatpush2.msra.mxu0 0.0
  %3273 = vmatprep.subr.mxu0 0.0
  %3274 = vmatpush2.msra.mxu0 0.0
  %3275 = vmatprep.subr.mxu0 0.0
  %3276 = vmatpush2.msra.mxu0 0.0
  %3277 = vmatprep.subr.mxu0 0.0
  %3278 = vmatpush2.msra.mxu0 0.0
  %3279 = vmatprep.subr.mxu0 0.0
  %3280 = vmatpush2.msra.mxu0 0.0
  %3281 = vmatprep.subr.mxu0 0.0
  %3282 = vmatpush2.msra.mxu0 0.0
  %3283 = vmatprep.subr.mxu0 0.0
  %3284 = vmatpush2.msra.mxu0 0.0
  %3285 = vmatprep.subr.mxu0 0.0
  %3286 = vmatpush2.msra.mxu0 0.0
  %3287 = vmatprep.subr.mxu0 0.0
  %3288 = vmatpush2.msra.mxu0 0.0
  %3289 = vmatprep.subr.mxu0 0.0
  %3290 = vmatpush2.msra.mxu0 0.0
  %3291 = vmatprep.subr.mxu0 0.0
  %3292 = vmatpush2.msra.mxu0 0.0
  %3293 = vmatprep.subr.mxu0 0.0
  %3294 = vmatpush2.msra.mxu0 0.0
  %3295 = vmatprep.subr.mxu0 0.0
  %3296 = vmatpush2.msra.mxu0 0.0
  %3297 = vmatprep.subr.mxu0 0.0
  %3298 = vmatpush2.msra.mxu0 0.0
  %3299 = vmatprep.subr.mxu0 0.0
  %3300 = vmatpush2.msra.mxu0 0.0
  %3301 = vmatprep.mubr.f32.mxu0 0.0
  %3302 = vmatmul.mubr.f32.gmra.mxu0 %v3164
  %v3303 = vpop.f32.mrf.mxu0
  %v3304 = vadd.f32 0.0, %v3303
  %v3305 = vpop.f32.mrf.mxu0
  %v3306 = vadd.f32 0.0, %v3305
  %3307 = vdwg.mxu0
  %v3312 = vrot.slane %v3233, 2
  %v3313 = vrot.slane %v3235, 2
  %v3314 = vrot.slane %v3304, 2
  %v3315 = vrot.slane %v3306, 2
  %v3316 = vrot.slane %v3233, 3
  %v3317 = vrot.slane %v3235, 3
  %v3318 = vrot.slane %v3304, 3
  %v3319 = vrot.slane %v3306, 3
  %v3320 = vrot.slane %v3233, 4
  %v3321 = vrot.slane %v3235, 4
  %v3322 = vrot.slane %v3304, 4
  %v3323 = vrot.slane %v3306, 4
  %v3324 = vrot.slane %v3233, 5
  %v3325 = vrot.slane %v3235, 5
  %v3326 = vrot.slane %v3304, 5
  %v3327 = vrot.slane %v3306, 5
  %v3328 = vrot.slane %v3233, 6
  %v3329 = vrot.slane %v3235, 6
  %v3330 = vrot.slane %v3304, 6
  %v3331 = vrot.slane %v3306, 6
  %v3332 = vrot.slane %v3233, 7
  %v3333 = vrot.slane %v3235, 7
  %v3334 = vrot.slane %v3304, 7
  %v3335 = vrot.slane %v3306, 7
  %v3336 = vrot.slane %v3233, 1
  %v3337 = vrot.slane %v3235, 1
  %v3338 = vrot.slane %v3304, 1
  %v3339 = vrot.slane %v3306, 1
  %v3372 = vadd.f32 %v146, %v3312
  %v3373 = vadd.f32 %v148, %v3313
  %v3374 = vadd.f32 %v219, %v3314
  %v3375 = vadd.f32 %v221, %v3315
  %v3376 = vadd.f32 %v150, %v3316
  %v3377 = vadd.f32 %v152, %v3317
  %v3378 = vadd.f32 %v223, %v3318
  %v3379 = vadd.f32 %v225, %v3319
  %v3380 = vadd.f32 %v156, %v3320
  %v3381 = vadd.f32 %v158, %v3321
  %v3382 = vadd.f32 %v229, %v3322
  %v3383 = vadd.f32 %v231, %v3323
  %v3384 = vadd.f32 %v160, %v3324
  %v3385 = vadd.f32 %v162, %v3325
  %v3386 = vadd.f32 %v233, %v3326
  %v3387 = vadd.f32 %v235, %v3327
  %v3388 = vadd.f32 %v166, %v3328
  %v3389 = vadd.f32 %v168, %v3329
  %v3390 = vadd.f32 %v239, %v3330
  %v3391 = vadd.f32 %v241, %v3331
  %v3392 = vadd.f32 %v170, %v3332
  %v3393 = vadd.f32 %v172, %v3333
  %v3394 = vadd.f32 %v243, %v3334
  %v3395 = vadd.f32 %v245, %v3335
  %v3396 = vadd.f32 %v176, %v3233
  %v3397 = vadd.f32 %v178, %v3235
  %v3398 = vadd.f32 %v249, %v3304
  %v3399 = vadd.f32 %v251, %v3306
  %v3400 = vadd.f32 %v180, %v3336
  %v3401 = vadd.f32 %v182, %v3337
  %v3402 = vadd.f32 %v253, %v3338
  %v3403 = vadd.f32 %v255, %v3339
  %v3404 = vxor.u32 %v3372, 2147483648
  %v3405 = vxor.u32 %v3376, 2147483648
  %v3406 = vxor.u32 %v3380, 2147483648
  %v3407 = vxor.u32 %v3384, 2147483648
  %v3408 = vxor.u32 %v3388, 2147483648
  %v3409 = vxor.u32 %v3392, 2147483648
  %v3410 = vxor.u32 %v3396, 2147483648
  %v3411 = vxor.u32 %v3400, 2147483648
  %v3412 = vmul.f32 %v3404, 1.442695
  %v3413 = vpow.pop %v3412
  %v3414 = vmul.f32 %v3405, 1.442695
  %v3415 = vpow.pop %v3414
  %v3416 = vmul.f32 %v3406, 1.442695
  %v3417 = vpow.pop %v3416
  %v3418 = vmul.f32 %v3407, 1.442695
  %v3419 = vpow.pop %v3418
  %v3420 = vmul.f32 %v3408, 1.442695
  %v3421 = vpow.pop %v3420
  %v3422 = vmul.f32 %v3409, 1.442695
  %v3423 = vpow.pop %v3422
  %v3424 = vmul.f32 %v3410, 1.442695
  %v3425 = vpow.pop %v3424
  %v3426 = vmul.f32 %v3411, 1.442695
  %v3427 = vpow.pop %v3426
  %v3428 = vadd.f32 %v3413, 1.0
  %v3429 = vadd.f32 %v3415, 1.0
  %v3430 = vadd.f32 %v3417, 1.0
  %v3431 = vadd.f32 %v3419, 1.0
  %v3432 = vadd.f32 %v3421, 1.0
  %v3433 = vadd.f32 %v3423, 1.0
  %v3434 = vadd.f32 %v3425, 1.0
  %v3435 = vadd.f32 %v3427, 1.0
  %v3436 = vrcp.pop %v3428
  %v3437 = vmul.f32 1.0, %v3436
  %v3438 = vrcp.pop %v3429
  %v3439 = vmul.f32 1.0, %v3438
  %v3440 = vrcp.pop %v3430
  %v3441 = vmul.f32 1.0, %v3440
  %v3442 = vrcp.pop %v3431
  %v3443 = vmul.f32 1.0, %v3442
  %v3444 = vrcp.pop %v3432
  %v3445 = vmul.f32 1.0, %v3444
  %v3446 = vrcp.pop %v3433
  %v3447 = vmul.f32 1.0, %v3446
  %v3448 = vrcp.pop %v3434
  %v3449 = vmul.f32 1.0, %v3448
  %v3450 = vrcp.pop %v3435
  %v3451 = vmul.f32 1.0, %v3450
  %v3452 = vxor.u32 %v3373, 2147483648
  %v3453 = vxor.u32 %v3377, 2147483648
  %v3454 = vxor.u32 %v3381, 2147483648
  %v3455 = vxor.u32 %v3385, 2147483648
  %v3456 = vxor.u32 %v3389, 2147483648
  %v3457 = vxor.u32 %v3393, 2147483648
  %v3458 = vxor.u32 %v3397, 2147483648
  %v3459 = vxor.u32 %v3401, 2147483648
  %v3460 = vmul.f32 %v3452, 1.442695
  %v3461 = vpow.pop %v3460
  %v3462 = vmul.f32 %v3453, 1.442695
  %v3463 = vpow.pop %v3462
  %v3464 = vmul.f32 %v3454, 1.442695
  %v3465 = vpow.pop %v3464
  %v3466 = vmul.f32 %v3455, 1.442695
  %v3467 = vpow.pop %v3466
  %v3468 = vmul.f32 %v3456, 1.442695
  %v3469 = vpow.pop %v3468
  %v3470 = vmul.f32 %v3457, 1.442695
  %v3471 = vpow.pop %v3470
  %v3472 = vmul.f32 %v3458, 1.442695
  %v3473 = vpow.pop %v3472
  %v3474 = vmul.f32 %v3459, 1.442695
  %v3475 = vpow.pop %v3474
  %v3476 = vadd.f32 %v3461, 1.0
  %v3477 = vadd.f32 %v3463, 1.0
  %v3478 = vadd.f32 %v3465, 1.0
  %v3479 = vadd.f32 %v3467, 1.0
  %v3480 = vadd.f32 %v3469, 1.0
  %v3481 = vadd.f32 %v3471, 1.0
  %v3482 = vadd.f32 %v3473, 1.0
  %v3483 = vadd.f32 %v3475, 1.0
  %v3484 = vrcp.pop %v3476
  %v3485 = vmul.f32 1.0, %v3484
  %v3486 = vrcp.pop %v3477
  %v3487 = vmul.f32 1.0, %v3486
  %v3488 = vrcp.pop %v3478
  %v3489 = vmul.f32 1.0, %v3488
  %v3490 = vrcp.pop %v3479
  %v3491 = vmul.f32 1.0, %v3490
  %v3492 = vrcp.pop %v3480
  %v3493 = vmul.f32 1.0, %v3492
  %v3494 = vrcp.pop %v3481
  %v3495 = vmul.f32 1.0, %v3494
  %v3496 = vrcp.pop %v3482
  %v3497 = vmul.f32 1.0, %v3496
  %v3498 = vrcp.pop %v3483
  %v3499 = vmul.f32 1.0, %v3498
  %v3500 = vtanh.pop %v3374
  %v3501 = vtanh.pop %v3378
  %v3502 = vtanh.pop %v3382
  %v3503 = vtanh.pop %v3386
  %v3504 = vtanh.pop %v3390
  %v3505 = vtanh.pop %v3394
  %v3506 = vtanh.pop %v3398
  %v3507 = vtanh.pop %v3402
  %v3508 = vxor.u32 %v3375, 2147483648
  %v3509 = vxor.u32 %v3379, 2147483648
  %v3510 = vxor.u32 %v3383, 2147483648
  %v3511 = vxor.u32 %v3387, 2147483648
  %v3512 = vxor.u32 %v3391, 2147483648
  %v3513 = vxor.u32 %v3395, 2147483648
  %v3514 = vxor.u32 %v3399, 2147483648
  %v3515 = vxor.u32 %v3403, 2147483648
  %v3516 = vmul.f32 %v3508, 1.442695
  %v3517 = vpow.pop %v3516
  %v3518 = vmul.f32 %v3509, 1.442695
  %v3519 = vpow.pop %v3518
  %v3520 = vmul.f32 %v3510, 1.442695
  %v3521 = vpow.pop %v3520
  %v3522 = vmul.f32 %v3511, 1.442695
  %v3523 = vpow.pop %v3522
  %v3524 = vmul.f32 %v3512, 1.442695
  %v3525 = vpow.pop %v3524
  %v3526 = vmul.f32 %v3513, 1.442695
  %v3527 = vpow.pop %v3526
  %v3528 = vmul.f32 %v3514, 1.442695
  %v3529 = vpow.pop %v3528
  %v3530 = vmul.f32 %v3515, 1.442695
  %v3531 = vpow.pop %v3530
  %v3532 = vadd.f32 %v3517, 1.0
  %v3533 = vadd.f32 %v3519, 1.0
  %v3534 = vadd.f32 %v3521, 1.0
  %v3535 = vadd.f32 %v3523, 1.0
  %v3536 = vadd.f32 %v3525, 1.0
  %v3537 = vadd.f32 %v3527, 1.0
  %v3538 = vadd.f32 %v3529, 1.0
  %v3539 = vadd.f32 %v3531, 1.0
  %v3540 = vrcp.pop %v3532
  %v3541 = vmul.f32 1.0, %v3540
  %v3542 = vrcp.pop %v3533
  %v3543 = vmul.f32 1.0, %v3542
  %v3544 = vrcp.pop %v3534
  %v3545 = vmul.f32 1.0, %v3544
  %v3546 = vrcp.pop %v3535
  %v3547 = vmul.f32 1.0, %v3546
  %v3548 = vrcp.pop %v3536
  %v3549 = vmul.f32 1.0, %v3548
  %v3550 = vrcp.pop %v3537
  %v3551 = vmul.f32 1.0, %v3550
  %v3552 = vrcp.pop %v3538
  %v3553 = vmul.f32 1.0, %v3552
  %v3554 = vrcp.pop %v3539
  %v3555 = vmul.f32 1.0, %v3554
  %v3564 = vrot.slane %v3119, 7
  %v3565 = vrot.slane %v3120, 7
  %v3566 = vrot.slane %v3121, 7
  %v3567 = vrot.slane %v3122, 7
  %v3568 = vrot.slane %v3123, 7
  %v3569 = vrot.slane %v3124, 7
  %v3570 = vrot.slane %v3125, 7
  %v3571 = vrot.slane %v3126, 7
  %v3580 = vmul.f32 %v3485, %v3564
  %v3581 = vmul.f32 %v3487, %v3565
  %v3582 = vmul.f32 %v3489, %v3566
  %v3583 = vmul.f32 %v3491, %v3567
  %v3584 = vmul.f32 %v3493, %v3568
  %v3585 = vmul.f32 %v3495, %v3569
  %v3586 = vmul.f32 %v3497, %v3570
  %v3587 = vmul.f32 %v3499, %v3571
  %v3588 = vmul.f32 %v3437, %v3500
  %v3589 = vmul.f32 %v3439, %v3501
  %v3590 = vmul.f32 %v3441, %v3502
  %v3591 = vmul.f32 %v3443, %v3503
  %v3592 = vmul.f32 %v3445, %v3504
  %v3593 = vmul.f32 %v3447, %v3505
  %v3594 = vmul.f32 %v3449, %v3506
  %v3595 = vmul.f32 %v3451, %v3507
  %v3596 = vadd.f32 %v3580, %v3588
  %v3597 = vadd.f32 %v3581, %v3589
  %v3598 = vadd.f32 %v3582, %v3590
  %v3599 = vadd.f32 %v3583, %v3591
  %v3600 = vadd.f32 %v3584, %v3592
  %v3601 = vadd.f32 %v3585, %v3593
  %v3602 = vadd.f32 %v3586, %v3594
  %v3603 = vadd.f32 %v3587, %v3595
  %v3604 = vtanh.pop %v3596
  %v3605 = vtanh.pop %v3597
  %v3606 = vtanh.pop %v3598
  %v3607 = vtanh.pop %v3599
  %v3608 = vtanh.pop %v3600
  %v3609 = vtanh.pop %v3601
  %v3610 = vtanh.pop %v3602
  %v3611 = vtanh.pop %v3603
  %v3612 = vmul.f32 %v3541, %v3604
  %v3613 = vmul.f32 %v3543, %v3605
  %v3614 = vmul.f32 %v3545, %v3606
  %v3615 = vmul.f32 %v3547, %v3607
  %v3616 = vmul.f32 %v3549, %v3608
  %v3617 = vmul.f32 %v3551, %v3609
  %v3618 = vmul.f32 %v3553, %v3610
  %v3619 = vmul.f32 %v3555, %v3611
  %v3628 = vrot.slane %v3612, 6
  %v3629 = vrot.slane %v3613, 5
  %v3630 = vsel %vm760, %v3629, %v3628
  %v3631 = vrot.slane %v3614, 4
  %v3632 = vsel %vm763, %v3631, %v3630
  %v3633 = vrot.slane %v3615, 3
  %v3634 = vsel %vm766, %v3633, %v3632
  %v3635 = vrot.slane %v3616, 2
  %v3636 = vsel %vm769, %v3635, %v3634
  %v3637 = vrot.slane %v3617, 1
  %v3638 = vsel %vm772, %v3637, %v3636
  %v3639 = vsel %vm775, %v3618, %v3638
  %v3640 = vrot.slane %v3619, 7
  %v3641 = vsel %vm778, %v3640, %v3639
  %3643 = vmatprep.subr.mxu0 %v318
  %3644 = vmatpush1.msra.mxu0 %v317
  %3645 = vmatprep.subr.mxu0 %v314
  %3646 = vmatpush1.msra.mxu0 %v313
  %3647 = vmatprep.subr.mxu0 %v310
  %3648 = vmatpush1.msra.mxu0 %v309
  %3649 = vmatprep.subr.mxu0 %v306
  %3650 = vmatpush1.msra.mxu0 %v305
  %3651 = vmatprep.subr.mxu0 %v302
  %3652 = vmatpush1.msra.mxu0 %v301
  %3653 = vmatprep.subr.mxu0 %v298
  %3654 = vmatpush1.msra.mxu0 %v297
  %3655 = vmatprep.subr.mxu0 %v294
  %3656 = vmatpush1.msra.mxu0 %v293
  %3657 = vmatprep.subr.mxu0 %v290
  %3658 = vmatpush1.msra.mxu0 %v289
  %3659 = vmatprep.subr.mxu0 %v286
  %3660 = vmatpush1.msra.mxu0 %v285
  %3661 = vmatprep.subr.mxu0 %v282
  %3662 = vmatpush1.msra.mxu0 %v281
  %3663 = vmatprep.subr.mxu0 %v278
  %3664 = vmatpush1.msra.mxu0 %v277
  %3665 = vmatprep.subr.mxu0 %v274
  %3666 = vmatpush1.msra.mxu0 %v273
  %3667 = vmatprep.subr.mxu0 %v270
  %3668 = vmatpush1.msra.mxu0 %v269
  %3669 = vmatprep.subr.mxu0 %v266
  %3670 = vmatpush1.msra.mxu0 %v265
  %3671 = vmatprep.subr.mxu0 %v262
  %3672 = vmatpush1.msra.mxu0 %v261
  %3673 = vmatprep.subr.mxu0 %v258
  %3674 = vmatpush1.msra.mxu0 %v257
  %3675 = vmatprep.subr.mxu0 0.0
  %3676 = vmatpush2.msra.mxu0 0.0
  %3677 = vmatprep.subr.mxu0 0.0
  %3678 = vmatpush2.msra.mxu0 0.0
  %3679 = vmatprep.subr.mxu0 0.0
  %3680 = vmatpush2.msra.mxu0 0.0
  %3681 = vmatprep.subr.mxu0 0.0
  %3682 = vmatpush2.msra.mxu0 0.0
  %3683 = vmatprep.subr.mxu0 0.0
  %3684 = vmatpush2.msra.mxu0 0.0
  %3685 = vmatprep.subr.mxu0 0.0
  %3686 = vmatpush2.msra.mxu0 0.0
  %3687 = vmatprep.subr.mxu0 0.0
  %3688 = vmatpush2.msra.mxu0 0.0
  %3689 = vmatprep.subr.mxu0 0.0
  %3690 = vmatpush2.msra.mxu0 0.0
  %3691 = vmatprep.subr.mxu0 0.0
  %3692 = vmatpush2.msra.mxu0 0.0
  %3693 = vmatprep.subr.mxu0 0.0
  %3694 = vmatpush2.msra.mxu0 0.0
  %3695 = vmatprep.subr.mxu0 0.0
  %3696 = vmatpush2.msra.mxu0 0.0
  %3697 = vmatprep.subr.mxu0 0.0
  %3698 = vmatpush2.msra.mxu0 0.0
  %3699 = vmatprep.subr.mxu0 0.0
  %3700 = vmatpush2.msra.mxu0 0.0
  %3701 = vmatprep.subr.mxu0 0.0
  %3702 = vmatpush2.msra.mxu0 0.0
  %3703 = vmatprep.subr.mxu0 0.0
  %3704 = vmatpush2.msra.mxu0 0.0
  %3705 = vmatprep.subr.mxu0 0.0
  %3706 = vmatpush2.msra.mxu0 0.0
  %3707 = vmatprep.mubr.f32.mxu0 0.0
  %3708 = vmatmul.mubr.f32.gmra.mxu0 %v3641
  %v3709 = vpop.f32.mrf.mxu0
  %v3710 = vadd.f32 0.0, %v3709
  %v3711 = vpop.f32.mrf.mxu0
  %v3712 = vadd.f32 0.0, %v3711
  %3713 = vdwg.mxu0
  %3714 = vmatprep.subr.mxu0 %v320
  %3715 = vmatpush1.msra.mxu0 %v319
  %3716 = vmatprep.subr.mxu0 %v316
  %3717 = vmatpush1.msra.mxu0 %v315
  %3718 = vmatprep.subr.mxu0 %v312
  %3719 = vmatpush1.msra.mxu0 %v311
  %3720 = vmatprep.subr.mxu0 %v308
  %3721 = vmatpush1.msra.mxu0 %v307
  %3722 = vmatprep.subr.mxu0 %v304
  %3723 = vmatpush1.msra.mxu0 %v303
  %3724 = vmatprep.subr.mxu0 %v300
  %3725 = vmatpush1.msra.mxu0 %v299
  %3726 = vmatprep.subr.mxu0 %v296
  %3727 = vmatpush1.msra.mxu0 %v295
  %3728 = vmatprep.subr.mxu0 %v292
  %3729 = vmatpush1.msra.mxu0 %v291
  %3730 = vmatprep.subr.mxu0 %v288
  %3731 = vmatpush1.msra.mxu0 %v287
  %3732 = vmatprep.subr.mxu0 %v284
  %3733 = vmatpush1.msra.mxu0 %v283
  %3734 = vmatprep.subr.mxu0 %v280
  %3735 = vmatpush1.msra.mxu0 %v279
  %3736 = vmatprep.subr.mxu0 %v276
  %3737 = vmatpush1.msra.mxu0 %v275
  %3738 = vmatprep.subr.mxu0 %v272
  %3739 = vmatpush1.msra.mxu0 %v271
  %3740 = vmatprep.subr.mxu0 %v268
  %3741 = vmatpush1.msra.mxu0 %v267
  %3742 = vmatprep.subr.mxu0 %v264
  %3743 = vmatpush1.msra.mxu0 %v263
  %3744 = vmatprep.subr.mxu0 %v260
  %3745 = vmatpush1.msra.mxu0 %v259
  %3746 = vmatprep.subr.mxu0 0.0
  %3747 = vmatpush2.msra.mxu0 0.0
  %3748 = vmatprep.subr.mxu0 0.0
  %3749 = vmatpush2.msra.mxu0 0.0
  %3750 = vmatprep.subr.mxu0 0.0
  %3751 = vmatpush2.msra.mxu0 0.0
  %3752 = vmatprep.subr.mxu0 0.0
  %3753 = vmatpush2.msra.mxu0 0.0
  %3754 = vmatprep.subr.mxu0 0.0
  %3755 = vmatpush2.msra.mxu0 0.0
  %3756 = vmatprep.subr.mxu0 0.0
  %3757 = vmatpush2.msra.mxu0 0.0
  %3758 = vmatprep.subr.mxu0 0.0
  %3759 = vmatpush2.msra.mxu0 0.0
  %3760 = vmatprep.subr.mxu0 0.0
  %3761 = vmatpush2.msra.mxu0 0.0
  %3762 = vmatprep.subr.mxu0 0.0
  %3763 = vmatpush2.msra.mxu0 0.0
  %3764 = vmatprep.subr.mxu0 0.0
  %3765 = vmatpush2.msra.mxu0 0.0
  %3766 = vmatprep.subr.mxu0 0.0
  %3767 = vmatpush2.msra.mxu0 0.0
  %3768 = vmatprep.subr.mxu0 0.0
  %3769 = vmatpush2.msra.mxu0 0.0
  %3770 = vmatprep.subr.mxu0 0.0
  %3771 = vmatpush2.msra.mxu0 0.0
  %3772 = vmatprep.subr.mxu0 0.0
  %3773 = vmatpush2.msra.mxu0 0.0
  %3774 = vmatprep.subr.mxu0 0.0
  %3775 = vmatpush2.msra.mxu0 0.0
  %3776 = vmatprep.subr.mxu0 0.0
  %3777 = vmatpush2.msra.mxu0 0.0
  %3778 = vmatprep.mubr.f32.mxu0 0.0
  %3779 = vmatmul.mubr.f32.gmra.mxu0 %v3641
  %v3780 = vpop.f32.mrf.mxu0
  %v3781 = vadd.f32 0.0, %v3780
  %v3782 = vpop.f32.mrf.mxu0
  %v3783 = vadd.f32 0.0, %v3782
  %3784 = vdwg.mxu0
  %v3789 = vrot.slane %v3710, 1
  %v3790 = vrot.slane %v3712, 1
  %v3791 = vrot.slane %v3781, 1
  %v3792 = vrot.slane %v3783, 1
  %v3793 = vrot.slane %v3710, 2
  %v3794 = vrot.slane %v3712, 2
  %v3795 = vrot.slane %v3781, 2
  %v3796 = vrot.slane %v3783, 2
  %v3797 = vrot.slane %v3710, 3
  %v3798 = vrot.slane %v3712, 3
  %v3799 = vrot.slane %v3781, 3
  %v3800 = vrot.slane %v3783, 3
  %v3801 = vrot.slane %v3710, 4
  %v3802 = vrot.slane %v3712, 4
  %v3803 = vrot.slane %v3781, 4
  %v3804 = vrot.slane %v3783, 4
  %v3805 = vrot.slane %v3710, 5
  %v3806 = vrot.slane %v3712, 5
  %v3807 = vrot.slane %v3781, 5
  %v3808 = vrot.slane %v3783, 5
  %v3809 = vrot.slane %v3710, 6
  %v3810 = vrot.slane %v3712, 6
  %v3811 = vrot.slane %v3781, 6
  %v3812 = vrot.slane %v3783, 6
  %v3813 = vrot.slane %v3710, 7
  %v3814 = vrot.slane %v3712, 7
  %v3815 = vrot.slane %v3781, 7
  %v3816 = vrot.slane %v3783, 7
  %v3849 = vadd.f32 %v146, %v3789
  %v3850 = vadd.f32 %v148, %v3790
  %v3851 = vadd.f32 %v219, %v3791
  %v3852 = vadd.f32 %v221, %v3792
  %v3853 = vadd.f32 %v150, %v3793
  %v3854 = vadd.f32 %v152, %v3794
  %v3855 = vadd.f32 %v223, %v3795
  %v3856 = vadd.f32 %v225, %v3796
  %v3857 = vadd.f32 %v156, %v3797
  %v3858 = vadd.f32 %v158, %v3798
  %v3859 = vadd.f32 %v229, %v3799
  %v3860 = vadd.f32 %v231, %v3800
  %v3861 = vadd.f32 %v160, %v3801
  %v3862 = vadd.f32 %v162, %v3802
  %v3863 = vadd.f32 %v233, %v3803
  %v3864 = vadd.f32 %v235, %v3804
  %v3865 = vadd.f32 %v166, %v3805
  %v3866 = vadd.f32 %v168, %v3806
  %v3867 = vadd.f32 %v239, %v3807
  %v3868 = vadd.f32 %v241, %v3808
  %v3869 = vadd.f32 %v170, %v3809
  %v3870 = vadd.f32 %v172, %v3810
  %v3871 = vadd.f32 %v243, %v3811
  %v3872 = vadd.f32 %v245, %v3812
  %v3873 = vadd.f32 %v176, %v3813
  %v3874 = vadd.f32 %v178, %v3814
  %v3875 = vadd.f32 %v249, %v3815
  %v3876 = vadd.f32 %v251, %v3816
  %v3877 = vadd.f32 %v180, %v3710
  %v3878 = vadd.f32 %v182, %v3712
  %v3879 = vadd.f32 %v253, %v3781
  %v3880 = vadd.f32 %v255, %v3783
  %v3881 = vxor.u32 %v3849, 2147483648
  %v3882 = vxor.u32 %v3853, 2147483648
  %v3883 = vxor.u32 %v3857, 2147483648
  %v3884 = vxor.u32 %v3861, 2147483648
  %v3885 = vxor.u32 %v3865, 2147483648
  %v3886 = vxor.u32 %v3869, 2147483648
  %v3887 = vxor.u32 %v3873, 2147483648
  %v3888 = vxor.u32 %v3877, 2147483648
  %v3889 = vmul.f32 %v3881, 1.442695
  %v3890 = vpow.pop %v3889
  %v3891 = vmul.f32 %v3882, 1.442695
  %v3892 = vpow.pop %v3891
  %v3893 = vmul.f32 %v3883, 1.442695
  %v3894 = vpow.pop %v3893
  %v3895 = vmul.f32 %v3884, 1.442695
  %v3896 = vpow.pop %v3895
  %v3897 = vmul.f32 %v3885, 1.442695
  %v3898 = vpow.pop %v3897
  %v3899 = vmul.f32 %v3886, 1.442695
  %v3900 = vpow.pop %v3899
  %v3901 = vmul.f32 %v3887, 1.442695
  %v3902 = vpow.pop %v3901
  %v3903 = vmul.f32 %v3888, 1.442695
  %v3904 = vpow.pop %v3903
  %v3905 = vadd.f32 %v3890, 1.0
  %v3906 = vadd.f32 %v3892, 1.0
  %v3907 = vadd.f32 %v3894, 1.0
  %v3908 = vadd.f32 %v3896, 1.0
  %v3909 = vadd.f32 %v3898, 1.0
  %v3910 = vadd.f32 %v3900, 1.0
  %v3911 = vadd.f32 %v3902, 1.0
  %v3912 = vadd.f32 %v3904, 1.0
  %v3913 = vrcp.pop %v3905
  %v3914 = vmul.f32 1.0, %v3913
  %v3915 = vrcp.pop %v3906
  %v3916 = vmul.f32 1.0, %v3915
  %v3917 = vrcp.pop %v3907
  %v3918 = vmul.f32 1.0, %v3917
  %v3919 = vrcp.pop %v3908
  %v3920 = vmul.f32 1.0, %v3919
  %v3921 = vrcp.pop %v3909
  %v3922 = vmul.f32 1.0, %v3921
  %v3923 = vrcp.pop %v3910
  %v3924 = vmul.f32 1.0, %v3923
  %v3925 = vrcp.pop %v3911
  %v3926 = vmul.f32 1.0, %v3925
  %v3927 = vrcp.pop %v3912
  %v3928 = vmul.f32 1.0, %v3927
  %v3929 = vxor.u32 %v3850, 2147483648
  %v3930 = vxor.u32 %v3854, 2147483648
  %v3931 = vxor.u32 %v3858, 2147483648
  %v3932 = vxor.u32 %v3862, 2147483648
  %v3933 = vxor.u32 %v3866, 2147483648
  %v3934 = vxor.u32 %v3870, 2147483648
  %v3935 = vxor.u32 %v3874, 2147483648
  %v3936 = vxor.u32 %v3878, 2147483648
  %v3937 = vmul.f32 %v3929, 1.442695
  %v3938 = vpow.pop %v3937
  %v3939 = vmul.f32 %v3930, 1.442695
  %v3940 = vpow.pop %v3939
  %v3941 = vmul.f32 %v3931, 1.442695
  %v3942 = vpow.pop %v3941
  %v3943 = vmul.f32 %v3932, 1.442695
  %v3944 = vpow.pop %v3943
  %v3945 = vmul.f32 %v3933, 1.442695
  %v3946 = vpow.pop %v3945
  %v3947 = vmul.f32 %v3934, 1.442695
  %v3948 = vpow.pop %v3947
  %v3949 = vmul.f32 %v3935, 1.442695
  %v3950 = vpow.pop %v3949
  %v3951 = vmul.f32 %v3936, 1.442695
  %v3952 = vpow.pop %v3951
  %v3953 = vadd.f32 %v3938, 1.0
  %v3954 = vadd.f32 %v3940, 1.0
  %v3955 = vadd.f32 %v3942, 1.0
  %v3956 = vadd.f32 %v3944, 1.0
  %v3957 = vadd.f32 %v3946, 1.0
  %v3958 = vadd.f32 %v3948, 1.0
  %v3959 = vadd.f32 %v3950, 1.0
  %v3960 = vadd.f32 %v3952, 1.0
  %v3961 = vrcp.pop %v3953
  %v3962 = vmul.f32 1.0, %v3961
  %v3963 = vrcp.pop %v3954
  %v3964 = vmul.f32 1.0, %v3963
  %v3965 = vrcp.pop %v3955
  %v3966 = vmul.f32 1.0, %v3965
  %v3967 = vrcp.pop %v3956
  %v3968 = vmul.f32 1.0, %v3967
  %v3969 = vrcp.pop %v3957
  %v3970 = vmul.f32 1.0, %v3969
  %v3971 = vrcp.pop %v3958
  %v3972 = vmul.f32 1.0, %v3971
  %v3973 = vrcp.pop %v3959
  %v3974 = vmul.f32 1.0, %v3973
  %v3975 = vrcp.pop %v3960
  %v3976 = vmul.f32 1.0, %v3975
  %v3977 = vtanh.pop %v3851
  %v3978 = vtanh.pop %v3855
  %v3979 = vtanh.pop %v3859
  %v3980 = vtanh.pop %v3863
  %v3981 = vtanh.pop %v3867
  %v3982 = vtanh.pop %v3871
  %v3983 = vtanh.pop %v3875
  %v3984 = vtanh.pop %v3879
  %v3985 = vxor.u32 %v3852, 2147483648
  %v3986 = vxor.u32 %v3856, 2147483648
  %v3987 = vxor.u32 %v3860, 2147483648
  %v3988 = vxor.u32 %v3864, 2147483648
  %v3989 = vxor.u32 %v3868, 2147483648
  %v3990 = vxor.u32 %v3872, 2147483648
  %v3991 = vxor.u32 %v3876, 2147483648
  %v3992 = vxor.u32 %v3880, 2147483648
  %v3993 = vmul.f32 %v3985, 1.442695
  %v3994 = vpow.pop %v3993
  %v3995 = vmul.f32 %v3986, 1.442695
  %v3996 = vpow.pop %v3995
  %v3997 = vmul.f32 %v3987, 1.442695
  %v3998 = vpow.pop %v3997
  %v3999 = vmul.f32 %v3988, 1.442695
  %v4000 = vpow.pop %v3999
  %v4001 = vmul.f32 %v3989, 1.442695
  %v4002 = vpow.pop %v4001
  %v4003 = vmul.f32 %v3990, 1.442695
  %v4004 = vpow.pop %v4003
  %v4005 = vmul.f32 %v3991, 1.442695
  %v4006 = vpow.pop %v4005
  %v4007 = vmul.f32 %v3992, 1.442695
  %v4008 = vpow.pop %v4007
  %v4009 = vadd.f32 %v3994, 1.0
  %v4010 = vadd.f32 %v3996, 1.0
  %v4011 = vadd.f32 %v3998, 1.0
  %v4012 = vadd.f32 %v4000, 1.0
  %v4013 = vadd.f32 %v4002, 1.0
  %v4014 = vadd.f32 %v4004, 1.0
  %v4015 = vadd.f32 %v4006, 1.0
  %v4016 = vadd.f32 %v4008, 1.0
  %v4017 = vrcp.pop %v4009
  %v4018 = vmul.f32 1.0, %v4017
  %v4019 = vrcp.pop %v4010
  %v4020 = vmul.f32 1.0, %v4019
  %v4021 = vrcp.pop %v4011
  %v4022 = vmul.f32 1.0, %v4021
  %v4023 = vrcp.pop %v4012
  %v4024 = vmul.f32 1.0, %v4023
  %v4025 = vrcp.pop %v4013
  %v4026 = vmul.f32 1.0, %v4025
  %v4027 = vrcp.pop %v4014
  %v4028 = vmul.f32 1.0, %v4027
  %v4029 = vrcp.pop %v4015
  %v4030 = vmul.f32 1.0, %v4029
  %v4031 = vrcp.pop %v4016
  %v4032 = vmul.f32 1.0, %v4031
  %v4041 = vrot.slane %v3596, 7
  %v4042 = vrot.slane %v3597, 7
  %v4043 = vrot.slane %v3598, 7
  %v4044 = vrot.slane %v3599, 7
  %v4045 = vrot.slane %v3600, 7
  %v4046 = vrot.slane %v3601, 7
  %v4047 = vrot.slane %v3602, 7
  %v4048 = vrot.slane %v3603, 7
  %v4057 = vmul.f32 %v3962, %v4041
  %v4058 = vmul.f32 %v3964, %v4042
  %v4059 = vmul.f32 %v3966, %v4043
  %v4060 = vmul.f32 %v3968, %v4044
  %v4061 = vmul.f32 %v3970, %v4045
  %v4062 = vmul.f32 %v3972, %v4046
  %v4063 = vmul.f32 %v3974, %v4047
  %v4064 = vmul.f32 %v3976, %v4048
  %v4065 = vmul.f32 %v3914, %v3977
  %v4066 = vmul.f32 %v3916, %v3978
  %v4067 = vmul.f32 %v3918, %v3979
  %v4068 = vmul.f32 %v3920, %v3980
  %v4069 = vmul.f32 %v3922, %v3981
  %v4070 = vmul.f32 %v3924, %v3982
  %v4071 = vmul.f32 %v3926, %v3983
  %v4072 = vmul.f32 %v3928, %v3984
  %v4073 = vadd.f32 %v4057, %v4065
  %v4074 = vadd.f32 %v4058, %v4066
  %v4075 = vadd.f32 %v4059, %v4067
  %v4076 = vadd.f32 %v4060, %v4068
  %v4077 = vadd.f32 %v4061, %v4069
  %v4078 = vadd.f32 %v4062, %v4070
  %v4079 = vadd.f32 %v4063, %v4071
  %v4080 = vadd.f32 %v4064, %v4072
  %v4081 = vtanh.pop %v4073
  %v4082 = vtanh.pop %v4074
  %v4083 = vtanh.pop %v4075
  %v4084 = vtanh.pop %v4076
  %v4085 = vtanh.pop %v4077
  %v4086 = vtanh.pop %v4078
  %v4087 = vtanh.pop %v4079
  %v4088 = vtanh.pop %v4080
  %v4089 = vmul.f32 %v4018, %v4081
  %v4090 = vmul.f32 %v4020, %v4082
  %v4091 = vmul.f32 %v4022, %v4083
  %v4092 = vmul.f32 %v4024, %v4084
  %v4093 = vmul.f32 %v4026, %v4085
  %v4094 = vmul.f32 %v4028, %v4086
  %v4095 = vmul.f32 %v4030, %v4087
  %v4096 = vmul.f32 %v4032, %v4088
  %v4097 = vpack.c.bf16 %v4089, %v4089
  %v4098 = vpack.c.bf16 %v4090, %v4090
  %v4099 = vpack.c.bf16 %v4091, %v4091
  %v4100 = vpack.c.bf16 %v4092, %v4092
  %v4101 = vpack.c.bf16 %v4093, %v4093
  %v4102 = vpack.c.bf16 %v4094, %v4094
  %v4103 = vpack.c.bf16 %v4095, %v4095
  %v4104 = vpack.c.bf16 %v4096, %v4096
  %v4105 = vld [vmem:[%s4] sm:$0xf]
  %v4106 = vld [vmem:[%s4 + $0x4] sm:$0xf]
  %v4107 = vld [vmem:[%s4 + $0x8] sm:$0xf]
  %v4108 = vld [vmem:[%s4 + $0xc] sm:$0xf]
  %v4109 = vld [vmem:[%s4 + $0x10] sm:$0xf]
  %v4110 = vld [vmem:[%s4 + $0x14] sm:$0xf]
  %v4111 = vld [vmem:[%s4 + $0x18] sm:$0xf]
  %v4112 = vld [vmem:[%s4 + $0x1c] sm:$0xf]
  %v4113 = vld [vmem:[%s4 + $0x20] sm:$0xf]
  %v4114 = vld [vmem:[%s4 + $0x24] sm:$0xf]
  %v4115 = vld [vmem:[%s4 + $0x28] sm:$0xf]
  %v4116 = vld [vmem:[%s4 + $0x2c] sm:$0xf]
  %v4117 = vld [vmem:[%s4 + $0x30] sm:$0xf]
  %v4118 = vld [vmem:[%s4 + $0x34] sm:$0xf]
  %v4119 = vld [vmem:[%s4 + $0x38] sm:$0xf]
  %v4120 = vld [vmem:[%s4 + $0x3c] sm:$0xf]
  %v4121 = vld [vmem:[%s5] sm:$0x1]
  %v4123 = vlaneseq
  %v4124 = vshrl.u32 %v4123, 7
  %v4125 = vsub.s32 0, %v4124
  %v4126 = vrot.slane %v4121, %v4125
  %v4136 = vunpack.c.l.b16 %v4097
  %v4137 = vunpack.c.l.b16 %v4098
  %v4138 = vunpack.c.l.b16 %v4099
  %v4139 = vunpack.c.l.b16 %v4100
  %v4140 = vunpack.c.l.b16 %v4101
  %v4141 = vunpack.c.l.b16 %v4102
  %v4142 = vunpack.c.l.b16 %v4103
  %v4143 = vunpack.c.l.b16 %v4104
  %v4144 = vrot.slane %v4136, 7
  %v4145 = vrot.slane %v4137, 6
  %v4146 = vsel %vm760, %v4145, %v4144
  %v4147 = vrot.slane %v4138, 5
  %v4148 = vsel %vm763, %v4147, %v4146
  %v4149 = vrot.slane %v4139, 4
  %v4150 = vsel %vm766, %v4149, %v4148
  %v4151 = vrot.slane %v4140, 3
  %v4152 = vsel %vm769, %v4151, %v4150
  %v4153 = vrot.slane %v4141, 2
  %v4154 = vsel %vm772, %v4153, %v4152
  %v4155 = vrot.slane %v4142, 1
  %v4156 = vsel %vm775, %v4155, %v4154
  %v4157 = vsel %vm778, %v4143, %v4156
  %v4158 = vpack.c.b16 %v4157, %v4157
  %v4176 = vunpack.c.l.b16 %v4105
  %v4177 = vunpack.c.l.b16 %v4106
  %v4178 = vunpack.c.l.b16 %v4107
  %v4179 = vunpack.c.l.b16 %v4108
  %v4180 = vunpack.c.l.b16 %v4109
  %v4181 = vunpack.c.l.b16 %v4110
  %v4182 = vunpack.c.l.b16 %v4111
  %v4183 = vunpack.c.l.b16 %v4112
  %v4184 = vunpack.c.l.b16 %v4113
  %v4185 = vunpack.c.l.b16 %v4114
  %v4186 = vunpack.c.l.b16 %v4115
  %v4187 = vunpack.c.l.b16 %v4116
  %v4188 = vunpack.c.l.b16 %v4117
  %v4189 = vunpack.c.l.b16 %v4118
  %v4190 = vunpack.c.l.b16 %v4119
  %v4191 = vunpack.c.l.b16 %v4120
  %v4192 = vpack.c.b16 %v4177, %v4176
  %v4193 = vpack.c.b16 %v4179, %v4178
  %v4194 = vpack.c.b16 %v4181, %v4180
  %v4195 = vpack.c.b16 %v4183, %v4182
  %v4196 = vpack.c.b16 %v4185, %v4184
  %v4197 = vpack.c.b16 %v4187, %v4186
  %v4198 = vpack.c.b16 %v4189, %v4188
  %v4199 = vpack.c.b16 %v4191, %v4190
  %4208 = vmatprep.subr.bf16.mxu0 0
  %4209 = vmatpush1.bf16.msra.mxu0 %v4199
  %4210 = vmatprep.subr.bf16.mxu0 0
  %4211 = vmatpush1.bf16.msra.mxu0 %v4198
  %4212 = vmatprep.subr.bf16.mxu0 0
  %4213 = vmatpush1.bf16.msra.mxu0 %v4197
  %4214 = vmatprep.subr.bf16.mxu0 0
  %4215 = vmatpush1.bf16.msra.mxu0 %v4196
  %4216 = vmatprep.subr.bf16.mxu0 0
  %4217 = vmatpush1.bf16.msra.mxu0 %v4195
  %4218 = vmatprep.subr.bf16.mxu0 0
  %4219 = vmatpush1.bf16.msra.mxu0 %v4194
  %4220 = vmatprep.subr.bf16.mxu0 0
  %4221 = vmatpush1.bf16.msra.mxu0 %v4193
  %4222 = vmatprep.subr.bf16.mxu0 0
  %4223 = vmatpush1.bf16.msra.mxu0 %v4192
  %4224 = vmatprep.subr.bf16.mxu0 0
  %4225 = vmatpush2.bf16.msra.mxu0 0
  %4226 = vmatprep.subr.bf16.mxu0 0
  %4227 = vmatpush2.bf16.msra.mxu0 0
  %4228 = vmatprep.subr.bf16.mxu0 0
  %4229 = vmatpush2.bf16.msra.mxu0 0
  %4230 = vmatprep.subr.bf16.mxu0 0
  %4231 = vmatpush2.bf16.msra.mxu0 0
  %4232 = vmatprep.subr.bf16.mxu0 0
  %4233 = vmatpush2.bf16.msra.mxu0 0
  %4234 = vmatprep.subr.bf16.mxu0 0
  %4235 = vmatpush2.bf16.msra.mxu0 0
  %4236 = vmatprep.subr.bf16.mxu0 0
  %4237 = vmatpush2.bf16.msra.mxu0 0
  %4238 = vmatprep.subr.bf16.mxu0 0
  %4239 = vmatpush2.bf16.msra.mxu0 0
  %4240 = vmatprep.mubr.bf16.mxu0 0
  %4241 = vmatmul.mubr.bf16.gmra.mxu0 %v4158
  %v4242 = vpop.f32.mrf.mxu0
  %v4243 = vadd.f32 %v4126, %v4242
  %v4244 = vpop.f32.mrf.mxu0
  %v4245 = vpop.f32.mrf.mxu0
  %v4246 = vpop.f32.mrf.mxu0
  %4247 = vdwg.mxu0
  %4248 = vst [vmem:[%s6] sm:$0xff] %v4243
  // Predicated region
  $region26: #{lstm_autoencoder_forward.1} parent=0 // pred_check
    _
  $region27: #{lstm_autoencoder_forward.1} parent=0 // pred_check_branch
    %4250 = sbr.rel (0) target = $region29
  $region28: #{lstm_autoencoder_forward.1} parent=0 // pred_region
    _
  $region29: #{lstm_autoencoder_forward.1} parent=0 // pred_fallthru
    _
  // Predicated region
  $region30: #{lstm_autoencoder_forward.1} parent=0 // pred_check
    _
  $region31: #{lstm_autoencoder_forward.1} parent=0 // pred_check_branch
    %4252 = sbr.rel (0) target = $region33
  $region32: #{lstm_autoencoder_forward.1} parent=0 // pred_region
    _
  $region33: #{lstm_autoencoder_forward.1} parent=0 // pred_fallthru
    _

</llo_original>
